<compile_context>
chip_gen: v6e
topology: v6e:2x2x1
jax: 0.10.0
libtpu: 0.0.40
codegen_flags: <defaults>
</compile_context>

<pallas_src>
import jax
import jax.numpy as jnp
from jax.experimental import pallas as pl
from jax.experimental.pallas import tpu as pltpu

# ---- small BERT config (bert-base analogue: 768/12/3072/12 -> 32/4/64/2) ----
VOCAB = 100
B = 2          # batch
S = 8          # sequence length (maxLength=177 in the original, shrunk)
H = 32         # hidden size
NH = 4         # attention heads
HD = H // NH   # head dim
I = 64         # intermediate (FFN) size
NLAYERS = 2
EPS = 1e-12

SLAB_W = 128   # one (8,128) f32 tile per layer holds all bias/LN vectors
# bf16 MXU feed is the right default on v6e/v7x at bert-base scale; keep f32
# here (toy shapes, and v5e has no bf16 VPU/EUP for the elementwise math).
MXU_DTYPE = jnp.float32

# rows of the packed per-layer bias/LayerNorm slab
(_ROW_BQKV, _ROW_BI, _ROW_BO, _ROW_LN1G,
 _ROW_LN1B, _ROW_BD, _ROW_LN2G, _ROW_LN2B) = range(8)


# ----------------------------- shared math helpers ---------------------------
def _layernorm(x, gamma, beta):
    mean = jnp.mean(x, axis=-1, keepdims=True)
    var = jnp.mean(jnp.square(x - mean), axis=-1, keepdims=True)
    return (x - mean) * jax.lax.rsqrt(var + EPS) * gamma + beta


def _gelu(x):
    # tanh approximation of GELU (EUP tanh).  HF bert-base uses the exact
    # erf GELU; the difference is ~1e-3 at these magnitudes.
    return 0.5 * x * (1.0 + jnp.tanh(0.7978845608028654 * (x + 0.044715 * x * x * x)))


def _mm(a, b):
    # MXU matmul with f32 accumulation; operands optionally cast to bf16.
    return jnp.dot(a.astype(MXU_DTYPE), b.astype(MXU_DTYPE),
                   preferred_element_type=jnp.float32)


# ------------------------------- fused kernel --------------------------------
def movie_bert_kernel(x_ref, mask_ref, embln_ref,
                      wqkv_ref, wo_ref, wi_ref, wd_ref, slab_ref,
                      pw_ref, pb_ref, o_ref):
    # residual stream is [B*S, H], VMEM-resident for the whole forward
    x = _layernorm(x_ref[...], embln_ref[0:1, :], embln_ref[1:2, :])

    # layer-invariant additive attention mask (hoisted out of the layer loop)
    # NOTE: a fully-padded query row would softmax uniformly over padded keys;
    # harmless here since only the CLS row feeds the pooler.
    neg = (1.0 - mask_ref[...])[:, None, :] * (-1e9)          # [B, 1, S]
    neg = jnp.concatenate([neg] * NH, axis=0)                 # [NH*B, 1, S]
    scale = 1.0 / jnp.sqrt(jnp.float32(HD))

    def split_heads(t):   # [B*S, H] -> [NH*B, S, HD]  (head-major, batch-minor)
        t3 = t.reshape(B, S, H)
        return jnp.concatenate(
            [t3[:, :, h * HD:(h + 1) * HD] for h in range(NH)], axis=0)

    # NLAYERS is tiny -> static unroll; weight stacks stay resident in VMEM.
    for l in range(NLAYERS):
        slab = slab_ref[l]                                    # [8, SLAB_W]
        bqkv = slab[_ROW_BQKV:_ROW_BQKV + 1, 0:3 * H]
        bi   = slab[_ROW_BI:_ROW_BI + 1,     0:I]
        bo   = slab[_ROW_BO:_ROW_BO + 1,     0:H]
        ln1g = slab[_ROW_LN1G:_ROW_LN1G + 1, 0:H]
        ln1b = slab[_ROW_LN1B:_ROW_LN1B + 1, 0:H]
        bd   = slab[_ROW_BD:_ROW_BD + 1,     0:H]
        ln2g = slab[_ROW_LN2G:_ROW_LN2G + 1, 0:H]
        ln2b = slab[_ROW_LN2B:_ROW_LN2B + 1, 0:H]

        # fused QKV projection: one MXU push, [B*S, H] @ [H, 3H]
        qkv = _mm(x, wqkv_ref[l]) + bqkv
        q = qkv[:, 0:H] * scale          # fold 1/sqrt(HD) into Q
        k = qkv[:, H:2 * H]
        v = qkv[:, 2 * H:3 * H]

        # head-batched attention over the combined (head, batch) dim
        qh, kh, vh = split_heads(q), split_heads(k), split_heads(v)
        s = jnp.einsum('bqd,bkd->bqk',
                       qh.astype(MXU_DTYPE), kh.astype(MXU_DTYPE),
                       preferred_element_type=jnp.float32) + neg
        s = s - jnp.max(s, axis=-1, keepdims=True)
        p = jnp.exp(s)
        p = p * pl.reciprocal(jnp.sum(p, axis=-1, keepdims=True), approx=True)
        ctx = jnp.einsum('bqk,bkd->bqd',
                         p.astype(MXU_DTYPE), vh.astype(MXU_DTYPE),
                         preferred_element_type=jnp.float32)  # [NH*B, S, HD]

        # concat heads -> single output projection with full K=H
        ctx = jnp.concatenate([ctx[h * B:(h + 1) * B] for h in range(NH)],
                              axis=-1).reshape(B * S, H)
        attn = _mm(ctx, wo_ref[l]) + bo

        h1 = _layernorm(x + attn, ln1g, ln1b)

        # feed-forward
        ff = _gelu(_mm(h1, wi_ref[l]) + bi)
        ff = _mm(ff, wd_ref[l]) + bd
        x = _layernorm(h1 + ff, ln2g, ln2b)

    # BERT pooler: tanh(Linear(CLS)); CLS token is row b*S of the flat stream
    cls = jnp.concatenate([x[b * S:b * S + 1, :] for b in range(B)], axis=0)
    o_ref[...] = jnp.tanh(_mm(cls, pw_ref[...]) + pb_ref[...])


# ------------------------------ wrappers --------------------------------------
def _embed(params, token_ids):
    # Embedding lookup is glue (data-dependent gather) in plain JAX.
    # token_type embeddings are hard-wired to segment 0 (all-zero token_type_ids).
    x = (params['word_emb'][token_ids]
         + params['pos_emb'][None, :, :]
         + params['type_emb'][0][None, None, :]).astype(jnp.float32)   # [B,S,H]
    return x.reshape(B * S, H)


def movie_bert_forward(params, token_ids, attn_mask):
    """Returns pooled output [B, H] (the `x` returned by Movie_Bert.forward)."""
    x2 = _embed(params, token_ids)
    mask_f = attn_mask.astype(jnp.float32)

    vspec = pl.BlockSpec(memory_space=pltpu.MemorySpace.VMEM)
    pooled = pl.pallas_call(
        movie_bert_kernel,
        out_shape=jax.ShapeDtypeStruct((B, H), jnp.float32),
        in_specs=[vspec] * 10,
        out_specs=vspec,
    )(x2, mask_f, params['emb_ln'],
      params['wqkv'], params['wo'], params['wi'], params['wd'],
      params['vec_slab'], params['pool_w'], params['pool_b'])
    return pooled


def movie_bert_reference(params, token_ids, attn_mask):
    """Plain-JAX reference of the same forward (exact softmax, HIGHEST precision)."""
    P = jax.lax.Precision.HIGHEST
    x = _embed(params, token_ids)                                # [B*S, H]
    x = _layernorm(x, params['emb_ln'][0:1, :], params['emb_ln'][1:2, :])
    mask_f = attn_mask.astype(jnp.float32)
    add_mask = (1.0 - mask_f)[:, None, None, :] * (-1e9)         # [B,1,1,S]
    scale = 1.0 / jnp.sqrt(jnp.float32(HD))

    slab = params['vec_slab']
    for l in range(NLAYERS):
        bqkv = slab[l, _ROW_BQKV, 0:3 * H]
        bi   = slab[l, _ROW_BI,   0:I]
        bo   = slab[l, _ROW_BO,   0:H]
        ln1g = slab[l, _ROW_LN1G, 0:H]
        ln1b = slab[l, _ROW_LN1B, 0:H]
        bd   = slab[l, _ROW_BD,   0:H]
        ln2g = slab[l, _ROW_LN2G, 0:H]
        ln2b = slab[l, _ROW_LN2B, 0:H]

        qkv = jnp.dot(x, params['wqkv'][l], precision=P) + bqkv
        q = (qkv[:, 0:H] * scale).reshape(B, S, NH, HD)
        k = qkv[:, H:2 * H].reshape(B, S, NH, HD)
        v = qkv[:, 2 * H:3 * H].reshape(B, S, NH, HD)

        s = jnp.einsum('bqhd,bkhd->bhqk', q, k, precision=P) + add_mask
        p = jax.nn.softmax(s, axis=-1)
        ctx = jnp.einsum('bhqk,bkhd->bqhd', p, v, precision=P).reshape(B * S, H)
        attn = jnp.dot(ctx, params['wo'][l], precision=P) + bo

        h1 = _layernorm(x + attn, ln1g, ln1b)
        ff = _gelu(jnp.dot(h1, params['wi'][l], precision=P) + bi)
        ff = jnp.dot(ff, params['wd'][l], precision=P) + bd
        x = _layernorm(h1 + ff, ln2g, ln2b)

    cls = x.reshape(B, S, H)[:, 0, :]                            # [B, H]
    return jnp.tanh(jnp.dot(cls, params['pool_w'], precision=P) + params['pool_b'])


# ----------------------------- parameter init --------------------------------
def init_params(key):
    kiter = iter(jax.random.split(key, 32))

    def nrm(shape):
        return 0.02 * jax.random.normal(next(kiter), shape, dtype=jnp.float32)

    # stacked per-layer weights (single DMA each for the whole forward)
    wqkv = nrm((NLAYERS, H, 3 * H))     # Wq | Wk | Wv fused along output dim
    wo = nrm((NLAYERS, H, H))
    wi = nrm((NLAYERS, H, I))
    wd = nrm((NLAYERS, I, H))

    # packed bias / LayerNorm slab: one (8,128) tile per layer
    slab = jnp.zeros((NLAYERS, 8, SLAB_W), jnp.float32)
    slab = slab.at[:, _ROW_BQKV, 0:3 * H].set(nrm((NLAYERS, 3 * H)))  # bq|bk|bv
    slab = slab.at[:, _ROW_BI,   0:I].set(nrm((NLAYERS, I)))          # FFN bias
    slab = slab.at[:, _ROW_BO,   0:H].set(nrm((NLAYERS, H)))          # attn out bias
    slab = slab.at[:, _ROW_LN1G, 0:H].set(1.0)                        # LN1 gamma
    slab = slab.at[:, _ROW_LN1B, 0:H].set(0.0)                        # LN1 beta
    slab = slab.at[:, _ROW_BD,   0:H].set(nrm((NLAYERS, H)))          # FFN out bias
    slab = slab.at[:, _ROW_LN2G, 0:H].set(1.0)                        # LN2 gamma
    slab = slab.at[:, _ROW_LN2B, 0:H].set(0.0)                        # LN2 beta

    params = dict(
        word_emb=nrm((VOCAB, H)),
        pos_emb=nrm((S, H)),
        type_emb=nrm((2, H)),
        emb_ln=jnp.stack([jnp.ones((H,), jnp.float32),
                          jnp.zeros((H,), jnp.float32)], axis=0),     # [2,H] g,b
        wqkv=wqkv, wo=wo, wi=wi, wd=wd, vec_slab=slab,
        pool_w=nrm((H, H)),
        pool_b=nrm((1, H)),
    )
    return params


# --------------------------------- main ---------------------------------------
if __name__ == "__main__":
    root = jax.random.PRNGKey(0)
    k_param, k_tok = jax.random.split(root)

    params = init_params(k_param)

    # "tokenizer output": deterministic synthetic token ids + attention mask
    token_ids = jax.random.randint(k_tok, (B, S), 0, VOCAB, dtype=jnp.int32)
    attn_mask = jnp.ones((B, S), jnp.int32).at[1, S - 2:].set(0)  # pad tail of ex 1

    fwd = jax.jit(movie_bert_forward)
    pooled = jax.block_until_ready(fwd(params, token_ids, attn_mask))

    assert pooled.shape == (B, H) and pooled.dtype == jnp.float32
    assert bool(jnp.all(jnp.isfinite(pooled)))

    # correctness check vs. plain-JAX reference (exact softmax, HIGHEST precision)
    ref = jax.block_until_ready(
        jax.jit(movie_bert_reference)(params, token_ids, attn_mask))
    max_err = float(jnp.max(jnp.abs(pooled - ref)))
    assert max_err < 5e-3, f"kernel/reference mismatch: max abs err = {max_err}"

    print("KERNEL_OK")
</pallas_src>

<mosaic_0001>
module attributes {stable_mosaic.version = 11 : i64} {
  func.func @movie_bert_kernel(%arg0: memref<16x32xf32, #tpu.memory_space<vmem>>, %arg1: memref<2x8xf32, #tpu.memory_space<vmem>>, %arg2: memref<2x32xf32, #tpu.memory_space<vmem>>, %arg3: memref<2x32x96xf32, #tpu.memory_space<vmem>>, %arg4: memref<2x32x32xf32, #tpu.memory_space<vmem>>, %arg5: memref<2x32x64xf32, #tpu.memory_space<vmem>>, %arg6: memref<2x64x32xf32, #tpu.memory_space<vmem>>, %arg7: memref<2x8x128xf32, #tpu.memory_space<vmem>>, %arg8: memref<32x32xf32, #tpu.memory_space<vmem>>, %arg9: memref<1x32xf32, #tpu.memory_space<vmem>>, %arg10: memref<2x32xf32, #tpu.memory_space<vmem>>) attributes {dimension_semantics = [], scalar_prefetch = 0 : i64, scratch_operands = 0 : i64, tpu.core_type = #tpu.core_type<tc>} {
    %c0 = arith.constant 0 : index
    %c0_0 = arith.constant 0 : index
    %0 = vector.load %arg0[%c0, %c0_0] : memref<16x32xf32, #tpu.memory_space<vmem>>, vector<16x32xf32>
    %c0_1 = arith.constant 0 : index
    %c0_2 = arith.constant 0 : index
    %1 = vector.load %arg2[%c0_1, %c0_2] : memref<2x32xf32, #tpu.memory_space<vmem>>, vector<1x32xf32>
    %c1 = arith.constant 1 : index
    %c0_3 = arith.constant 0 : index
    %2 = vector.load %arg2[%c1, %c0_3] : memref<2x32xf32, #tpu.memory_space<vmem>>, vector<1x32xf32>
    %cst = arith.constant dense<0.000000e+00> : vector<16xf32>
    %3 = vector.multi_reduction <add>, %0, %cst [1] : vector<16x32xf32> to vector<16xf32>
    %4 = vector.shape_cast %3 : vector<16xf32> to vector<16x1xf32>
    %cst_4 = arith.constant 3.200000e+01 : f32
    %5 = vector.broadcast %cst_4 : f32 to vector<16x1xf32>
    %6 = arith.divf %4, %5 : vector<16x1xf32>
    %7 = vector.broadcast %6 : vector<16x1xf32> to vector<16x32xf32>
    %8 = arith.subf %0, %7 : vector<16x32xf32>
    %9 = arith.mulf %8, %8 : vector<16x32xf32>
    %cst_5 = arith.constant dense<0.000000e+00> : vector<16xf32>
    %10 = vector.multi_reduction <add>, %9, %cst_5 [1] : vector<16x32xf32> to vector<16xf32>
    %11 = vector.shape_cast %10 : vector<16xf32> to vector<16x1xf32>
    %cst_6 = arith.constant 3.200000e+01 : f32
    %12 = vector.broadcast %cst_6 : f32 to vector<16x1xf32>
    %13 = arith.divf %11, %12 : vector<16x1xf32>
    %14 = vector.broadcast %6 : vector<16x1xf32> to vector<16x32xf32>
    %15 = arith.subf %0, %14 : vector<16x32xf32>
    %cst_7 = arith.constant 9.99999996E-13 : f32
    %16 = vector.broadcast %cst_7 : f32 to vector<16x1xf32>
    %17 = arith.addf %13, %16 : vector<16x1xf32>
    %18 = math.rsqrt %17 : vector<16x1xf32>
    %19 = vector.broadcast %18 : vector<16x1xf32> to vector<16x32xf32>
    %20 = arith.mulf %15, %19 : vector<16x32xf32>
    %21 = vector.broadcast %1 : vector<1x32xf32> to vector<16x32xf32>
    %22 = arith.mulf %20, %21 : vector<16x32xf32>
    %23 = vector.broadcast %2 : vector<1x32xf32> to vector<16x32xf32>
    %24 = arith.addf %22, %23 : vector<16x32xf32>
    %c0_8 = arith.constant 0 : index
    %c0_9 = arith.constant 0 : index
    %25 = vector.load %arg1[%c0_8, %c0_9] : memref<2x8xf32, #tpu.memory_space<vmem>>, vector<2x8xf32>
    %cst_10 = arith.constant 1.000000e+00 : f32
    %26 = vector.broadcast %cst_10 : f32 to vector<2x8xf32>
    %27 = arith.subf %26, %25 : vector<2x8xf32>
    %28 = vector.shape_cast %27 : vector<2x8xf32> to vector<2x1x8xf32>
    %cst_11 = arith.constant -1.000000e+09 : f32
    %29 = vector.broadcast %cst_11 : f32 to vector<2x1x8xf32>
    %30 = arith.mulf %28, %29 : vector<2x1x8xf32>
    %31 = tpu.concatenate %30, %30, %30, %30 in 0 : vector<2x1x8xf32>, vector<2x1x8xf32>, vector<2x1x8xf32>, vector<2x1x8xf32> -> vector<8x1x8xf32>
    %cst_12 = arith.constant 8.000000e+00 : f32
    %32 = math.sqrt %cst_12 : f32
    %cst_13 = arith.constant 1.000000e+00 : f32
    %33 = arith.divf %cst_13, %32 : f32
    %c0_14 = arith.constant 0 : index
    %c0_15 = arith.constant 0 : index
    %c0_16 = arith.constant 0 : index
    %34 = vector.load %arg7[%c0_14, %c0_15, %c0_16] : memref<2x8x128xf32, #tpu.memory_space<vmem>>, vector<1x8x128xf32>
    %35 = vector.shape_cast %34 : vector<1x8x128xf32> to vector<8x128xf32>
    %36 = vector.extract_strided_slice %35 {offsets = [0, 0], sizes = [1, 96], strides = [1, 1]} : vector<8x128xf32> to vector<1x96xf32>
    %37 = vector.extract_strided_slice %35 {offsets = [1, 0], sizes = [1, 64], strides = [1, 1]} : vector<8x128xf32> to vector<1x64xf32>
    %38 = vector.extract_strided_slice %35 {offsets = [2, 0], sizes = [1, 32], strides = [1, 1]} : vector<8x128xf32> to vector<1x32xf32>
    %39 = vector.extract_strided_slice %35 {offsets = [3, 0], sizes = [1, 32], strides = [1, 1]} : vector<8x128xf32> to vector<1x32xf32>
    %40 = vector.extract_strided_slice %35 {offsets = [4, 0], sizes = [1, 32], strides = [1, 1]} : vector<8x128xf32> to vector<1x32xf32>
    %41 = vector.extract_strided_slice %35 {offsets = [5, 0], sizes = [1, 32], strides = [1, 1]} : vector<8x128xf32> to vector<1x32xf32>
    %42 = vector.extract_strided_slice %35 {offsets = [6, 0], sizes = [1, 32], strides = [1, 1]} : vector<8x128xf32> to vector<1x32xf32>
    %43 = vector.extract_strided_slice %35 {offsets = [7, 0], sizes = [1, 32], strides = [1, 1]} : vector<8x128xf32> to vector<1x32xf32>
    %c0_17 = arith.constant 0 : index
    %c0_18 = arith.constant 0 : index
    %c0_19 = arith.constant 0 : index
    %44 = vector.load %arg3[%c0_17, %c0_18, %c0_19] : memref<2x32x96xf32, #tpu.memory_space<vmem>>, vector<1x32x96xf32>
    %45 = vector.shape_cast %44 : vector<1x32x96xf32> to vector<32x96xf32>
    %cst_20 = arith.constant dense<0.000000e+00> : vector<16x96xf32>
    %46 = tpu.matmul %24, %45, %cst_20 {dimension_numbers = #tpu.dot_dimension_numbers<[1], [0], [0], [1], [0, 0, 1, 1], [], []>} : vector<16x32xf32>, vector<32x96xf32>, vector<16x96xf32> -> vector<16x96xf32>
    %47 = vector.broadcast %36 : vector<1x96xf32> to vector<16x96xf32>
    %48 = arith.addf %46, %47 : vector<16x96xf32>
    %49 = vector.extract_strided_slice %48 {offsets = [0, 0], sizes = [16, 32], strides = [1, 1]} : vector<16x96xf32> to vector<16x32xf32>
    %50 = vector.broadcast %33 : f32 to vector<16x32xf32>
    %51 = arith.mulf %49, %50 : vector<16x32xf32>
    %52 = vector.extract_strided_slice %48 {offsets = [0, 32], sizes = [16, 32], strides = [1, 1]} : vector<16x96xf32> to vector<16x32xf32>
    %53 = vector.extract_strided_slice %48 {offsets = [0, 64], sizes = [16, 32], strides = [1, 1]} : vector<16x96xf32> to vector<16x32xf32>
    %54 = vector.shape_cast %51 : vector<16x32xf32> to vector<2x8x32xf32>
    %55 = vector.extract_strided_slice %54 {offsets = [0, 0, 0], sizes = [2, 8, 8], strides = [1, 1, 1]} : vector<2x8x32xf32> to vector<2x8x8xf32>
    %56 = vector.extract_strided_slice %54 {offsets = [0, 0, 8], sizes = [2, 8, 8], strides = [1, 1, 1]} : vector<2x8x32xf32> to vector<2x8x8xf32>
    %57 = vector.extract_strided_slice %54 {offsets = [0, 0, 16], sizes = [2, 8, 8], strides = [1, 1, 1]} : vector<2x8x32xf32> to vector<2x8x8xf32>
    %58 = vector.extract_strided_slice %54 {offsets = [0, 0, 24], sizes = [2, 8, 8], strides = [1, 1, 1]} : vector<2x8x32xf32> to vector<2x8x8xf32>
    %59 = tpu.concatenate %55, %56, %57, %58 in 0 : vector<2x8x8xf32>, vector<2x8x8xf32>, vector<2x8x8xf32>, vector<2x8x8xf32> -> vector<8x8x8xf32>
    %60 = vector.shape_cast %52 : vector<16x32xf32> to vector<2x8x32xf32>
    %61 = vector.extract_strided_slice %60 {offsets = [0, 0, 0], sizes = [2, 8, 8], strides = [1, 1, 1]} : vector<2x8x32xf32> to vector<2x8x8xf32>
    %62 = vector.extract_strided_slice %60 {offsets = [0, 0, 8], sizes = [2, 8, 8], strides = [1, 1, 1]} : vector<2x8x32xf32> to vector<2x8x8xf32>
    %63 = vector.extract_strided_slice %60 {offsets = [0, 0, 16], sizes = [2, 8, 8], strides = [1, 1, 1]} : vector<2x8x32xf32> to vector<2x8x8xf32>
    %64 = vector.extract_strided_slice %60 {offsets = [0, 0, 24], sizes = [2, 8, 8], strides = [1, 1, 1]} : vector<2x8x32xf32> to vector<2x8x8xf32>
    %65 = tpu.concatenate %61, %62, %63, %64 in 0 : vector<2x8x8xf32>, vector<2x8x8xf32>, vector<2x8x8xf32>, vector<2x8x8xf32> -> vector<8x8x8xf32>
    %66 = vector.shape_cast %53 : vector<16x32xf32> to vector<2x8x32xf32>
    %67 = vector.extract_strided_slice %66 {offsets = [0, 0, 0], sizes = [2, 8, 8], strides = [1, 1, 1]} : vector<2x8x32xf32> to vector<2x8x8xf32>
    %68 = vector.extract_strided_slice %66 {offsets = [0, 0, 8], sizes = [2, 8, 8], strides = [1, 1, 1]} : vector<2x8x32xf32> to vector<2x8x8xf32>
    %69 = vector.extract_strided_slice %66 {offsets = [0, 0, 16], sizes = [2, 8, 8], strides = [1, 1, 1]} : vector<2x8x32xf32> to vector<2x8x8xf32>
    %70 = vector.extract_strided_slice %66 {offsets = [0, 0, 24], sizes = [2, 8, 8], strides = [1, 1, 1]} : vector<2x8x32xf32> to vector<2x8x8xf32>
    %71 = tpu.concatenate %67, %68, %69, %70 in 0 : vector<2x8x8xf32>, vector<2x8x8xf32>, vector<2x8x8xf32>, vector<2x8x8xf32> -> vector<8x8x8xf32>
    "tpu.trace_start"() <{level = 10 : i32, message = "bqd,bkd->bqk"}> : () -> ()
    %cst_21 = arith.constant dense<0.000000e+00> : vector<8x8x8xf32>
    %72 = tpu.matmul %59, %65, %cst_21 {dimension_numbers = #tpu.dot_dimension_numbers<[2], [2], [1], [1], [0, 0, 0, 1, 1, 1], [0], [0]>} : vector<8x8x8xf32>, vector<8x8x8xf32>, vector<8x8x8xf32> -> vector<8x8x8xf32>
    "tpu.trace_stop"() : () -> ()
    %73 = vector.broadcast %31 : vector<8x1x8xf32> to vector<8x8x8xf32>
    %74 = arith.addf %72, %73 : vector<8x8x8xf32>
    %cst_22 = arith.constant dense<0xFF800000> : vector<8x8xf32>
    %75 = vector.multi_reduction <maximumf>, %74, %cst_22 [2] : vector<8x8x8xf32> to vector<8x8xf32>
    %76 = vector.shape_cast %75 : vector<8x8xf32> to vector<8x8x1xf32>
    %77 = vector.broadcast %76 : vector<8x8x1xf32> to vector<8x8x8xf32>
    %78 = arith.subf %74, %77 : vector<8x8x8xf32>
    %79 = math.exp %78 : vector<8x8x8xf32>
    %cst_23 = arith.constant dense<0.000000e+00> : vector<8x8xf32>
    %80 = vector.multi_reduction <add>, %79, %cst_23 [2] : vector<8x8x8xf32> to vector<8x8xf32>
    %81 = vector.shape_cast %80 : vector<8x8xf32> to vector<8x8x1xf32>
    %82 = tpu.reciprocal %81 {approx = true} : vector<8x8x1xf32> -> vector<8x8x1xf32>
    %83 = vector.broadcast %82 : vector<8x8x1xf32> to vector<8x8x8xf32>
    %84 = arith.mulf %79, %83 : vector<8x8x8xf32>
    "tpu.trace_start"() <{level = 10 : i32, message = "bqk,bkd->bqd"}> : () -> ()
    %cst_24 = arith.constant dense<0.000000e+00> : vector<8x8x8xf32>
    %85 = tpu.matmul %84, %71, %cst_24 {dimension_numbers = #tpu.dot_dimension_numbers<[2], [1], [1], [2], [0, 0, 0, 1, 1, 2], [0], [0]>} : vector<8x8x8xf32>, vector<8x8x8xf32>, vector<8x8x8xf32> -> vector<8x8x8xf32>
    "tpu.trace_stop"() : () -> ()
    %86 = vector.extract_strided_slice %85 {offsets = [0, 0, 0], sizes = [2, 8, 8], strides = [1, 1, 1]} : vector<8x8x8xf32> to vector<2x8x8xf32>
    %87 = vector.extract_strided_slice %85 {offsets = [2, 0, 0], sizes = [2, 8, 8], strides = [1, 1, 1]} : vector<8x8x8xf32> to vector<2x8x8xf32>
    %88 = vector.extract_strided_slice %85 {offsets = [4, 0, 0], sizes = [2, 8, 8], strides = [1, 1, 1]} : vector<8x8x8xf32> to vector<2x8x8xf32>
    %89 = vector.extract_strided_slice %85 {offsets = [6, 0, 0], sizes = [2, 8, 8], strides = [1, 1, 1]} : vector<8x8x8xf32> to vector<2x8x8xf32>
    %90 = tpu.concatenate %86, %87, %88, %89 in 2 : vector<2x8x8xf32>, vector<2x8x8xf32>, vector<2x8x8xf32>, vector<2x8x8xf32> -> vector<2x8x32xf32>
    %91 = vector.shape_cast %90 : vector<2x8x32xf32> to vector<16x32xf32>
    %c0_25 = arith.constant 0 : index
    %c0_26 = arith.constant 0 : index
    %c0_27 = arith.constant 0 : index
    %92 = vector.load %arg4[%c0_25, %c0_26, %c0_27] : memref<2x32x32xf32, #tpu.memory_space<vmem>>, vector<1x32x32xf32>
    %93 = vector.shape_cast %92 : vector<1x32x32xf32> to vector<32x32xf32>
    %cst_28 = arith.constant dense<0.000000e+00> : vector<16x32xf32>
    %94 = tpu.matmul %91, %93, %cst_28 {dimension_numbers = #tpu.dot_dimension_numbers<[1], [0], [0], [1], [0, 0, 1, 1], [], []>} : vector<16x32xf32>, vector<32x32xf32>, vector<16x32xf32> -> vector<16x32xf32>
    %95 = vector.broadcast %38 : vector<1x32xf32> to vector<16x32xf32>
    %96 = arith.addf %94, %95 : vector<16x32xf32>
    %97 = arith.addf %24, %96 : vector<16x32xf32>
    %cst_29 = arith.constant dense<0.000000e+00> : vector<16xf32>
    %98 = vector.multi_reduction <add>, %97, %cst_29 [1] : vector<16x32xf32> to vector<16xf32>
    %99 = vector.shape_cast %98 : vector<16xf32> to vector<16x1xf32>
    %cst_30 = arith.constant 3.200000e+01 : f32
    %100 = vector.broadcast %cst_30 : f32 to vector<16x1xf32>
    %101 = arith.divf %99, %100 : vector<16x1xf32>
    %102 = vector.broadcast %101 : vector<16x1xf32> to vector<16x32xf32>
    %103 = arith.subf %97, %102 : vector<16x32xf32>
    %104 = arith.mulf %103, %103 : vector<16x32xf32>
    %cst_31 = arith.constant dense<0.000000e+00> : vector<16xf32>
    %105 = vector.multi_reduction <add>, %104, %cst_31 [1] : vector<16x32xf32> to vector<16xf32>
    %106 = vector.shape_cast %105 : vector<16xf32> to vector<16x1xf32>
    %cst_32 = arith.constant 3.200000e+01 : f32
    %107 = vector.broadcast %cst_32 : f32 to vector<16x1xf32>
    %108 = arith.divf %106, %107 : vector<16x1xf32>
    %109 = vector.broadcast %101 : vector<16x1xf32> to vector<16x32xf32>
    %110 = arith.subf %97, %109 : vector<16x32xf32>
    %cst_33 = arith.constant 9.99999996E-13 : f32
    %111 = vector.broadcast %cst_33 : f32 to vector<16x1xf32>
    %112 = arith.addf %108, %111 : vector<16x1xf32>
    %113 = math.rsqrt %112 : vector<16x1xf32>
    %114 = vector.broadcast %113 : vector<16x1xf32> to vector<16x32xf32>
    %115 = arith.mulf %110, %114 : vector<16x32xf32>
    %116 = vector.broadcast %39 : vector<1x32xf32> to vector<16x32xf32>
    %117 = arith.mulf %115, %116 : vector<16x32xf32>
    %118 = vector.broadcast %40 : vector<1x32xf32> to vector<16x32xf32>
    %119 = arith.addf %117, %118 : vector<16x32xf32>
    %c0_34 = arith.constant 0 : index
    %c0_35 = arith.constant 0 : index
    %c0_36 = arith.constant 0 : index
    %120 = vector.load %arg5[%c0_34, %c0_35, %c0_36] : memref<2x32x64xf32, #tpu.memory_space<vmem>>, vector<1x32x64xf32>
    %121 = vector.shape_cast %120 : vector<1x32x64xf32> to vector<32x64xf32>
    %cst_37 = arith.constant dense<0.000000e+00> : vector<16x64xf32>
    %122 = tpu.matmul %119, %121, %cst_37 {dimension_numbers = #tpu.dot_dimension_numbers<[1], [0], [0], [1], [0, 0, 1, 1], [], []>} : vector<16x32xf32>, vector<32x64xf32>, vector<16x64xf32> -> vector<16x64xf32>
    %123 = vector.broadcast %37 : vector<1x64xf32> to vector<16x64xf32>
    %124 = arith.addf %122, %123 : vector<16x64xf32>
    %cst_38 = arith.constant 5.000000e-01 : f32
    %125 = vector.broadcast %cst_38 : f32 to vector<16x64xf32>
    %126 = arith.mulf %125, %124 : vector<16x64xf32>
    %cst_39 = arith.constant 4.471500e-02 : f32
    %127 = vector.broadcast %cst_39 : f32 to vector<16x64xf32>
    %128 = arith.mulf %127, %124 : vector<16x64xf32>
    %129 = arith.mulf %128, %124 : vector<16x64xf32>
    %130 = arith.mulf %129, %124 : vector<16x64xf32>
    %131 = arith.addf %124, %130 : vector<16x64xf32>
    %cst_40 = arith.constant 0.797884583 : f32
    %132 = vector.broadcast %cst_40 : f32 to vector<16x64xf32>
    %133 = arith.mulf %132, %131 : vector<16x64xf32>
    %134 = math.tanh %133 : vector<16x64xf32>
    %cst_41 = arith.constant 1.000000e+00 : f32
    %135 = vector.broadcast %cst_41 : f32 to vector<16x64xf32>
    %136 = arith.addf %135, %134 : vector<16x64xf32>
    %137 = arith.mulf %126, %136 : vector<16x64xf32>
    %c0_42 = arith.constant 0 : index
    %c0_43 = arith.constant 0 : index
    %c0_44 = arith.constant 0 : index
    %138 = vector.load %arg6[%c0_42, %c0_43, %c0_44] : memref<2x64x32xf32, #tpu.memory_space<vmem>>, vector<1x64x32xf32>
    %139 = vector.shape_cast %138 : vector<1x64x32xf32> to vector<64x32xf32>
    %cst_45 = arith.constant dense<0.000000e+00> : vector<16x32xf32>
    %140 = tpu.matmul %137, %139, %cst_45 {dimension_numbers = #tpu.dot_dimension_numbers<[1], [0], [0], [1], [0, 0, 1, 1], [], []>} : vector<16x64xf32>, vector<64x32xf32>, vector<16x32xf32> -> vector<16x32xf32>
    %141 = vector.broadcast %41 : vector<1x32xf32> to vector<16x32xf32>
    %142 = arith.addf %140, %141 : vector<16x32xf32>
    %143 = arith.addf %119, %142 : vector<16x32xf32>
    %cst_46 = arith.constant dense<0.000000e+00> : vector<16xf32>
    %144 = vector.multi_reduction <add>, %143, %cst_46 [1] : vector<16x32xf32> to vector<16xf32>
    %145 = vector.shape_cast %144 : vector<16xf32> to vector<16x1xf32>
    %cst_47 = arith.constant 3.200000e+01 : f32
    %146 = vector.broadcast %cst_47 : f32 to vector<16x1xf32>
    %147 = arith.divf %145, %146 : vector<16x1xf32>
    %148 = vector.broadcast %147 : vector<16x1xf32> to vector<16x32xf32>
    %149 = arith.subf %143, %148 : vector<16x32xf32>
    %150 = arith.mulf %149, %149 : vector<16x32xf32>
    %cst_48 = arith.constant dense<0.000000e+00> : vector<16xf32>
    %151 = vector.multi_reduction <add>, %150, %cst_48 [1] : vector<16x32xf32> to vector<16xf32>
    %152 = vector.shape_cast %151 : vector<16xf32> to vector<16x1xf32>
    %cst_49 = arith.constant 3.200000e+01 : f32
    %153 = vector.broadcast %cst_49 : f32 to vector<16x1xf32>
    %154 = arith.divf %152, %153 : vector<16x1xf32>
    %155 = vector.broadcast %147 : vector<16x1xf32> to vector<16x32xf32>
    %156 = arith.subf %143, %155 : vector<16x32xf32>
    %cst_50 = arith.constant 9.99999996E-13 : f32
    %157 = vector.broadcast %cst_50 : f32 to vector<16x1xf32>
    %158 = arith.addf %154, %157 : vector<16x1xf32>
    %159 = math.rsqrt %158 : vector<16x1xf32>
    %160 = vector.broadcast %159 : vector<16x1xf32> to vector<16x32xf32>
    %161 = arith.mulf %156, %160 : vector<16x32xf32>
    %162 = vector.broadcast %42 : vector<1x32xf32> to vector<16x32xf32>
    %163 = arith.mulf %161, %162 : vector<16x32xf32>
    %164 = vector.broadcast %43 : vector<1x32xf32> to vector<16x32xf32>
    %165 = arith.addf %163, %164 : vector<16x32xf32>
    %c1_51 = arith.constant 1 : index
    %c0_52 = arith.constant 0 : index
    %c0_53 = arith.constant 0 : index
    %166 = vector.load %arg7[%c1_51, %c0_52, %c0_53] : memref<2x8x128xf32, #tpu.memory_space<vmem>>, vector<1x8x128xf32>
    %167 = vector.shape_cast %166 : vector<1x8x128xf32> to vector<8x128xf32>
    %168 = vector.extract_strided_slice %167 {offsets = [0, 0], sizes = [1, 96], strides = [1, 1]} : vector<8x128xf32> to vector<1x96xf32>
    %169 = vector.extract_strided_slice %167 {offsets = [1, 0], sizes = [1, 64], strides = [1, 1]} : vector<8x128xf32> to vector<1x64xf32>
    %170 = vector.extract_strided_slice %167 {offsets = [2, 0], sizes = [1, 32], strides = [1, 1]} : vector<8x128xf32> to vector<1x32xf32>
    %171 = vector.extract_strided_slice %167 {offsets = [3, 0], sizes = [1, 32], strides = [1, 1]} : vector<8x128xf32> to vector<1x32xf32>
    %172 = vector.extract_strided_slice %167 {offsets = [4, 0], sizes = [1, 32], strides = [1, 1]} : vector<8x128xf32> to vector<1x32xf32>
    %173 = vector.extract_strided_slice %167 {offsets = [5, 0], sizes = [1, 32], strides = [1, 1]} : vector<8x128xf32> to vector<1x32xf32>
    %174 = vector.extract_strided_slice %167 {offsets = [6, 0], sizes = [1, 32], strides = [1, 1]} : vector<8x128xf32> to vector<1x32xf32>
    %175 = vector.extract_strided_slice %167 {offsets = [7, 0], sizes = [1, 32], strides = [1, 1]} : vector<8x128xf32> to vector<1x32xf32>
    %c1_54 = arith.constant 1 : index
    %c0_55 = arith.constant 0 : index
    %c0_56 = arith.constant 0 : index
    %176 = vector.load %arg3[%c1_54, %c0_55, %c0_56] : memref<2x32x96xf32, #tpu.memory_space<vmem>>, vector<1x32x96xf32>
    %177 = vector.shape_cast %176 : vector<1x32x96xf32> to vector<32x96xf32>
    %cst_57 = arith.constant dense<0.000000e+00> : vector<16x96xf32>
    %178 = tpu.matmul %165, %177, %cst_57 {dimension_numbers = #tpu.dot_dimension_numbers<[1], [0], [0], [1], [0, 0, 1, 1], [], []>} : vector<16x32xf32>, vector<32x96xf32>, vector<16x96xf32> -> vector<16x96xf32>
    %179 = vector.broadcast %168 : vector<1x96xf32> to vector<16x96xf32>
    %180 = arith.addf %178, %179 : vector<16x96xf32>
    %181 = vector.extract_strided_slice %180 {offsets = [0, 0], sizes = [16, 32], strides = [1, 1]} : vector<16x96xf32> to vector<16x32xf32>
    %182 = vector.broadcast %33 : f32 to vector<16x32xf32>
    %183 = arith.mulf %181, %182 : vector<16x32xf32>
    %184 = vector.extract_strided_slice %180 {offsets = [0, 32], sizes = [16, 32], strides = [1, 1]} : vector<16x96xf32> to vector<16x32xf32>
    %185 = vector.extract_strided_slice %180 {offsets = [0, 64], sizes = [16, 32], strides = [1, 1]} : vector<16x96xf32> to vector<16x32xf32>
    %186 = vector.shape_cast %183 : vector<16x32xf32> to vector<2x8x32xf32>
    %187 = vector.extract_strided_slice %186 {offsets = [0, 0, 0], sizes = [2, 8, 8], strides = [1, 1, 1]} : vector<2x8x32xf32> to vector<2x8x8xf32>
    %188 = vector.extract_strided_slice %186 {offsets = [0, 0, 8], sizes = [2, 8, 8], strides = [1, 1, 1]} : vector<2x8x32xf32> to vector<2x8x8xf32>
    %189 = vector.extract_strided_slice %186 {offsets = [0, 0, 16], sizes = [2, 8, 8], strides = [1, 1, 1]} : vector<2x8x32xf32> to vector<2x8x8xf32>
    %190 = vector.extract_strided_slice %186 {offsets = [0, 0, 24], sizes = [2, 8, 8], strides = [1, 1, 1]} : vector<2x8x32xf32> to vector<2x8x8xf32>
    %191 = tpu.concatenate %187, %188, %189, %190 in 0 : vector<2x8x8xf32>, vector<2x8x8xf32>, vector<2x8x8xf32>, vector<2x8x8xf32> -> vector<8x8x8xf32>
    %192 = vector.shape_cast %184 : vector<16x32xf32> to vector<2x8x32xf32>
    %193 = vector.extract_strided_slice %192 {offsets = [0, 0, 0], sizes = [2, 8, 8], strides = [1, 1, 1]} : vector<2x8x32xf32> to vector<2x8x8xf32>
    %194 = vector.extract_strided_slice %192 {offsets = [0, 0, 8], sizes = [2, 8, 8], strides = [1, 1, 1]} : vector<2x8x32xf32> to vector<2x8x8xf32>
    %195 = vector.extract_strided_slice %192 {offsets = [0, 0, 16], sizes = [2, 8, 8], strides = [1, 1, 1]} : vector<2x8x32xf32> to vector<2x8x8xf32>
    %196 = vector.extract_strided_slice %192 {offsets = [0, 0, 24], sizes = [2, 8, 8], strides = [1, 1, 1]} : vector<2x8x32xf32> to vector<2x8x8xf32>
    %197 = tpu.concatenate %193, %194, %195, %196 in 0 : vector<2x8x8xf32>, vector<2x8x8xf32>, vector<2x8x8xf32>, vector<2x8x8xf32> -> vector<8x8x8xf32>
    %198 = vector.shape_cast %185 : vector<16x32xf32> to vector<2x8x32xf32>
    %199 = vector.extract_strided_slice %198 {offsets = [0, 0, 0], sizes = [2, 8, 8], strides = [1, 1, 1]} : vector<2x8x32xf32> to vector<2x8x8xf32>
    %200 = vector.extract_strided_slice %198 {offsets = [0, 0, 8], sizes = [2, 8, 8], strides = [1, 1, 1]} : vector<2x8x32xf32> to vector<2x8x8xf32>
    %201 = vector.extract_strided_slice %198 {offsets = [0, 0, 16], sizes = [2, 8, 8], strides = [1, 1, 1]} : vector<2x8x32xf32> to vector<2x8x8xf32>
    %202 = vector.extract_strided_slice %198 {offsets = [0, 0, 24], sizes = [2, 8, 8], strides = [1, 1, 1]} : vector<2x8x32xf32> to vector<2x8x8xf32>
    %203 = tpu.concatenate %199, %200, %201, %202 in 0 : vector<2x8x8xf32>, vector<2x8x8xf32>, vector<2x8x8xf32>, vector<2x8x8xf32> -> vector<8x8x8xf32>
    "tpu.trace_start"() <{level = 10 : i32, message = "bqd,bkd->bqk"}> : () -> ()
    %cst_58 = arith.constant dense<0.000000e+00> : vector<8x8x8xf32>
    %204 = tpu.matmul %191, %197, %cst_58 {dimension_numbers = #tpu.dot_dimension_numbers<[2], [2], [1], [1], [0, 0, 0, 1, 1, 1], [0], [0]>} : vector<8x8x8xf32>, vector<8x8x8xf32>, vector<8x8x8xf32> -> vector<8x8x8xf32>
    "tpu.trace_stop"() : () -> ()
    %205 = vector.broadcast %31 : vector<8x1x8xf32> to vector<8x8x8xf32>
    %206 = arith.addf %204, %205 : vector<8x8x8xf32>
    %cst_59 = arith.constant dense<0xFF800000> : vector<8x8xf32>
    %207 = vector.multi_reduction <maximumf>, %206, %cst_59 [2] : vector<8x8x8xf32> to vector<8x8xf32>
    %208 = vector.shape_cast %207 : vector<8x8xf32> to vector<8x8x1xf32>
    %209 = vector.broadcast %208 : vector<8x8x1xf32> to vector<8x8x8xf32>
    %210 = arith.subf %206, %209 : vector<8x8x8xf32>
    %211 = math.exp %210 : vector<8x8x8xf32>
    %cst_60 = arith.constant dense<0.000000e+00> : vector<8x8xf32>
    %212 = vector.multi_reduction <add>, %211, %cst_60 [2] : vector<8x8x8xf32> to vector<8x8xf32>
    %213 = vector.shape_cast %212 : vector<8x8xf32> to vector<8x8x1xf32>
    %214 = tpu.reciprocal %213 {approx = true} : vector<8x8x1xf32> -> vector<8x8x1xf32>
    %215 = vector.broadcast %214 : vector<8x8x1xf32> to vector<8x8x8xf32>
    %216 = arith.mulf %211, %215 : vector<8x8x8xf32>
    "tpu.trace_start"() <{level = 10 : i32, message = "bqk,bkd->bqd"}> : () -> ()
    %cst_61 = arith.constant dense<0.000000e+00> : vector<8x8x8xf32>
    %217 = tpu.matmul %216, %203, %cst_61 {dimension_numbers = #tpu.dot_dimension_numbers<[2], [1], [1], [2], [0, 0, 0, 1, 1, 2], [0], [0]>} : vector<8x8x8xf32>, vector<8x8x8xf32>, vector<8x8x8xf32> -> vector<8x8x8xf32>
    "tpu.trace_stop"() : () -> ()
    %218 = vector.extract_strided_slice %217 {offsets = [0, 0, 0], sizes = [2, 8, 8], strides = [1, 1, 1]} : vector<8x8x8xf32> to vector<2x8x8xf32>
    %219 = vector.extract_strided_slice %217 {offsets = [2, 0, 0], sizes = [2, 8, 8], strides = [1, 1, 1]} : vector<8x8x8xf32> to vector<2x8x8xf32>
    %220 = vector.extract_strided_slice %217 {offsets = [4, 0, 0], sizes = [2, 8, 8], strides = [1, 1, 1]} : vector<8x8x8xf32> to vector<2x8x8xf32>
    %221 = vector.extract_strided_slice %217 {offsets = [6, 0, 0], sizes = [2, 8, 8], strides = [1, 1, 1]} : vector<8x8x8xf32> to vector<2x8x8xf32>
    %222 = tpu.concatenate %218, %219, %220, %221 in 2 : vector<2x8x8xf32>, vector<2x8x8xf32>, vector<2x8x8xf32>, vector<2x8x8xf32> -> vector<2x8x32xf32>
    %223 = vector.shape_cast %222 : vector<2x8x32xf32> to vector<16x32xf32>
    %c1_62 = arith.constant 1 : index
    %c0_63 = arith.constant 0 : index
    %c0_64 = arith.constant 0 : index
    %224 = vector.load %arg4[%c1_62, %c0_63, %c0_64] : memref<2x32x32xf32, #tpu.memory_space<vmem>>, vector<1x32x32xf32>
    %225 = vector.shape_cast %224 : vector<1x32x32xf32> to vector<32x32xf32>
    %cst_65 = arith.constant dense<0.000000e+00> : vector<16x32xf32>
    %226 = tpu.matmul %223, %225, %cst_65 {dimension_numbers = #tpu.dot_dimension_numbers<[1], [0], [0], [1], [0, 0, 1, 1], [], []>} : vector<16x32xf32>, vector<32x32xf32>, vector<16x32xf32> -> vector<16x32xf32>
    %227 = vector.broadcast %170 : vector<1x32xf32> to vector<16x32xf32>
    %228 = arith.addf %226, %227 : vector<16x32xf32>
    %229 = arith.addf %165, %228 : vector<16x32xf32>
    %cst_66 = arith.constant dense<0.000000e+00> : vector<16xf32>
    %230 = vector.multi_reduction <add>, %229, %cst_66 [1] : vector<16x32xf32> to vector<16xf32>
    %231 = vector.shape_cast %230 : vector<16xf32> to vector<16x1xf32>
    %cst_67 = arith.constant 3.200000e+01 : f32
    %232 = vector.broadcast %cst_67 : f32 to vector<16x1xf32>
    %233 = arith.divf %231, %232 : vector<16x1xf32>
    %234 = vector.broadcast %233 : vector<16x1xf32> to vector<16x32xf32>
    %235 = arith.subf %229, %234 : vector<16x32xf32>
    %236 = arith.mulf %235, %235 : vector<16x32xf32>
    %cst_68 = arith.constant dense<0.000000e+00> : vector<16xf32>
    %237 = vector.multi_reduction <add>, %236, %cst_68 [1] : vector<16x32xf32> to vector<16xf32>
    %238 = vector.shape_cast %237 : vector<16xf32> to vector<16x1xf32>
    %cst_69 = arith.constant 3.200000e+01 : f32
    %239 = vector.broadcast %cst_69 : f32 to vector<16x1xf32>
    %240 = arith.divf %238, %239 : vector<16x1xf32>
    %241 = vector.broadcast %233 : vector<16x1xf32> to vector<16x32xf32>
    %242 = arith.subf %229, %241 : vector<16x32xf32>
    %cst_70 = arith.constant 9.99999996E-13 : f32
    %243 = vector.broadcast %cst_70 : f32 to vector<16x1xf32>
    %244 = arith.addf %240, %243 : vector<16x1xf32>
    %245 = math.rsqrt %244 : vector<16x1xf32>
    %246 = vector.broadcast %245 : vector<16x1xf32> to vector<16x32xf32>
    %247 = arith.mulf %242, %246 : vector<16x32xf32>
    %248 = vector.broadcast %171 : vector<1x32xf32> to vector<16x32xf32>
    %249 = arith.mulf %247, %248 : vector<16x32xf32>
    %250 = vector.broadcast %172 : vector<1x32xf32> to vector<16x32xf32>
    %251 = arith.addf %249, %250 : vector<16x32xf32>
    %c1_71 = arith.constant 1 : index
    %c0_72 = arith.constant 0 : index
    %c0_73 = arith.constant 0 : index
    %252 = vector.load %arg5[%c1_71, %c0_72, %c0_73] : memref<2x32x64xf32, #tpu.memory_space<vmem>>, vector<1x32x64xf32>
    %253 = vector.shape_cast %252 : vector<1x32x64xf32> to vector<32x64xf32>
    %cst_74 = arith.constant dense<0.000000e+00> : vector<16x64xf32>
    %254 = tpu.matmul %251, %253, %cst_74 {dimension_numbers = #tpu.dot_dimension_numbers<[1], [0], [0], [1], [0, 0, 1, 1], [], []>} : vector<16x32xf32>, vector<32x64xf32>, vector<16x64xf32> -> vector<16x64xf32>
    %255 = vector.broadcast %169 : vector<1x64xf32> to vector<16x64xf32>
    %256 = arith.addf %254, %255 : vector<16x64xf32>
    %cst_75 = arith.constant 5.000000e-01 : f32
    %257 = vector.broadcast %cst_75 : f32 to vector<16x64xf32>
    %258 = arith.mulf %257, %256 : vector<16x64xf32>
    %cst_76 = arith.constant 4.471500e-02 : f32
    %259 = vector.broadcast %cst_76 : f32 to vector<16x64xf32>
    %260 = arith.mulf %259, %256 : vector<16x64xf32>
    %261 = arith.mulf %260, %256 : vector<16x64xf32>
    %262 = arith.mulf %261, %256 : vector<16x64xf32>
    %263 = arith.addf %256, %262 : vector<16x64xf32>
    %cst_77 = arith.constant 0.797884583 : f32
    %264 = vector.broadcast %cst_77 : f32 to vector<16x64xf32>
    %265 = arith.mulf %264, %263 : vector<16x64xf32>
    %266 = math.tanh %265 : vector<16x64xf32>
    %cst_78 = arith.constant 1.000000e+00 : f32
    %267 = vector.broadcast %cst_78 : f32 to vector<16x64xf32>
    %268 = arith.addf %267, %266 : vector<16x64xf32>
    %269 = arith.mulf %258, %268 : vector<16x64xf32>
    %c1_79 = arith.constant 1 : index
    %c0_80 = arith.constant 0 : index
    %c0_81 = arith.constant 0 : index
    %270 = vector.load %arg6[%c1_79, %c0_80, %c0_81] : memref<2x64x32xf32, #tpu.memory_space<vmem>>, vector<1x64x32xf32>
    %271 = vector.shape_cast %270 : vector<1x64x32xf32> to vector<64x32xf32>
    %cst_82 = arith.constant dense<0.000000e+00> : vector<16x32xf32>
    %272 = tpu.matmul %269, %271, %cst_82 {dimension_numbers = #tpu.dot_dimension_numbers<[1], [0], [0], [1], [0, 0, 1, 1], [], []>} : vector<16x64xf32>, vector<64x32xf32>, vector<16x32xf32> -> vector<16x32xf32>
    %273 = vector.broadcast %173 : vector<1x32xf32> to vector<16x32xf32>
    %274 = arith.addf %272, %273 : vector<16x32xf32>
    %275 = arith.addf %251, %274 : vector<16x32xf32>
    %cst_83 = arith.constant dense<0.000000e+00> : vector<16xf32>
    %276 = vector.multi_reduction <add>, %275, %cst_83 [1] : vector<16x32xf32> to vector<16xf32>
    %277 = vector.shape_cast %276 : vector<16xf32> to vector<16x1xf32>
    %cst_84 = arith.constant 3.200000e+01 : f32
    %278 = vector.broadcast %cst_84 : f32 to vector<16x1xf32>
    %279 = arith.divf %277, %278 : vector<16x1xf32>
    %280 = vector.broadcast %279 : vector<16x1xf32> to vector<16x32xf32>
    %281 = arith.subf %275, %280 : vector<16x32xf32>
    %282 = arith.mulf %281, %281 : vector<16x32xf32>
    %cst_85 = arith.constant dense<0.000000e+00> : vector<16xf32>
    %283 = vector.multi_reduction <add>, %282, %cst_85 [1] : vector<16x32xf32> to vector<16xf32>
    %284 = vector.shape_cast %283 : vector<16xf32> to vector<16x1xf32>
    %cst_86 = arith.constant 3.200000e+01 : f32
    %285 = vector.broadcast %cst_86 : f32 to vector<16x1xf32>
    %286 = arith.divf %284, %285 : vector<16x1xf32>
    %287 = vector.broadcast %279 : vector<16x1xf32> to vector<16x32xf32>
    %288 = arith.subf %275, %287 : vector<16x32xf32>
    %cst_87 = arith.constant 9.99999996E-13 : f32
    %289 = vector.broadcast %cst_87 : f32 to vector<16x1xf32>
    %290 = arith.addf %286, %289 : vector<16x1xf32>
    %291 = math.rsqrt %290 : vector<16x1xf32>
    %292 = vector.broadcast %291 : vector<16x1xf32> to vector<16x32xf32>
    %293 = arith.mulf %288, %292 : vector<16x32xf32>
    %294 = vector.broadcast %174 : vector<1x32xf32> to vector<16x32xf32>
    %295 = arith.mulf %293, %294 : vector<16x32xf32>
    %296 = vector.broadcast %175 : vector<1x32xf32> to vector<16x32xf32>
    %297 = arith.addf %295, %296 : vector<16x32xf32>
    %298 = vector.extract_strided_slice %297 {offsets = [0, 0], sizes = [1, 32], strides = [1, 1]} : vector<16x32xf32> to vector<1x32xf32>
    %299 = vector.extract_strided_slice %297 {offsets = [8, 0], sizes = [1, 32], strides = [1, 1]} : vector<16x32xf32> to vector<1x32xf32>
    %300 = tpu.concatenate %298, %299 in 0 : vector<1x32xf32>, vector<1x32xf32> -> vector<2x32xf32>
    %c0_88 = arith.constant 0 : index
    %c0_89 = arith.constant 0 : index
    %301 = vector.load %arg8[%c0_88, %c0_89] : memref<32x32xf32, #tpu.memory_space<vmem>>, vector<32x32xf32>
    %cst_90 = arith.constant dense<0.000000e+00> : vector<2x32xf32>
    %302 = tpu.matmul %300, %301, %cst_90 {dimension_numbers = #tpu.dot_dimension_numbers<[1], [0], [0], [1], [0, 0, 1, 1], [], []>} : vector<2x32xf32>, vector<32x32xf32>, vector<2x32xf32> -> vector<2x32xf32>
    %c0_91 = arith.constant 0 : index
    %c0_92 = arith.constant 0 : index
    %303 = vector.load %arg9[%c0_91, %c0_92] : memref<1x32xf32, #tpu.memory_space<vmem>>, vector<1x32xf32>
    %304 = vector.broadcast %303 : vector<1x32xf32> to vector<2x32xf32>
    %305 = arith.addf %302, %304 : vector<2x32xf32>
    %306 = math.tanh %305 : vector<2x32xf32>
    %c0_93 = arith.constant 0 : index
    %c0_94 = arith.constant 0 : index
    %307 = vector.load %arg10[%c0_93, %c0_94] : memref<2x32xf32, #tpu.memory_space<vmem>>, vector<2x32xf32>
    tpu.vector_store %arg10[%c0_93, %c0_94], %306 {strides = array<i32>} : memref<2x32xf32, #tpu.memory_space<vmem>>, vector<2x32xf32>,
    return
  }
}

</mosaic_0001>

<llo_original>
// kernel: movie_bert_forward.1
$region0: #{movie_bert_forward.1}
  #allocation0 [shape = 'u32[]', space=smem, size = 0x4, offset = 0x4, fixed_abs, tag = 'smem constant byte address 0x4 - core index']
  #allocation1 [shape = 'u32[144,128]{1,0:T(1,128)}', space=vmem, size = 0x12000, scoped, tag = 'internal scratch']
  %s0 = inlined_call_operand.vmem [shape: f32[16,32], index: 0, kind: input, shape index: {}]
  %s1 = inlined_call_operand.vmem [shape: f32[2,8], index: 1, kind: input, shape index: {}]
  %s2 = inlined_call_operand.vmem [shape: f32[2,32], index: 2, kind: input, shape index: {}]
  %s3 = inlined_call_operand.vmem [shape: f32[2,32,96], index: 3, kind: input, shape index: {}]
  %s4 = inlined_call_operand.vmem [shape: f32[2,32,32], index: 4, kind: input, shape index: {}]
  %s5 = inlined_call_operand.vmem [shape: f32[2,32,64], index: 5, kind: input, shape index: {}]
  %s6 = inlined_call_operand.vmem [shape: f32[2,64,32], index: 6, kind: input, shape index: {}]
  %s7 = inlined_call_operand.vmem [shape: f32[2,8,128], index: 7, kind: input, shape index: {}]
  %s8 = inlined_call_operand.vmem [shape: f32[32,32], index: 8, kind: input, shape index: {}]
  %s9 = inlined_call_operand.vmem [shape: f32[1,32], index: 9, kind: input, shape index: {}]
  %s10 = inlined_call_operand.hbm [shape: f32[2,32], index: 10, kind: output, shape index: {}]
  %s11 = sld [smem:[#allocation0]]
  $region50: #{movie_bert_forward.1} parent=0
    _
  %s13 = ssub.s32 1, %s11
  %s14 = scalar_select 0, %s13, %s11
  $region1: #{movie_bert_forward.1} parent=0
    #allocation2 [shape = 'u8[1024]{0}', space=vmem, size = 0x400, scoped, tag = 'output window, operand 0, single buffered']
    #allocation3 [shape = 's32[1]{0}', space=sflag, size = 0x4, scoped, tag = 'scoped memory for movie_bert_forward.1']
    %15 = vsyncpa [#allocation3], 0
    // Predicated region
    $region2: #{movie_bert_forward.1} parent=1 // pred_check
      _
    $region3: #{movie_bert_forward.1} parent=1 // pred_check_branch
      %17 = sbr.rel (0) target = $region5
    $region4: #{movie_bert_forward.1} parent=1 // pred_region
      _
    $region5: #{movie_bert_forward.1} parent=1 // pred_fallthru
      _
    // Predicated region
    $region6: #{movie_bert_forward.1} parent=1 // pred_check
      _
    $region7: #{movie_bert_forward.1} parent=1 // pred_check_branch
      %19 = sbr.rel (0) target = $region9
    $region8: #{movie_bert_forward.1} parent=1 // pred_region
      _
    $region9: #{movie_bert_forward.1} parent=1 // pred_fallthru
      _
    // Predicated region
    $region10: #{movie_bert_forward.1} parent=1 // pred_check
      _
    $region11: #{movie_bert_forward.1} parent=1 // pred_check_branch
      %21 = sbr.rel (0) target = $region13
    $region12: #{movie_bert_forward.1} parent=1 // pred_region
      _
    $region13: #{movie_bert_forward.1} parent=1 // pred_fallthru
      _
    // Predicated region
    $region14: #{movie_bert_forward.1} parent=1 // pred_check
      _
    $region15: #{movie_bert_forward.1} parent=1 // pred_check_branch
      %23 = sbr.rel (0) target = $region17
    $region16: #{movie_bert_forward.1} parent=1 // pred_region
      _
    $region17: #{movie_bert_forward.1} parent=1 // pred_fallthru
      _
    // Predicated region
    $region18: #{movie_bert_forward.1} parent=1 // pred_check
      _
    $region19: #{movie_bert_forward.1} parent=1 // pred_check_branch
      %25 = sbr.rel (0) target = $region21
    $region20: #{movie_bert_forward.1} parent=1 // pred_region
      _
    $region21: #{movie_bert_forward.1} parent=1 // pred_fallthru
      _
    // Predicated region
    $region22: #{movie_bert_forward.1} parent=1 // pred_check
      _
    $region23: #{movie_bert_forward.1} parent=1 // pred_check_branch
      %27 = sbr.rel (0) target = $region25
    $region24: #{movie_bert_forward.1} parent=1 // pred_region
      _
    $region25: #{movie_bert_forward.1} parent=1 // pred_fallthru
      _
    // Predicated region
    $region26: #{movie_bert_forward.1} parent=1 // pred_check
      _
    $region27: #{movie_bert_forward.1} parent=1 // pred_check_branch
      %29 = sbr.rel (0) target = $region29
    $region28: #{movie_bert_forward.1} parent=1 // pred_region
      _
    $region29: #{movie_bert_forward.1} parent=1 // pred_fallthru
      _
    // Predicated region
    $region30: #{movie_bert_forward.1} parent=1 // pred_check
      _
    $region31: #{movie_bert_forward.1} parent=1 // pred_check_branch
      %31 = sbr.rel (0) target = $region33
    $region32: #{movie_bert_forward.1} parent=1 // pred_region
      _
    $region33: #{movie_bert_forward.1} parent=1 // pred_fallthru
      _
    // Predicated region
    $region34: #{movie_bert_forward.1} parent=1 // pred_check
      _
    $region35: #{movie_bert_forward.1} parent=1 // pred_check_branch
      %33 = sbr.rel (0) target = $region37
    $region36: #{movie_bert_forward.1} parent=1 // pred_region
      _
    $region37: #{movie_bert_forward.1} parent=1 // pred_fallthru
      _
    // Predicated region
    $region38: #{movie_bert_forward.1} parent=1 // pred_check
      _
    $region39: #{movie_bert_forward.1} parent=1 // pred_check_branch
      %35 = sbr.rel (0) target = $region41
    $region40: #{movie_bert_forward.1} parent=1 // pred_region
      _
    $region41: #{movie_bert_forward.1} parent=1 // pred_fallthru
      _
    %v36 = vld [vmem:[%s0] sm:$0xff]
    %v37 = vld [vmem:[%s0 + $0x8] sm:$0xff]
    %v38 = vld [vmem:[%s2] sm:$0x1]
    %v39 = vld [vmem:[%s2 + $0x1] sm:$0x1]
    %vm40 = vcmask 261120
    %v41 = vsel %vm40, %v36, 0.0
    %42 = vadd.xlane.f32.xlu0 %v41
    %v43 = vpop.xlane.xlu0 %42
    %v44 = vsel %vm40, %v37, 0.0
    %45 = vadd.xlane.f32.xlu0 %v44
    %v46 = vpop.xlane.xlu0 %45
    %v47 = vrcp.pop 32.0
    %v48 = vmul.f32 %v43, %v47
    %v49 = vmul.f32 %v46, %v47
    %v50 = vsub.f32 %v36, %v48
    %v51 = vsub.f32 %v37, %v49
    %v52 = vmul.f32 %v50, %v50
    %v53 = vmul.f32 %v51, %v51
    %v54 = vsel %vm40, %v52, 0.0
    %55 = vadd.xlane.f32.xlu0 %v54
    %v56 = vpop.xlane.xlu0 %55
    %v57 = vsel %vm40, %v53, 0.0
    %58 = vadd.xlane.f32.xlu0 %v57
    %v59 = vpop.xlane.xlu0 %58
    %v60 = vmul.f32 %v56, %v47
    %v61 = vmul.f32 %v59, %v47
    %v62 = vadd.f32 %v60, 1e-12
    %v63 = vadd.f32 %v61, 1e-12
    %v64 = vrsqrt.pop %v62
    %v65 = vrsqrt.pop %v63
    %v66 = vmul.f32 %v50, %v64
    %v67 = vmul.f32 %v51, %v65
    %v68 = vlaneseq
    %v69 = vshrl.u32 %v68, 7
    %v70 = vsub.s32 0, %v69
    %v71 = vrot.slane %v38, %v70
    %v72 = vmul.f32 %v66, %v71
    %v73 = vmul.f32 %v67, %v71
    %v74 = vlaneseq
    %v75 = vshrl.u32 %v74, 7
    %v76 = vsub.s32 0, %v75
    %v77 = vrot.slane %v39, %v76
    %v78 = vadd.f32 %v72, %v77
    %v79 = vadd.f32 %v73, %v77
    %v80 = vld [vmem:[%s1] sm:$0x3]
    %v81 = vsub.f32 1.0, %v80
    %v84 = vunpack.c.l.s4 1966171168
    %v85 = vunpack.c.0.s8 %v84
    %v86 = vlaneseq
    %v87 = vshrl.u32 %v86, 7
    %v88 = vsub.s32 %v85, %v87
    %v89 = vrot.slane %v81, %v88
    %v90 = vcombine.high %v89, %v89
    %v92 = vunpack.c.l.s4 1966171168
    %v93 = vunpack.c.0.s8 %v92
    %v94 = vlaneseq
    %v95 = vshrl.u32 %v94, 7
    %v96 = vsub.s32 %v93, %v95
    %v97 = vrot.slane %v89, %v96
    %v99 = vunpack.c.l.s4 1966171168
    %v100 = vunpack.c.0.s8 %v99
    %v101 = vlaneseq
    %v102 = vshrl.u32 %v101, 7
    %v103 = vsub.s32 %v100, %v102
    %v104 = vrot.slane %v90, %v103
    %v107 = vmul.f32 %v97, -1e+09
    %v108 = vmul.f32 %v104, -1e+09
    %v109 = vld [vmem:[%s7] sm:$0xff]
    %v110 = vld [vmem:[%s3] sm:$0xff]
    %v111 = vld [vmem:[%s3 + $0x8] sm:$0xff]
    %v112 = vld [vmem:[%s3 + $0x10] sm:$0xff]
    %v113 = vld [vmem:[%s3 + $0x18] sm:$0xff]
    %v114 = vlaneseq
    %v115 = vshrl.u32 %v114, 7
    %v116 = vsub.s32 0, %v115
    %v117 = vrot.slane %v109, %v116
    %v119 = vsel %vm40, %v78, 0
    %v122 = vsel %vm40, %v79, 0
    %124 = vmatprep.subr.mxu0 0.0
    %125 = vmatpush1.msra.mxu0 0.0
    %126 = vmatprep.subr.mxu0 0.0
    %127 = vmatpush1.msra.mxu0 0.0
    %128 = vmatprep.subr.mxu0 0.0
    %129 = vmatpush1.msra.mxu0 0.0
    %130 = vmatprep.subr.mxu0 0.0
    %131 = vmatpush1.msra.mxu0 0.0
    %132 = vmatprep.subr.mxu0 0.0
    %133 = vmatpush1.msra.mxu0 0.0
    %134 = vmatprep.subr.mxu0 0.0
    %135 = vmatpush1.msra.mxu0 0.0
    %136 = vmatprep.subr.mxu0 0.0
    %137 = vmatpush1.msra.mxu0 0.0
    %138 = vmatprep.subr.mxu0 0.0
    %139 = vmatpush1.msra.mxu0 0.0
    %140 = vmatprep.subr.mxu0 0.0
    %141 = vmatpush1.msra.mxu0 0.0
    %142 = vmatprep.subr.mxu0 0.0
    %143 = vmatpush1.msra.mxu0 0.0
    %144 = vmatprep.subr.mxu0 0.0
    %145 = vmatpush1.msra.mxu0 0.0
    %146 = vmatprep.subr.mxu0 0.0
    %147 = vmatpush1.msra.mxu0 0.0
    %148 = vmatprep.subr.mxu0 0.0
    %149 = vmatpush1.msra.mxu0 %v113
    %150 = vmatprep.subr.mxu0 0.0
    %151 = vmatpush1.msra.mxu0 %v112
    %152 = vmatprep.subr.mxu0 0.0
    %153 = vmatpush1.msra.mxu0 %v111
    %154 = vmatprep.subr.mxu0 0.0
    %155 = vmatpush1.msra.mxu0 %v110
    %156 = vmatprep.subr.mxu0 0.0
    %157 = vmatpush2.msra.mxu0 0.0
    %158 = vmatprep.subr.mxu0 0.0
    %159 = vmatpush2.msra.mxu0 0.0
    %160 = vmatprep.subr.mxu0 0.0
    %161 = vmatpush2.msra.mxu0 0.0
    %162 = vmatprep.subr.mxu0 0.0
    %163 = vmatpush2.msra.mxu0 0.0
    %164 = vmatprep.subr.mxu0 0.0
    %165 = vmatpush2.msra.mxu0 0.0
    %166 = vmatprep.subr.mxu0 0.0
    %167 = vmatpush2.msra.mxu0 0.0
    %168 = vmatprep.subr.mxu0 0.0
    %169 = vmatpush2.msra.mxu0 0.0
    %170 = vmatprep.subr.mxu0 0.0
    %171 = vmatpush2.msra.mxu0 0.0
    %172 = vmatprep.subr.mxu0 0.0
    %173 = vmatpush2.msra.mxu0 0.0
    %174 = vmatprep.subr.mxu0 0.0
    %175 = vmatpush2.msra.mxu0 0.0
    %176 = vmatprep.subr.mxu0 0.0
    %177 = vmatpush2.msra.mxu0 0.0
    %178 = vmatprep.subr.mxu0 0.0
    %179 = vmatpush2.msra.mxu0 0.0
    %180 = vmatprep.subr.mxu0 0.0
    %181 = vmatpush2.msra.mxu0 0.0
    %182 = vmatprep.subr.mxu0 0.0
    %183 = vmatpush2.msra.mxu0 0.0
    %184 = vmatprep.subr.mxu0 0.0
    %185 = vmatpush2.msra.mxu0 0.0
    %186 = vmatprep.subr.mxu0 0.0
    %187 = vmatpush2.msra.mxu0 0.0
    %188 = vmatprep.mubr.f32.mxu0 0.0
    %189 = vmatmul.mubr.f32.gmra.mxu0 %v119
    %v190 = vpop.f32.mrf.mxu0
    %v191 = vadd.f32 %v117, %v190
    %v192 = vpop.f32.mrf.mxu0
    %193 = vmatprep.mubr.f32.mxu0 0.0
    %194 = vmatmul.mubr.f32.gmra.mxu0 %v122
    %v195 = vpop.f32.mrf.mxu0
    %v196 = vadd.f32 %v117, %v195
    %v197 = vpop.f32.mrf.mxu0
    %198 = vdwg.mxu0
    %v199 = vmul.f32 %v191, 0.35355338
    %v200 = vmul.f32 %v196, 0.35355338
    %203 = vrot.lane.b32.xlu0 %v199, 120
    %v204 = vpop.permute.xlu0 %203
    %205 = vrot.lane.b32.xlu0 %v200, 120
    %v206 = vpop.permute.xlu0 %205
    %207 = vrot.lane.b32.xlu0 %v199, 112
    %v208 = vpop.permute.xlu0 %207
    %209 = vrot.lane.b32.xlu0 %v200, 112
    %v210 = vpop.permute.xlu0 %209
    %211 = vrot.lane.b32.xlu0 %v199, 104
    %v212 = vpop.permute.xlu0 %211
    %213 = vrot.lane.b32.xlu0 %v200, 104
    %v214 = vpop.permute.xlu0 %213
    %217 = vrot.lane.b32.xlu0 %v191, 120
    %v218 = vpop.permute.xlu0 %217
    %219 = vrot.lane.b32.xlu0 %v196, 120
    %v220 = vpop.permute.xlu0 %219
    %221 = vrot.lane.b32.xlu0 %v191, 112
    %v222 = vpop.permute.xlu0 %221
    %223 = vrot.lane.b32.xlu0 %v196, 112
    %v224 = vpop.permute.xlu0 %223
    %225 = vrot.lane.b32.xlu0 %v191, 104
    %v226 = vpop.permute.xlu0 %225
    %227 = vrot.lane.b32.xlu0 %v196, 104
    %v228 = vpop.permute.xlu0 %227
    %v231 = vlaneseq
    %v232 = vshrl.u32 %v231, 7
    %v233 = vsub.s32 0, %v232
    %v234 = vrot.slane %v107, %v233
    %v235 = vlaneseq
    %v236 = vshrl.u32 %v235, 7
    %v237 = vsub.s32 0, %v236
    %v238 = vrot.slane %v108, %v237
    %241 = vrot.lane.b32.xlu0 %v191, 96
    %v242 = vpop.permute.xlu0 %241
    %vm243 = vcmask 64512
    %v244 = vsel %vm243, %v199, 0
    %v246 = vsel %vm243, %v242, 0
    %248 = vmatprep.subr.mxu0 0.0
    %249 = vmatpush1.xpose.msra.mxu0 0.0
    %250 = vmatprep.subr.mxu0 0.0
    %251 = vmatpush1.xpose.msra.mxu0 0.0
    %252 = vmatprep.subr.mxu0 0.0
    %253 = vmatpush1.xpose.msra.mxu0 0.0
    %254 = vmatprep.subr.mxu0 0.0
    %255 = vmatpush1.xpose.msra.mxu0 0.0
    %256 = vmatprep.subr.mxu0 0.0
    %257 = vmatpush1.xpose.msra.mxu0 0.0
    %258 = vmatprep.subr.mxu0 0.0
    %259 = vmatpush1.xpose.msra.mxu0 0.0
    %260 = vmatprep.subr.mxu0 0.0
    %261 = vmatpush1.xpose.msra.mxu0 0.0
    %262 = vmatprep.subr.mxu0 0.0
    %263 = vmatpush1.xpose.msra.mxu0 0.0
    %264 = vmatprep.subr.mxu0 0.0
    %265 = vmatpush1.xpose.msra.mxu0 0.0
    %266 = vmatprep.subr.mxu0 0.0
    %267 = vmatpush1.xpose.msra.mxu0 0.0
    %268 = vmatprep.subr.mxu0 0.0
    %269 = vmatpush1.xpose.msra.mxu0 0.0
    %270 = vmatprep.subr.mxu0 0.0
    %271 = vmatpush1.xpose.msra.mxu0 0.0
    %272 = vmatprep.subr.mxu0 0.0
    %273 = vmatpush1.xpose.msra.mxu0 0.0
    %274 = vmatprep.subr.mxu0 0.0
    %275 = vmatpush1.xpose.msra.mxu0 0.0
    %276 = vmatprep.subr.mxu0 0.0
    %277 = vmatpush1.xpose.msra.mxu0 0.0
    %278 = vmatprep.subr.mxu0 0.0
    %279 = vmatpush1.xpose.msra.mxu0 %v246
    %280 = vmatprep.subr.mxu0 0.0
    %281 = vmatpush2.xpose.msra.mxu0 0.0
    %282 = vmatprep.subr.mxu0 0.0
    %283 = vmatpush2.xpose.msra.mxu0 0.0
    %284 = vmatprep.subr.mxu0 0.0
    %285 = vmatpush2.xpose.msra.mxu0 0.0
    %286 = vmatprep.subr.mxu0 0.0
    %287 = vmatpush2.xpose.msra.mxu0 0.0
    %288 = vmatprep.subr.mxu0 0.0
    %289 = vmatpush2.xpose.msra.mxu0 0.0
    %290 = vmatprep.subr.mxu0 0.0
    %291 = vmatpush2.xpose.msra.mxu0 0.0
    %292 = vmatprep.subr.mxu0 0.0
    %293 = vmatpush2.xpose.msra.mxu0 0.0
    %294 = vmatprep.subr.mxu0 0.0
    %295 = vmatpush2.xpose.msra.mxu0 0.0
    %296 = vmatprep.subr.mxu0 0.0
    %297 = vmatpush2.xpose.msra.mxu0 0.0
    %298 = vmatprep.subr.mxu0 0.0
    %299 = vmatpush2.xpose.msra.mxu0 0.0
    %300 = vmatprep.subr.mxu0 0.0
    %301 = vmatpush2.xpose.msra.mxu0 0.0
    %302 = vmatprep.subr.mxu0 0.0
    %303 = vmatpush2.xpose.msra.mxu0 0.0
    %304 = vmatprep.subr.mxu0 0.0
    %305 = vmatpush2.xpose.msra.mxu0 0.0
    %306 = vmatprep.subr.mxu0 0.0
    %307 = vmatpush2.xpose.msra.mxu0 0.0
    %308 = vmatprep.subr.mxu0 0.0
    %309 = vmatpush2.xpose.msra.mxu0 0.0
    %310 = vmatprep.subr.mxu0 0.0
    %311 = vmatpush2.xpose.msra.mxu0 0.0
    %312 = vmatprep.mubr.f32.mxu0 0.0
    %313 = vmatmul.mubr.f32.gmra.mxu0 %v244
    %v314 = vpop.f32.mrf.mxu0
    %v315 = vadd.f32 %v234, %v314
    %v316 = vpop.f32.mrf.mxu0
    %317 = vdwg.mxu0
    %318 = vrot.lane.b32.xlu0 %v196, 96
    %v319 = vpop.permute.xlu0 %318
    %v320 = vsel %vm243, %v200, 0
    %v322 = vsel %vm243, %v319, 0
    %324 = vmatprep.subr.mxu0 0.0
    %325 = vmatpush1.xpose.msra.mxu0 0.0
    %326 = vmatprep.subr.mxu0 0.0
    %327 = vmatpush1.xpose.msra.mxu0 0.0
    %328 = vmatprep.subr.mxu0 0.0
    %329 = vmatpush1.xpose.msra.mxu0 0.0
    %330 = vmatprep.subr.mxu0 0.0
    %331 = vmatpush1.xpose.msra.mxu0 0.0
    %332 = vmatprep.subr.mxu0 0.0
    %333 = vmatpush1.xpose.msra.mxu0 0.0
    %334 = vmatprep.subr.mxu0 0.0
    %335 = vmatpush1.xpose.msra.mxu0 0.0
    %336 = vmatprep.subr.mxu0 0.0
    %337 = vmatpush1.xpose.msra.mxu0 0.0
    %338 = vmatprep.subr.mxu0 0.0
    %339 = vmatpush1.xpose.msra.mxu0 0.0
    %340 = vmatprep.subr.mxu0 0.0
    %341 = vmatpush1.xpose.msra.mxu0 0.0
    %342 = vmatprep.subr.mxu0 0.0
    %343 = vmatpush1.xpose.msra.mxu0 0.0
    %344 = vmatprep.subr.mxu0 0.0
    %345 = vmatpush1.xpose.msra.mxu0 0.0
    %346 = vmatprep.subr.mxu0 0.0
    %347 = vmatpush1.xpose.msra.mxu0 0.0
    %348 = vmatprep.subr.mxu0 0.0
    %349 = vmatpush1.xpose.msra.mxu0 0.0
    %350 = vmatprep.subr.mxu0 0.0
    %351 = vmatpush1.xpose.msra.mxu0 0.0
    %352 = vmatprep.subr.mxu0 0.0
    %353 = vmatpush1.xpose.msra.mxu0 0.0
    %354 = vmatprep.subr.mxu0 0.0
    %355 = vmatpush1.xpose.msra.mxu0 %v322
    %356 = vmatprep.subr.mxu0 0.0
    %357 = vmatpush2.xpose.msra.mxu0 0.0
    %358 = vmatprep.subr.mxu0 0.0
    %359 = vmatpush2.xpose.msra.mxu0 0.0
    %360 = vmatprep.subr.mxu0 0.0
    %361 = vmatpush2.xpose.msra.mxu0 0.0
    %362 = vmatprep.subr.mxu0 0.0
    %363 = vmatpush2.xpose.msra.mxu0 0.0
    %364 = vmatprep.subr.mxu0 0.0
    %365 = vmatpush2.xpose.msra.mxu0 0.0
    %366 = vmatprep.subr.mxu0 0.0
    %367 = vmatpush2.xpose.msra.mxu0 0.0
    %368 = vmatprep.subr.mxu0 0.0
    %369 = vmatpush2.xpose.msra.mxu0 0.0
    %370 = vmatprep.subr.mxu0 0.0
    %371 = vmatpush2.xpose.msra.mxu0 0.0
    %372 = vmatprep.subr.mxu0 0.0
    %373 = vmatpush2.xpose.msra.mxu0 0.0
    %374 = vmatprep.subr.mxu0 0.0
    %375 = vmatpush2.xpose.msra.mxu0 0.0
    %376 = vmatprep.subr.mxu0 0.0
    %377 = vmatpush2.xpose.msra.mxu0 0.0
    %378 = vmatprep.subr.mxu0 0.0
    %379 = vmatpush2.xpose.msra.mxu0 0.0
    %380 = vmatprep.subr.mxu0 0.0
    %381 = vmatpush2.xpose.msra.mxu0 0.0
    %382 = vmatprep.subr.mxu0 0.0
    %383 = vmatpush2.xpose.msra.mxu0 0.0
    %384 = vmatprep.subr.mxu0 0.0
    %385 = vmatpush2.xpose.msra.mxu0 0.0
    %386 = vmatprep.subr.mxu0 0.0
    %387 = vmatpush2.xpose.msra.mxu0 0.0
    %388 = vmatprep.mubr.f32.mxu0 0.0
    %389 = vmatmul.mubr.f32.gmra.mxu0 %v320
    %v390 = vpop.f32.mrf.mxu0
    %v391 = vadd.f32 %v238, %v390
    %v392 = vpop.f32.mrf.mxu0
    %393 = vdwg.mxu0
    %394 = vrot.lane.b32.xlu0 %v218, 96
    %v395 = vpop.permute.xlu0 %394
    %v396 = vsel %vm243, %v204, 0
    %v398 = vsel %vm243, %v395, 0
    %400 = vmatprep.subr.mxu0 0.0
    %401 = vmatpush1.xpose.msra.mxu0 0.0
    %402 = vmatprep.subr.mxu0 0.0
    %403 = vmatpush1.xpose.msra.mxu0 0.0
    %404 = vmatprep.subr.mxu0 0.0
    %405 = vmatpush1.xpose.msra.mxu0 0.0
    %406 = vmatprep.subr.mxu0 0.0
    %407 = vmatpush1.xpose.msra.mxu0 0.0
    %408 = vmatprep.subr.mxu0 0.0
    %409 = vmatpush1.xpose.msra.mxu0 0.0
    %410 = vmatprep.subr.mxu0 0.0
    %411 = vmatpush1.xpose.msra.mxu0 0.0
    %412 = vmatprep.subr.mxu0 0.0
    %413 = vmatpush1.xpose.msra.mxu0 0.0
    %414 = vmatprep.subr.mxu0 0.0
    %415 = vmatpush1.xpose.msra.mxu0 0.0
    %416 = vmatprep.subr.mxu0 0.0
    %417 = vmatpush1.xpose.msra.mxu0 0.0
    %418 = vmatprep.subr.mxu0 0.0
    %419 = vmatpush1.xpose.msra.mxu0 0.0
    %420 = vmatprep.subr.mxu0 0.0
    %421 = vmatpush1.xpose.msra.mxu0 0.0
    %422 = vmatprep.subr.mxu0 0.0
    %423 = vmatpush1.xpose.msra.mxu0 0.0
    %424 = vmatprep.subr.mxu0 0.0
    %425 = vmatpush1.xpose.msra.mxu0 0.0
    %426 = vmatprep.subr.mxu0 0.0
    %427 = vmatpush1.xpose.msra.mxu0 0.0
    %428 = vmatprep.subr.mxu0 0.0
    %429 = vmatpush1.xpose.msra.mxu0 0.0
    %430 = vmatprep.subr.mxu0 0.0
    %431 = vmatpush1.xpose.msra.mxu0 %v398
    %432 = vmatprep.subr.mxu0 0.0
    %433 = vmatpush2.xpose.msra.mxu0 0.0
    %434 = vmatprep.subr.mxu0 0.0
    %435 = vmatpush2.xpose.msra.mxu0 0.0
    %436 = vmatprep.subr.mxu0 0.0
    %437 = vmatpush2.xpose.msra.mxu0 0.0
    %438 = vmatprep.subr.mxu0 0.0
    %439 = vmatpush2.xpose.msra.mxu0 0.0
    %440 = vmatprep.subr.mxu0 0.0
    %441 = vmatpush2.xpose.msra.mxu0 0.0
    %442 = vmatprep.subr.mxu0 0.0
    %443 = vmatpush2.xpose.msra.mxu0 0.0
    %444 = vmatprep.subr.mxu0 0.0
    %445 = vmatpush2.xpose.msra.mxu0 0.0
    %446 = vmatprep.subr.mxu0 0.0
    %447 = vmatpush2.xpose.msra.mxu0 0.0
    %448 = vmatprep.subr.mxu0 0.0
    %449 = vmatpush2.xpose.msra.mxu0 0.0
    %450 = vmatprep.subr.mxu0 0.0
    %451 = vmatpush2.xpose.msra.mxu0 0.0
    %452 = vmatprep.subr.mxu0 0.0
    %453 = vmatpush2.xpose.msra.mxu0 0.0
    %454 = vmatprep.subr.mxu0 0.0
    %455 = vmatpush2.xpose.msra.mxu0 0.0
    %456 = vmatprep.subr.mxu0 0.0
    %457 = vmatpush2.xpose.msra.mxu0 0.0
    %458 = vmatprep.subr.mxu0 0.0
    %459 = vmatpush2.xpose.msra.mxu0 0.0
    %460 = vmatprep.subr.mxu0 0.0
    %461 = vmatpush2.xpose.msra.mxu0 0.0
    %462 = vmatprep.subr.mxu0 0.0
    %463 = vmatpush2.xpose.msra.mxu0 0.0
    %464 = vmatprep.mubr.f32.mxu0 0.0
    %465 = vmatmul.mubr.f32.gmra.mxu0 %v396
    %v466 = vpop.f32.mrf.mxu0
    %v467 = vadd.f32 %v234, %v466
    %v468 = vpop.f32.mrf.mxu0
    %469 = vdwg.mxu0
    %470 = vrot.lane.b32.xlu0 %v220, 96
    %v471 = vpop.permute.xlu0 %470
    %v472 = vsel %vm243, %v206, 0
    %v474 = vsel %vm243, %v471, 0
    %476 = vmatprep.subr.mxu0 0.0
    %477 = vmatpush1.xpose.msra.mxu0 0.0
    %478 = vmatprep.subr.mxu0 0.0
    %479 = vmatpush1.xpose.msra.mxu0 0.0
    %480 = vmatprep.subr.mxu0 0.0
    %481 = vmatpush1.xpose.msra.mxu0 0.0
    %482 = vmatprep.subr.mxu0 0.0
    %483 = vmatpush1.xpose.msra.mxu0 0.0
    %484 = vmatprep.subr.mxu0 0.0
    %485 = vmatpush1.xpose.msra.mxu0 0.0
    %486 = vmatprep.subr.mxu0 0.0
    %487 = vmatpush1.xpose.msra.mxu0 0.0
    %488 = vmatprep.subr.mxu0 0.0
    %489 = vmatpush1.xpose.msra.mxu0 0.0
    %490 = vmatprep.subr.mxu0 0.0
    %491 = vmatpush1.xpose.msra.mxu0 0.0
    %492 = vmatprep.subr.mxu0 0.0
    %493 = vmatpush1.xpose.msra.mxu0 0.0
    %494 = vmatprep.subr.mxu0 0.0
    %495 = vmatpush1.xpose.msra.mxu0 0.0
    %496 = vmatprep.subr.mxu0 0.0
    %497 = vmatpush1.xpose.msra.mxu0 0.0
    %498 = vmatprep.subr.mxu0 0.0
    %499 = vmatpush1.xpose.msra.mxu0 0.0
    %500 = vmatprep.subr.mxu0 0.0
    %501 = vmatpush1.xpose.msra.mxu0 0.0
    %502 = vmatprep.subr.mxu0 0.0
    %503 = vmatpush1.xpose.msra.mxu0 0.0
    %504 = vmatprep.subr.mxu0 0.0
    %505 = vmatpush1.xpose.msra.mxu0 0.0
    %506 = vmatprep.subr.mxu0 0.0
    %507 = vmatpush1.xpose.msra.mxu0 %v474
    %508 = vmatprep.subr.mxu0 0.0
    %509 = vmatpush2.xpose.msra.mxu0 0.0
    %510 = vmatprep.subr.mxu0 0.0
    %511 = vmatpush2.xpose.msra.mxu0 0.0
    %512 = vmatprep.subr.mxu0 0.0
    %513 = vmatpush2.xpose.msra.mxu0 0.0
    %514 = vmatprep.subr.mxu0 0.0
    %515 = vmatpush2.xpose.msra.mxu0 0.0
    %516 = vmatprep.subr.mxu0 0.0
    %517 = vmatpush2.xpose.msra.mxu0 0.0
    %518 = vmatprep.subr.mxu0 0.0
    %519 = vmatpush2.xpose.msra.mxu0 0.0
    %520 = vmatprep.subr.mxu0 0.0
    %521 = vmatpush2.xpose.msra.mxu0 0.0
    %522 = vmatprep.subr.mxu0 0.0
    %523 = vmatpush2.xpose.msra.mxu0 0.0
    %524 = vmatprep.subr.mxu0 0.0
    %525 = vmatpush2.xpose.msra.mxu0 0.0
    %526 = vmatprep.subr.mxu0 0.0
    %527 = vmatpush2.xpose.msra.mxu0 0.0
    %528 = vmatprep.subr.mxu0 0.0
    %529 = vmatpush2.xpose.msra.mxu0 0.0
    %530 = vmatprep.subr.mxu0 0.0
    %531 = vmatpush2.xpose.msra.mxu0 0.0
    %532 = vmatprep.subr.mxu0 0.0
    %533 = vmatpush2.xpose.msra.mxu0 0.0
    %534 = vmatprep.subr.mxu0 0.0
    %535 = vmatpush2.xpose.msra.mxu0 0.0
    %536 = vmatprep.subr.mxu0 0.0
    %537 = vmatpush2.xpose.msra.mxu0 0.0
    %538 = vmatprep.subr.mxu0 0.0
    %539 = vmatpush2.xpose.msra.mxu0 0.0
    %540 = vmatprep.mubr.f32.mxu0 0.0
    %541 = vmatmul.mubr.f32.gmra.mxu0 %v472
    %v542 = vpop.f32.mrf.mxu0
    %v543 = vadd.f32 %v238, %v542
    %v544 = vpop.f32.mrf.mxu0
    %545 = vdwg.mxu0
    %546 = vrot.lane.b32.xlu0 %v222, 96
    %v547 = vpop.permute.xlu0 %546
    %v548 = vsel %vm243, %v208, 0
    %v550 = vsel %vm243, %v547, 0
    %552 = vmatprep.subr.mxu0 0.0
    %553 = vmatpush1.xpose.msra.mxu0 0.0
    %554 = vmatprep.subr.mxu0 0.0
    %555 = vmatpush1.xpose.msra.mxu0 0.0
    %556 = vmatprep.subr.mxu0 0.0
    %557 = vmatpush1.xpose.msra.mxu0 0.0
    %558 = vmatprep.subr.mxu0 0.0
    %559 = vmatpush1.xpose.msra.mxu0 0.0
    %560 = vmatprep.subr.mxu0 0.0
    %561 = vmatpush1.xpose.msra.mxu0 0.0
    %562 = vmatprep.subr.mxu0 0.0
    %563 = vmatpush1.xpose.msra.mxu0 0.0
    %564 = vmatprep.subr.mxu0 0.0
    %565 = vmatpush1.xpose.msra.mxu0 0.0
    %566 = vmatprep.subr.mxu0 0.0
    %567 = vmatpush1.xpose.msra.mxu0 0.0
    %568 = vmatprep.subr.mxu0 0.0
    %569 = vmatpush1.xpose.msra.mxu0 0.0
    %570 = vmatprep.subr.mxu0 0.0
    %571 = vmatpush1.xpose.msra.mxu0 0.0
    %572 = vmatprep.subr.mxu0 0.0
    %573 = vmatpush1.xpose.msra.mxu0 0.0
    %574 = vmatprep.subr.mxu0 0.0
    %575 = vmatpush1.xpose.msra.mxu0 0.0
    %576 = vmatprep.subr.mxu0 0.0
    %577 = vmatpush1.xpose.msra.mxu0 0.0
    %578 = vmatprep.subr.mxu0 0.0
    %579 = vmatpush1.xpose.msra.mxu0 0.0
    %580 = vmatprep.subr.mxu0 0.0
    %581 = vmatpush1.xpose.msra.mxu0 0.0
    %582 = vmatprep.subr.mxu0 0.0
    %583 = vmatpush1.xpose.msra.mxu0 %v550
    %584 = vmatprep.subr.mxu0 0.0
    %585 = vmatpush2.xpose.msra.mxu0 0.0
    %586 = vmatprep.subr.mxu0 0.0
    %587 = vmatpush2.xpose.msra.mxu0 0.0
    %588 = vmatprep.subr.mxu0 0.0
    %589 = vmatpush2.xpose.msra.mxu0 0.0
    %590 = vmatprep.subr.mxu0 0.0
    %591 = vmatpush2.xpose.msra.mxu0 0.0
    %592 = vmatprep.subr.mxu0 0.0
    %593 = vmatpush2.xpose.msra.mxu0 0.0
    %594 = vmatprep.subr.mxu0 0.0
    %595 = vmatpush2.xpose.msra.mxu0 0.0
    %596 = vmatprep.subr.mxu0 0.0
    %597 = vmatpush2.xpose.msra.mxu0 0.0
    %598 = vmatprep.subr.mxu0 0.0
    %599 = vmatpush2.xpose.msra.mxu0 0.0
    %600 = vmatprep.subr.mxu0 0.0
    %601 = vmatpush2.xpose.msra.mxu0 0.0
    %602 = vmatprep.subr.mxu0 0.0
    %603 = vmatpush2.xpose.msra.mxu0 0.0
    %604 = vmatprep.subr.mxu0 0.0
    %605 = vmatpush2.xpose.msra.mxu0 0.0
    %606 = vmatprep.subr.mxu0 0.0
    %607 = vmatpush2.xpose.msra.mxu0 0.0
    %608 = vmatprep.subr.mxu0 0.0
    %609 = vmatpush2.xpose.msra.mxu0 0.0
    %610 = vmatprep.subr.mxu0 0.0
    %611 = vmatpush2.xpose.msra.mxu0 0.0
    %612 = vmatprep.subr.mxu0 0.0
    %613 = vmatpush2.xpose.msra.mxu0 0.0
    %614 = vmatprep.subr.mxu0 0.0
    %615 = vmatpush2.xpose.msra.mxu0 0.0
    %616 = vmatprep.mubr.f32.mxu0 0.0
    %617 = vmatmul.mubr.f32.gmra.mxu0 %v548
    %v618 = vpop.f32.mrf.mxu0
    %v619 = vadd.f32 %v234, %v618
    %v620 = vpop.f32.mrf.mxu0
    %621 = vdwg.mxu0
    %622 = vrot.lane.b32.xlu0 %v224, 96
    %v623 = vpop.permute.xlu0 %622
    %v624 = vsel %vm243, %v210, 0
    %v626 = vsel %vm243, %v623, 0
    %628 = vmatprep.subr.mxu0 0.0
    %629 = vmatpush1.xpose.msra.mxu0 0.0
    %630 = vmatprep.subr.mxu0 0.0
    %631 = vmatpush1.xpose.msra.mxu0 0.0
    %632 = vmatprep.subr.mxu0 0.0
    %633 = vmatpush1.xpose.msra.mxu0 0.0
    %634 = vmatprep.subr.mxu0 0.0
    %635 = vmatpush1.xpose.msra.mxu0 0.0
    %636 = vmatprep.subr.mxu0 0.0
    %637 = vmatpush1.xpose.msra.mxu0 0.0
    %638 = vmatprep.subr.mxu0 0.0
    %639 = vmatpush1.xpose.msra.mxu0 0.0
    %640 = vmatprep.subr.mxu0 0.0
    %641 = vmatpush1.xpose.msra.mxu0 0.0
    %642 = vmatprep.subr.mxu0 0.0
    %643 = vmatpush1.xpose.msra.mxu0 0.0
    %644 = vmatprep.subr.mxu0 0.0
    %645 = vmatpush1.xpose.msra.mxu0 0.0
    %646 = vmatprep.subr.mxu0 0.0
    %647 = vmatpush1.xpose.msra.mxu0 0.0
    %648 = vmatprep.subr.mxu0 0.0
    %649 = vmatpush1.xpose.msra.mxu0 0.0
    %650 = vmatprep.subr.mxu0 0.0
    %651 = vmatpush1.xpose.msra.mxu0 0.0
    %652 = vmatprep.subr.mxu0 0.0
    %653 = vmatpush1.xpose.msra.mxu0 0.0
    %654 = vmatprep.subr.mxu0 0.0
    %655 = vmatpush1.xpose.msra.mxu0 0.0
    %656 = vmatprep.subr.mxu0 0.0
    %657 = vmatpush1.xpose.msra.mxu0 0.0
    %658 = vmatprep.subr.mxu0 0.0
    %659 = vmatpush1.xpose.msra.mxu0 %v626
    %660 = vmatprep.subr.mxu0 0.0
    %661 = vmatpush2.xpose.msra.mxu0 0.0
    %662 = vmatprep.subr.mxu0 0.0
    %663 = vmatpush2.xpose.msra.mxu0 0.0
    %664 = vmatprep.subr.mxu0 0.0
    %665 = vmatpush2.xpose.msra.mxu0 0.0
    %666 = vmatprep.subr.mxu0 0.0
    %667 = vmatpush2.xpose.msra.mxu0 0.0
    %668 = vmatprep.subr.mxu0 0.0
    %669 = vmatpush2.xpose.msra.mxu0 0.0
    %670 = vmatprep.subr.mxu0 0.0
    %671 = vmatpush2.xpose.msra.mxu0 0.0
    %672 = vmatprep.subr.mxu0 0.0
    %673 = vmatpush2.xpose.msra.mxu0 0.0
    %674 = vmatprep.subr.mxu0 0.0
    %675 = vmatpush2.xpose.msra.mxu0 0.0
    %676 = vmatprep.subr.mxu0 0.0
    %677 = vmatpush2.xpose.msra.mxu0 0.0
    %678 = vmatprep.subr.mxu0 0.0
    %679 = vmatpush2.xpose.msra.mxu0 0.0
    %680 = vmatprep.subr.mxu0 0.0
    %681 = vmatpush2.xpose.msra.mxu0 0.0
    %682 = vmatprep.subr.mxu0 0.0
    %683 = vmatpush2.xpose.msra.mxu0 0.0
    %684 = vmatprep.subr.mxu0 0.0
    %685 = vmatpush2.xpose.msra.mxu0 0.0
    %686 = vmatprep.subr.mxu0 0.0
    %687 = vmatpush2.xpose.msra.mxu0 0.0
    %688 = vmatprep.subr.mxu0 0.0
    %689 = vmatpush2.xpose.msra.mxu0 0.0
    %690 = vmatprep.subr.mxu0 0.0
    %691 = vmatpush2.xpose.msra.mxu0 0.0
    %692 = vmatprep.mubr.f32.mxu0 0.0
    %693 = vmatmul.mubr.f32.gmra.mxu0 %v624
    %v694 = vpop.f32.mrf.mxu0
    %v695 = vadd.f32 %v238, %v694
    %v696 = vpop.f32.mrf.mxu0
    %697 = vdwg.mxu0
    %698 = vrot.lane.b32.xlu0 %v226, 96
    %v699 = vpop.permute.xlu0 %698
    %v700 = vsel %vm243, %v212, 0
    %v702 = vsel %vm243, %v699, 0
    %704 = vmatprep.subr.mxu0 0.0
    %705 = vmatpush1.xpose.msra.mxu0 0.0
    %706 = vmatprep.subr.mxu0 0.0
    %707 = vmatpush1.xpose.msra.mxu0 0.0
    %708 = vmatprep.subr.mxu0 0.0
    %709 = vmatpush1.xpose.msra.mxu0 0.0
    %710 = vmatprep.subr.mxu0 0.0
    %711 = vmatpush1.xpose.msra.mxu0 0.0
    %712 = vmatprep.subr.mxu0 0.0
    %713 = vmatpush1.xpose.msra.mxu0 0.0
    %714 = vmatprep.subr.mxu0 0.0
    %715 = vmatpush1.xpose.msra.mxu0 0.0
    %716 = vmatprep.subr.mxu0 0.0
    %717 = vmatpush1.xpose.msra.mxu0 0.0
    %718 = vmatprep.subr.mxu0 0.0
    %719 = vmatpush1.xpose.msra.mxu0 0.0
    %720 = vmatprep.subr.mxu0 0.0
    %721 = vmatpush1.xpose.msra.mxu0 0.0
    %722 = vmatprep.subr.mxu0 0.0
    %723 = vmatpush1.xpose.msra.mxu0 0.0
    %724 = vmatprep.subr.mxu0 0.0
    %725 = vmatpush1.xpose.msra.mxu0 0.0
    %726 = vmatprep.subr.mxu0 0.0
    %727 = vmatpush1.xpose.msra.mxu0 0.0
    %728 = vmatprep.subr.mxu0 0.0
    %729 = vmatpush1.xpose.msra.mxu0 0.0
    %730 = vmatprep.subr.mxu0 0.0
    %731 = vmatpush1.xpose.msra.mxu0 0.0
    %732 = vmatprep.subr.mxu0 0.0
    %733 = vmatpush1.xpose.msra.mxu0 0.0
    %734 = vmatprep.subr.mxu0 0.0
    %735 = vmatpush1.xpose.msra.mxu0 %v702
    %736 = vmatprep.subr.mxu0 0.0
    %737 = vmatpush2.xpose.msra.mxu0 0.0
    %738 = vmatprep.subr.mxu0 0.0
    %739 = vmatpush2.xpose.msra.mxu0 0.0
    %740 = vmatprep.subr.mxu0 0.0
    %741 = vmatpush2.xpose.msra.mxu0 0.0
    %742 = vmatprep.subr.mxu0 0.0
    %743 = vmatpush2.xpose.msra.mxu0 0.0
    %744 = vmatprep.subr.mxu0 0.0
    %745 = vmatpush2.xpose.msra.mxu0 0.0
    %746 = vmatprep.subr.mxu0 0.0
    %747 = vmatpush2.xpose.msra.mxu0 0.0
    %748 = vmatprep.subr.mxu0 0.0
    %749 = vmatpush2.xpose.msra.mxu0 0.0
    %750 = vmatprep.subr.mxu0 0.0
    %751 = vmatpush2.xpose.msra.mxu0 0.0
    %752 = vmatprep.subr.mxu0 0.0
    %753 = vmatpush2.xpose.msra.mxu0 0.0
    %754 = vmatprep.subr.mxu0 0.0
    %755 = vmatpush2.xpose.msra.mxu0 0.0
    %756 = vmatprep.subr.mxu0 0.0
    %757 = vmatpush2.xpose.msra.mxu0 0.0
    %758 = vmatprep.subr.mxu0 0.0
    %759 = vmatpush2.xpose.msra.mxu0 0.0
    %760 = vmatprep.subr.mxu0 0.0
    %761 = vmatpush2.xpose.msra.mxu0 0.0
    %762 = vmatprep.subr.mxu0 0.0
    %763 = vmatpush2.xpose.msra.mxu0 0.0
    %764 = vmatprep.subr.mxu0 0.0
    %765 = vmatpush2.xpose.msra.mxu0 0.0
    %766 = vmatprep.subr.mxu0 0.0
    %767 = vmatpush2.xpose.msra.mxu0 0.0
    %768 = vmatprep.mubr.f32.mxu0 0.0
    %769 = vmatmul.mubr.f32.gmra.mxu0 %v700
    %v770 = vpop.f32.mrf.mxu0
    %v771 = vadd.f32 %v234, %v770
    %v772 = vpop.f32.mrf.mxu0
    %773 = vdwg.mxu0
    %774 = vrot.lane.b32.xlu0 %v228, 96
    %v775 = vpop.permute.xlu0 %774
    %v776 = vsel %vm243, %v214, 0
    %v778 = vsel %vm243, %v775, 0
    %780 = vmatprep.subr.mxu0 0.0
    %781 = vmatpush1.xpose.msra.mxu0 0.0
    %782 = vmatprep.subr.mxu0 0.0
    %783 = vmatpush1.xpose.msra.mxu0 0.0
    %784 = vmatprep.subr.mxu0 0.0
    %785 = vmatpush1.xpose.msra.mxu0 0.0
    %786 = vmatprep.subr.mxu0 0.0
    %787 = vmatpush1.xpose.msra.mxu0 0.0
    %788 = vmatprep.subr.mxu0 0.0
    %789 = vmatpush1.xpose.msra.mxu0 0.0
    %790 = vmatprep.subr.mxu0 0.0
    %791 = vmatpush1.xpose.msra.mxu0 0.0
    %792 = vmatprep.subr.mxu0 0.0
    %793 = vmatpush1.xpose.msra.mxu0 0.0
    %794 = vmatprep.subr.mxu0 0.0
    %795 = vmatpush1.xpose.msra.mxu0 0.0
    %796 = vmatprep.subr.mxu0 0.0
    %797 = vmatpush1.xpose.msra.mxu0 0.0
    %798 = vmatprep.subr.mxu0 0.0
    %799 = vmatpush1.xpose.msra.mxu0 0.0
    %800 = vmatprep.subr.mxu0 0.0
    %801 = vmatpush1.xpose.msra.mxu0 0.0
    %802 = vmatprep.subr.mxu0 0.0
    %803 = vmatpush1.xpose.msra.mxu0 0.0
    %804 = vmatprep.subr.mxu0 0.0
    %805 = vmatpush1.xpose.msra.mxu0 0.0
    %806 = vmatprep.subr.mxu0 0.0
    %807 = vmatpush1.xpose.msra.mxu0 0.0
    %808 = vmatprep.subr.mxu0 0.0
    %809 = vmatpush1.xpose.msra.mxu0 0.0
    %810 = vmatprep.subr.mxu0 0.0
    %811 = vmatpush1.xpose.msra.mxu0 %v778
    %812 = vmatprep.subr.mxu0 0.0
    %813 = vmatpush2.xpose.msra.mxu0 0.0
    %814 = vmatprep.subr.mxu0 0.0
    %815 = vmatpush2.xpose.msra.mxu0 0.0
    %816 = vmatprep.subr.mxu0 0.0
    %817 = vmatpush2.xpose.msra.mxu0 0.0
    %818 = vmatprep.subr.mxu0 0.0
    %819 = vmatpush2.xpose.msra.mxu0 0.0
    %820 = vmatprep.subr.mxu0 0.0
    %821 = vmatpush2.xpose.msra.mxu0 0.0
    %822 = vmatprep.subr.mxu0 0.0
    %823 = vmatpush2.xpose.msra.mxu0 0.0
    %824 = vmatprep.subr.mxu0 0.0
    %825 = vmatpush2.xpose.msra.mxu0 0.0
    %826 = vmatprep.subr.mxu0 0.0
    %827 = vmatpush2.xpose.msra.mxu0 0.0
    %828 = vmatprep.subr.mxu0 0.0
    %829 = vmatpush2.xpose.msra.mxu0 0.0
    %830 = vmatprep.subr.mxu0 0.0
    %831 = vmatpush2.xpose.msra.mxu0 0.0
    %832 = vmatprep.subr.mxu0 0.0
    %833 = vmatpush2.xpose.msra.mxu0 0.0
    %834 = vmatprep.subr.mxu0 0.0
    %835 = vmatpush2.xpose.msra.mxu0 0.0
    %836 = vmatprep.subr.mxu0 0.0
    %837 = vmatpush2.xpose.msra.mxu0 0.0
    %838 = vmatprep.subr.mxu0 0.0
    %839 = vmatpush2.xpose.msra.mxu0 0.0
    %840 = vmatprep.subr.mxu0 0.0
    %841 = vmatpush2.xpose.msra.mxu0 0.0
    %842 = vmatprep.subr.mxu0 0.0
    %843 = vmatpush2.xpose.msra.mxu0 0.0
    %844 = vmatprep.mubr.f32.mxu0 0.0
    %845 = vmatmul.mubr.f32.gmra.mxu0 %v776
    %v846 = vpop.f32.mrf.mxu0
    %v847 = vadd.f32 %v238, %v846
    %v848 = vpop.f32.mrf.mxu0
    %849 = vdwg.mxu0
    %v850 = vsel %vm243, %v315, -inf
    %851 = vmax.xlane.f32.xlu0 %v850
    %v852 = vpop.xlane.xlu0 %851
    %v853 = vsel %vm243, %v391, -inf
    %854 = vmax.xlane.f32.xlu0 %v853
    %v855 = vpop.xlane.xlu0 %854
    %v856 = vsel %vm243, %v467, -inf
    %857 = vmax.xlane.f32.xlu0 %v856
    %v858 = vpop.xlane.xlu0 %857
    %v859 = vsel %vm243, %v543, -inf
    %860 = vmax.xlane.f32.xlu0 %v859
    %v861 = vpop.xlane.xlu0 %860
    %v862 = vsel %vm243, %v619, -inf
    %863 = vmax.xlane.f32.xlu0 %v862
    %v864 = vpop.xlane.xlu0 %863
    %v865 = vsel %vm243, %v695, -inf
    %866 = vmax.xlane.f32.xlu0 %v865
    %v867 = vpop.xlane.xlu0 %866
    %v868 = vsel %vm243, %v771, -inf
    %869 = vmax.xlane.f32.xlu0 %v868
    %v870 = vpop.xlane.xlu0 %869
    %v871 = vsel %vm243, %v847, -inf
    %872 = vmax.xlane.f32.xlu0 %v871
    %v873 = vpop.xlane.xlu0 %872
    %v874 = vsub.f32 %v315, %v852
    %v875 = vsub.f32 %v391, %v855
    %v876 = vsub.f32 %v467, %v858
    %v877 = vsub.f32 %v543, %v861
    %v878 = vsub.f32 %v619, %v864
    %v879 = vsub.f32 %v695, %v867
    %v880 = vsub.f32 %v771, %v870
    %v881 = vsub.f32 %v847, %v873
    %v882 = vmul.f32 %v874, 1.442695
    %v883 = vpow.pop %v882
    %v884 = vmul.f32 %v875, 1.442695
    %v885 = vpow.pop %v884
    %v886 = vmul.f32 %v876, 1.442695
    %v887 = vpow.pop %v886
    %v888 = vmul.f32 %v877, 1.442695
    %v889 = vpow.pop %v888
    %v890 = vmul.f32 %v878, 1.442695
    %v891 = vpow.pop %v890
    %v892 = vmul.f32 %v879, 1.442695
    %v893 = vpow.pop %v892
    %v894 = vmul.f32 %v880, 1.442695
    %v895 = vpow.pop %v894
    %v896 = vmul.f32 %v881, 1.442695
    %v897 = vpow.pop %v896
    %v898 = vsel %vm243, %v883, 0.0
    %899 = vadd.xlane.f32.xlu0 %v898
    %v900 = vpop.xlane.xlu0 %899
    %v901 = vsel %vm243, %v885, 0.0
    %902 = vadd.xlane.f32.xlu0 %v901
    %v903 = vpop.xlane.xlu0 %902
    %v904 = vsel %vm243, %v887, 0.0
    %905 = vadd.xlane.f32.xlu0 %v904
    %v906 = vpop.xlane.xlu0 %905
    %v907 = vsel %vm243, %v889, 0.0
    %908 = vadd.xlane.f32.xlu0 %v907
    %v909 = vpop.xlane.xlu0 %908
    %v910 = vsel %vm243, %v891, 0.0
    %911 = vadd.xlane.f32.xlu0 %v910
    %v912 = vpop.xlane.xlu0 %911
    %v913 = vsel %vm243, %v893, 0.0
    %914 = vadd.xlane.f32.xlu0 %v913
    %v915 = vpop.xlane.xlu0 %914
    %v916 = vsel %vm243, %v895, 0.0
    %917 = vadd.xlane.f32.xlu0 %v916
    %v918 = vpop.xlane.xlu0 %917
    %v919 = vsel %vm243, %v897, 0.0
    %920 = vadd.xlane.f32.xlu0 %v919
    %v921 = vpop.xlane.xlu0 %920
    %v922 = vrcp.pop %v900
    %v923 = vrcp.pop %v903
    %v924 = vrcp.pop %v906
    %v925 = vrcp.pop %v909
    %v926 = vrcp.pop %v912
    %v927 = vrcp.pop %v915
    %v928 = vrcp.pop %v918
    %v929 = vrcp.pop %v921
    %v930 = vmul.f32 %v883, %v922
    %v931 = vmul.f32 %v885, %v923
    %v932 = vmul.f32 %v887, %v924
    %v933 = vmul.f32 %v889, %v925
    %v934 = vmul.f32 %v891, %v926
    %v935 = vmul.f32 %v893, %v927
    %v936 = vmul.f32 %v895, %v928
    %v937 = vmul.f32 %v897, %v929
    %938 = vrot.lane.b32.xlu0 %v191, 64
    %v939 = vpop.permute.xlu0 %938
    %v942 = vsel %vm243, %v930, 0
    %944 = vmatprep.subr.mxu0 0.0
    %945 = vmatpush1.msra.mxu0 0.0
    %946 = vmatprep.subr.mxu0 0.0
    %947 = vmatpush1.msra.mxu0 0.0
    %948 = vmatprep.subr.mxu0 0.0
    %949 = vmatpush1.msra.mxu0 0.0
    %950 = vmatprep.subr.mxu0 0.0
    %951 = vmatpush1.msra.mxu0 0.0
    %952 = vmatprep.subr.mxu0 0.0
    %953 = vmatpush1.msra.mxu0 0.0
    %954 = vmatprep.subr.mxu0 0.0
    %955 = vmatpush1.msra.mxu0 0.0
    %956 = vmatprep.subr.mxu0 0.0
    %957 = vmatpush1.msra.mxu0 0.0
    %958 = vmatprep.subr.mxu0 0.0
    %959 = vmatpush1.msra.mxu0 0.0
    %960 = vmatprep.subr.mxu0 0.0
    %961 = vmatpush1.msra.mxu0 0.0
    %962 = vmatprep.subr.mxu0 0.0
    %963 = vmatpush1.msra.mxu0 0.0
    %964 = vmatprep.subr.mxu0 0.0
    %965 = vmatpush1.msra.mxu0 0.0
    %966 = vmatprep.subr.mxu0 0.0
    %967 = vmatpush1.msra.mxu0 0.0
    %968 = vmatprep.subr.mxu0 0.0
    %969 = vmatpush1.msra.mxu0 0.0
    %970 = vmatprep.subr.mxu0 0.0
    %971 = vmatpush1.msra.mxu0 0.0
    %972 = vmatprep.subr.mxu0 0.0
    %973 = vmatpush1.msra.mxu0 0.0
    %974 = vmatprep.subr.mxu0 0.0
    %975 = vmatpush1.msra.mxu0 %v939
    %976 = vmatprep.subr.mxu0 0.0
    %977 = vmatpush2.msra.mxu0 0.0
    %978 = vmatprep.subr.mxu0 0.0
    %979 = vmatpush2.msra.mxu0 0.0
    %980 = vmatprep.subr.mxu0 0.0
    %981 = vmatpush2.msra.mxu0 0.0
    %982 = vmatprep.subr.mxu0 0.0
    %983 = vmatpush2.msra.mxu0 0.0
    %984 = vmatprep.subr.mxu0 0.0
    %985 = vmatpush2.msra.mxu0 0.0
    %986 = vmatprep.subr.mxu0 0.0
    %987 = vmatpush2.msra.mxu0 0.0
    %988 = vmatprep.subr.mxu0 0.0
    %989 = vmatpush2.msra.mxu0 0.0
    %990 = vmatprep.subr.mxu0 0.0
    %991 = vmatpush2.msra.mxu0 0.0
    %992 = vmatprep.subr.mxu0 0.0
    %993 = vmatpush2.msra.mxu0 0.0
    %994 = vmatprep.subr.mxu0 0.0
    %995 = vmatpush2.msra.mxu0 0.0
    %996 = vmatprep.subr.mxu0 0.0
    %997 = vmatpush2.msra.mxu0 0.0
    %998 = vmatprep.subr.mxu0 0.0
    %999 = vmatpush2.msra.mxu0 0.0
    %1000 = vmatprep.subr.mxu0 0.0
    %1001 = vmatpush2.msra.mxu0 0.0
    %1002 = vmatprep.subr.mxu0 0.0
    %1003 = vmatpush2.msra.mxu0 0.0
    %1004 = vmatprep.subr.mxu0 0.0
    %1005 = vmatpush2.msra.mxu0 0.0
    %1006 = vmatprep.subr.mxu0 0.0
    %1007 = vmatpush2.msra.mxu0 0.0
    %1008 = vmatprep.mubr.f32.mxu0 0.0
    %1009 = vmatmul.mubr.f32.gmra.mxu0 %v942
    %v1010 = vpop.f32.mrf.mxu0
    %v1011 = vadd.f32 0.0, %v1010
    %v1012 = vpop.f32.mrf.mxu0
    %1013 = vdwg.mxu0
    %1014 = vrot.lane.b32.xlu0 %v196, 64
    %v1015 = vpop.permute.xlu0 %1014
    %v1018 = vsel %vm243, %v931, 0
    %1020 = vmatprep.subr.mxu0 0.0
    %1021 = vmatpush1.msra.mxu0 0.0
    %1022 = vmatprep.subr.mxu0 0.0
    %1023 = vmatpush1.msra.mxu0 0.0
    %1024 = vmatprep.subr.mxu0 0.0
    %1025 = vmatpush1.msra.mxu0 0.0
    %1026 = vmatprep.subr.mxu0 0.0
    %1027 = vmatpush1.msra.mxu0 0.0
    %1028 = vmatprep.subr.mxu0 0.0
    %1029 = vmatpush1.msra.mxu0 0.0
    %1030 = vmatprep.subr.mxu0 0.0
    %1031 = vmatpush1.msra.mxu0 0.0
    %1032 = vmatprep.subr.mxu0 0.0
    %1033 = vmatpush1.msra.mxu0 0.0
    %1034 = vmatprep.subr.mxu0 0.0
    %1035 = vmatpush1.msra.mxu0 0.0
    %1036 = vmatprep.subr.mxu0 0.0
    %1037 = vmatpush1.msra.mxu0 0.0
    %1038 = vmatprep.subr.mxu0 0.0
    %1039 = vmatpush1.msra.mxu0 0.0
    %1040 = vmatprep.subr.mxu0 0.0
    %1041 = vmatpush1.msra.mxu0 0.0
    %1042 = vmatprep.subr.mxu0 0.0
    %1043 = vmatpush1.msra.mxu0 0.0
    %1044 = vmatprep.subr.mxu0 0.0
    %1045 = vmatpush1.msra.mxu0 0.0
    %1046 = vmatprep.subr.mxu0 0.0
    %1047 = vmatpush1.msra.mxu0 0.0
    %1048 = vmatprep.subr.mxu0 0.0
    %1049 = vmatpush1.msra.mxu0 0.0
    %1050 = vmatprep.subr.mxu0 0.0
    %1051 = vmatpush1.msra.mxu0 %v1015
    %1052 = vmatprep.subr.mxu0 0.0
    %1053 = vmatpush2.msra.mxu0 0.0
    %1054 = vmatprep.subr.mxu0 0.0
    %1055 = vmatpush2.msra.mxu0 0.0
    %1056 = vmatprep.subr.mxu0 0.0
    %1057 = vmatpush2.msra.mxu0 0.0
    %1058 = vmatprep.subr.mxu0 0.0
    %1059 = vmatpush2.msra.mxu0 0.0
    %1060 = vmatprep.subr.mxu0 0.0
    %1061 = vmatpush2.msra.mxu0 0.0
    %1062 = vmatprep.subr.mxu0 0.0
    %1063 = vmatpush2.msra.mxu0 0.0
    %1064 = vmatprep.subr.mxu0 0.0
    %1065 = vmatpush2.msra.mxu0 0.0
    %1066 = vmatprep.subr.mxu0 0.0
    %1067 = vmatpush2.msra.mxu0 0.0
    %1068 = vmatprep.subr.mxu0 0.0
    %1069 = vmatpush2.msra.mxu0 0.0
    %1070 = vmatprep.subr.mxu0 0.0
    %1071 = vmatpush2.msra.mxu0 0.0
    %1072 = vmatprep.subr.mxu0 0.0
    %1073 = vmatpush2.msra.mxu0 0.0
    %1074 = vmatprep.subr.mxu0 0.0
    %1075 = vmatpush2.msra.mxu0 0.0
    %1076 = vmatprep.subr.mxu0 0.0
    %1077 = vmatpush2.msra.mxu0 0.0
    %1078 = vmatprep.subr.mxu0 0.0
    %1079 = vmatpush2.msra.mxu0 0.0
    %1080 = vmatprep.subr.mxu0 0.0
    %1081 = vmatpush2.msra.mxu0 0.0
    %1082 = vmatprep.subr.mxu0 0.0
    %1083 = vmatpush2.msra.mxu0 0.0
    %1084 = vmatprep.mubr.f32.mxu0 0.0
    %1085 = vmatmul.mubr.f32.gmra.mxu0 %v1018
    %v1086 = vpop.f32.mrf.mxu0
    %v1087 = vadd.f32 0.0, %v1086
    %v1088 = vpop.f32.mrf.mxu0
    %1089 = vdwg.mxu0
    %1090 = vrot.lane.b32.xlu0 %v218, 64
    %v1091 = vpop.permute.xlu0 %1090
    %v1094 = vsel %vm243, %v932, 0
    %1096 = vmatprep.subr.mxu0 0.0
    %1097 = vmatpush1.msra.mxu0 0.0
    %1098 = vmatprep.subr.mxu0 0.0
    %1099 = vmatpush1.msra.mxu0 0.0
    %1100 = vmatprep.subr.mxu0 0.0
    %1101 = vmatpush1.msra.mxu0 0.0
    %1102 = vmatprep.subr.mxu0 0.0
    %1103 = vmatpush1.msra.mxu0 0.0
    %1104 = vmatprep.subr.mxu0 0.0
    %1105 = vmatpush1.msra.mxu0 0.0
    %1106 = vmatprep.subr.mxu0 0.0
    %1107 = vmatpush1.msra.mxu0 0.0
    %1108 = vmatprep.subr.mxu0 0.0
    %1109 = vmatpush1.msra.mxu0 0.0
    %1110 = vmatprep.subr.mxu0 0.0
    %1111 = vmatpush1.msra.mxu0 0.0
    %1112 = vmatprep.subr.mxu0 0.0
    %1113 = vmatpush1.msra.mxu0 0.0
    %1114 = vmatprep.subr.mxu0 0.0
    %1115 = vmatpush1.msra.mxu0 0.0
    %1116 = vmatprep.subr.mxu0 0.0
    %1117 = vmatpush1.msra.mxu0 0.0
    %1118 = vmatprep.subr.mxu0 0.0
    %1119 = vmatpush1.msra.mxu0 0.0
    %1120 = vmatprep.subr.mxu0 0.0
    %1121 = vmatpush1.msra.mxu0 0.0
    %1122 = vmatprep.subr.mxu0 0.0
    %1123 = vmatpush1.msra.mxu0 0.0
    %1124 = vmatprep.subr.mxu0 0.0
    %1125 = vmatpush1.msra.mxu0 0.0
    %1126 = vmatprep.subr.mxu0 0.0
    %1127 = vmatpush1.msra.mxu0 %v1091
    %1128 = vmatprep.subr.mxu0 0.0
    %1129 = vmatpush2.msra.mxu0 0.0
    %1130 = vmatprep.subr.mxu0 0.0
    %1131 = vmatpush2.msra.mxu0 0.0
    %1132 = vmatprep.subr.mxu0 0.0
    %1133 = vmatpush2.msra.mxu0 0.0
    %1134 = vmatprep.subr.mxu0 0.0
    %1135 = vmatpush2.msra.mxu0 0.0
    %1136 = vmatprep.subr.mxu0 0.0
    %1137 = vmatpush2.msra.mxu0 0.0
    %1138 = vmatprep.subr.mxu0 0.0
    %1139 = vmatpush2.msra.mxu0 0.0
    %1140 = vmatprep.subr.mxu0 0.0
    %1141 = vmatpush2.msra.mxu0 0.0
    %1142 = vmatprep.subr.mxu0 0.0
    %1143 = vmatpush2.msra.mxu0 0.0
    %1144 = vmatprep.subr.mxu0 0.0
    %1145 = vmatpush2.msra.mxu0 0.0
    %1146 = vmatprep.subr.mxu0 0.0
    %1147 = vmatpush2.msra.mxu0 0.0
    %1148 = vmatprep.subr.mxu0 0.0
    %1149 = vmatpush2.msra.mxu0 0.0
    %1150 = vmatprep.subr.mxu0 0.0
    %1151 = vmatpush2.msra.mxu0 0.0
    %1152 = vmatprep.subr.mxu0 0.0
    %1153 = vmatpush2.msra.mxu0 0.0
    %1154 = vmatprep.subr.mxu0 0.0
    %1155 = vmatpush2.msra.mxu0 0.0
    %1156 = vmatprep.subr.mxu0 0.0
    %1157 = vmatpush2.msra.mxu0 0.0
    %1158 = vmatprep.subr.mxu0 0.0
    %1159 = vmatpush2.msra.mxu0 0.0
    %1160 = vmatprep.mubr.f32.mxu0 0.0
    %1161 = vmatmul.mubr.f32.gmra.mxu0 %v1094
    %v1162 = vpop.f32.mrf.mxu0
    %v1163 = vadd.f32 0.0, %v1162
    %v1164 = vpop.f32.mrf.mxu0
    %1165 = vdwg.mxu0
    %1166 = vrot.lane.b32.xlu0 %v220, 64
    %v1167 = vpop.permute.xlu0 %1166
    %v1170 = vsel %vm243, %v933, 0
    %1172 = vmatprep.subr.mxu0 0.0
    %1173 = vmatpush1.msra.mxu0 0.0
    %1174 = vmatprep.subr.mxu0 0.0
    %1175 = vmatpush1.msra.mxu0 0.0
    %1176 = vmatprep.subr.mxu0 0.0
    %1177 = vmatpush1.msra.mxu0 0.0
    %1178 = vmatprep.subr.mxu0 0.0
    %1179 = vmatpush1.msra.mxu0 0.0
    %1180 = vmatprep.subr.mxu0 0.0
    %1181 = vmatpush1.msra.mxu0 0.0
    %1182 = vmatprep.subr.mxu0 0.0
    %1183 = vmatpush1.msra.mxu0 0.0
    %1184 = vmatprep.subr.mxu0 0.0
    %1185 = vmatpush1.msra.mxu0 0.0
    %1186 = vmatprep.subr.mxu0 0.0
    %1187 = vmatpush1.msra.mxu0 0.0
    %1188 = vmatprep.subr.mxu0 0.0
    %1189 = vmatpush1.msra.mxu0 0.0
    %1190 = vmatprep.subr.mxu0 0.0
    %1191 = vmatpush1.msra.mxu0 0.0
    %1192 = vmatprep.subr.mxu0 0.0
    %1193 = vmatpush1.msra.mxu0 0.0
    %1194 = vmatprep.subr.mxu0 0.0
    %1195 = vmatpush1.msra.mxu0 0.0
    %1196 = vmatprep.subr.mxu0 0.0
    %1197 = vmatpush1.msra.mxu0 0.0
    %1198 = vmatprep.subr.mxu0 0.0
    %1199 = vmatpush1.msra.mxu0 0.0
    %1200 = vmatprep.subr.mxu0 0.0
    %1201 = vmatpush1.msra.mxu0 0.0
    %1202 = vmatprep.subr.mxu0 0.0
    %1203 = vmatpush1.msra.mxu0 %v1167
    %1204 = vmatprep.subr.mxu0 0.0
    %1205 = vmatpush2.msra.mxu0 0.0
    %1206 = vmatprep.subr.mxu0 0.0
    %1207 = vmatpush2.msra.mxu0 0.0
    %1208 = vmatprep.subr.mxu0 0.0
    %1209 = vmatpush2.msra.mxu0 0.0
    %1210 = vmatprep.subr.mxu0 0.0
    %1211 = vmatpush2.msra.mxu0 0.0
    %1212 = vmatprep.subr.mxu0 0.0
    %1213 = vmatpush2.msra.mxu0 0.0
    %1214 = vmatprep.subr.mxu0 0.0
    %1215 = vmatpush2.msra.mxu0 0.0
    %1216 = vmatprep.subr.mxu0 0.0
    %1217 = vmatpush2.msra.mxu0 0.0
    %1218 = vmatprep.subr.mxu0 0.0
    %1219 = vmatpush2.msra.mxu0 0.0
    %1220 = vmatprep.subr.mxu0 0.0
    %1221 = vmatpush2.msra.mxu0 0.0
    %1222 = vmatprep.subr.mxu0 0.0
    %1223 = vmatpush2.msra.mxu0 0.0
    %1224 = vmatprep.subr.mxu0 0.0
    %1225 = vmatpush2.msra.mxu0 0.0
    %1226 = vmatprep.subr.mxu0 0.0
    %1227 = vmatpush2.msra.mxu0 0.0
    %1228 = vmatprep.subr.mxu0 0.0
    %1229 = vmatpush2.msra.mxu0 0.0
    %1230 = vmatprep.subr.mxu0 0.0
    %1231 = vmatpush2.msra.mxu0 0.0
    %1232 = vmatprep.subr.mxu0 0.0
    %1233 = vmatpush2.msra.mxu0 0.0
    %1234 = vmatprep.subr.mxu0 0.0
    %1235 = vmatpush2.msra.mxu0 0.0
    %1236 = vmatprep.mubr.f32.mxu0 0.0
    %1237 = vmatmul.mubr.f32.gmra.mxu0 %v1170
    %v1238 = vpop.f32.mrf.mxu0
    %v1239 = vadd.f32 0.0, %v1238
    %v1240 = vpop.f32.mrf.mxu0
    %1241 = vdwg.mxu0
    %1242 = vrot.lane.b32.xlu0 %v222, 64
    %v1243 = vpop.permute.xlu0 %1242
    %v1246 = vsel %vm243, %v934, 0
    %1248 = vmatprep.subr.mxu0 0.0
    %1249 = vmatpush1.msra.mxu0 0.0
    %1250 = vmatprep.subr.mxu0 0.0
    %1251 = vmatpush1.msra.mxu0 0.0
    %1252 = vmatprep.subr.mxu0 0.0
    %1253 = vmatpush1.msra.mxu0 0.0
    %1254 = vmatprep.subr.mxu0 0.0
    %1255 = vmatpush1.msra.mxu0 0.0
    %1256 = vmatprep.subr.mxu0 0.0
    %1257 = vmatpush1.msra.mxu0 0.0
    %1258 = vmatprep.subr.mxu0 0.0
    %1259 = vmatpush1.msra.mxu0 0.0
    %1260 = vmatprep.subr.mxu0 0.0
    %1261 = vmatpush1.msra.mxu0 0.0
    %1262 = vmatprep.subr.mxu0 0.0
    %1263 = vmatpush1.msra.mxu0 0.0
    %1264 = vmatprep.subr.mxu0 0.0
    %1265 = vmatpush1.msra.mxu0 0.0
    %1266 = vmatprep.subr.mxu0 0.0
    %1267 = vmatpush1.msra.mxu0 0.0
    %1268 = vmatprep.subr.mxu0 0.0
    %1269 = vmatpush1.msra.mxu0 0.0
    %1270 = vmatprep.subr.mxu0 0.0
    %1271 = vmatpush1.msra.mxu0 0.0
    %1272 = vmatprep.subr.mxu0 0.0
    %1273 = vmatpush1.msra.mxu0 0.0
    %1274 = vmatprep.subr.mxu0 0.0
    %1275 = vmatpush1.msra.mxu0 0.0
    %1276 = vmatprep.subr.mxu0 0.0
    %1277 = vmatpush1.msra.mxu0 0.0
    %1278 = vmatprep.subr.mxu0 0.0
    %1279 = vmatpush1.msra.mxu0 %v1243
    %1280 = vmatprep.subr.mxu0 0.0
    %1281 = vmatpush2.msra.mxu0 0.0
    %1282 = vmatprep.subr.mxu0 0.0
    %1283 = vmatpush2.msra.mxu0 0.0
    %1284 = vmatprep.subr.mxu0 0.0
    %1285 = vmatpush2.msra.mxu0 0.0
    %1286 = vmatprep.subr.mxu0 0.0
    %1287 = vmatpush2.msra.mxu0 0.0
    %1288 = vmatprep.subr.mxu0 0.0
    %1289 = vmatpush2.msra.mxu0 0.0
    %1290 = vmatprep.subr.mxu0 0.0
    %1291 = vmatpush2.msra.mxu0 0.0
    %1292 = vmatprep.subr.mxu0 0.0
    %1293 = vmatpush2.msra.mxu0 0.0
    %1294 = vmatprep.subr.mxu0 0.0
    %1295 = vmatpush2.msra.mxu0 0.0
    %1296 = vmatprep.subr.mxu0 0.0
    %1297 = vmatpush2.msra.mxu0 0.0
    %1298 = vmatprep.subr.mxu0 0.0
    %1299 = vmatpush2.msra.mxu0 0.0
    %1300 = vmatprep.subr.mxu0 0.0
    %1301 = vmatpush2.msra.mxu0 0.0
    %1302 = vmatprep.subr.mxu0 0.0
    %1303 = vmatpush2.msra.mxu0 0.0
    %1304 = vmatprep.subr.mxu0 0.0
    %1305 = vmatpush2.msra.mxu0 0.0
    %1306 = vmatprep.subr.mxu0 0.0
    %1307 = vmatpush2.msra.mxu0 0.0
    %1308 = vmatprep.subr.mxu0 0.0
    %1309 = vmatpush2.msra.mxu0 0.0
    %1310 = vmatprep.subr.mxu0 0.0
    %1311 = vmatpush2.msra.mxu0 0.0
    %1312 = vmatprep.mubr.f32.mxu0 0.0
    %1313 = vmatmul.mubr.f32.gmra.mxu0 %v1246
    %v1314 = vpop.f32.mrf.mxu0
    %v1315 = vadd.f32 0.0, %v1314
    %v1316 = vpop.f32.mrf.mxu0
    %1317 = vdwg.mxu0
    %1318 = vrot.lane.b32.xlu0 %v224, 64
    %v1319 = vpop.permute.xlu0 %1318
    %v1322 = vsel %vm243, %v935, 0
    %1324 = vmatprep.subr.mxu0 0.0
    %1325 = vmatpush1.msra.mxu0 0.0
    %1326 = vmatprep.subr.mxu0 0.0
    %1327 = vmatpush1.msra.mxu0 0.0
    %1328 = vmatprep.subr.mxu0 0.0
    %1329 = vmatpush1.msra.mxu0 0.0
    %1330 = vmatprep.subr.mxu0 0.0
    %1331 = vmatpush1.msra.mxu0 0.0
    %1332 = vmatprep.subr.mxu0 0.0
    %1333 = vmatpush1.msra.mxu0 0.0
    %1334 = vmatprep.subr.mxu0 0.0
    %1335 = vmatpush1.msra.mxu0 0.0
    %1336 = vmatprep.subr.mxu0 0.0
    %1337 = vmatpush1.msra.mxu0 0.0
    %1338 = vmatprep.subr.mxu0 0.0
    %1339 = vmatpush1.msra.mxu0 0.0
    %1340 = vmatprep.subr.mxu0 0.0
    %1341 = vmatpush1.msra.mxu0 0.0
    %1342 = vmatprep.subr.mxu0 0.0
    %1343 = vmatpush1.msra.mxu0 0.0
    %1344 = vmatprep.subr.mxu0 0.0
    %1345 = vmatpush1.msra.mxu0 0.0
    %1346 = vmatprep.subr.mxu0 0.0
    %1347 = vmatpush1.msra.mxu0 0.0
    %1348 = vmatprep.subr.mxu0 0.0
    %1349 = vmatpush1.msra.mxu0 0.0
    %1350 = vmatprep.subr.mxu0 0.0
    %1351 = vmatpush1.msra.mxu0 0.0
    %1352 = vmatprep.subr.mxu0 0.0
    %1353 = vmatpush1.msra.mxu0 0.0
    %1354 = vmatprep.subr.mxu0 0.0
    %1355 = vmatpush1.msra.mxu0 %v1319
    %1356 = vmatprep.subr.mxu0 0.0
    %1357 = vmatpush2.msra.mxu0 0.0
    %1358 = vmatprep.subr.mxu0 0.0
    %1359 = vmatpush2.msra.mxu0 0.0
    %1360 = vmatprep.subr.mxu0 0.0
    %1361 = vmatpush2.msra.mxu0 0.0
    %1362 = vmatprep.subr.mxu0 0.0
    %1363 = vmatpush2.msra.mxu0 0.0
    %1364 = vmatprep.subr.mxu0 0.0
    %1365 = vmatpush2.msra.mxu0 0.0
    %1366 = vmatprep.subr.mxu0 0.0
    %1367 = vmatpush2.msra.mxu0 0.0
    %1368 = vmatprep.subr.mxu0 0.0
    %1369 = vmatpush2.msra.mxu0 0.0
    %1370 = vmatprep.subr.mxu0 0.0
    %1371 = vmatpush2.msra.mxu0 0.0
    %1372 = vmatprep.subr.mxu0 0.0
    %1373 = vmatpush2.msra.mxu0 0.0
    %1374 = vmatprep.subr.mxu0 0.0
    %1375 = vmatpush2.msra.mxu0 0.0
    %1376 = vmatprep.subr.mxu0 0.0
    %1377 = vmatpush2.msra.mxu0 0.0
    %1378 = vmatprep.subr.mxu0 0.0
    %1379 = vmatpush2.msra.mxu0 0.0
    %1380 = vmatprep.subr.mxu0 0.0
    %1381 = vmatpush2.msra.mxu0 0.0
    %1382 = vmatprep.subr.mxu0 0.0
    %1383 = vmatpush2.msra.mxu0 0.0
    %1384 = vmatprep.subr.mxu0 0.0
    %1385 = vmatpush2.msra.mxu0 0.0
    %1386 = vmatprep.subr.mxu0 0.0
    %1387 = vmatpush2.msra.mxu0 0.0
    %1388 = vmatprep.mubr.f32.mxu0 0.0
    %1389 = vmatmul.mubr.f32.gmra.mxu0 %v1322
    %v1390 = vpop.f32.mrf.mxu0
    %v1391 = vadd.f32 0.0, %v1390
    %v1392 = vpop.f32.mrf.mxu0
    %1393 = vdwg.mxu0
    %1394 = vrot.lane.b32.xlu0 %v226, 64
    %v1395 = vpop.permute.xlu0 %1394
    %v1398 = vsel %vm243, %v936, 0
    %1400 = vmatprep.subr.mxu0 0.0
    %1401 = vmatpush1.msra.mxu0 0.0
    %1402 = vmatprep.subr.mxu0 0.0
    %1403 = vmatpush1.msra.mxu0 0.0
    %1404 = vmatprep.subr.mxu0 0.0
    %1405 = vmatpush1.msra.mxu0 0.0
    %1406 = vmatprep.subr.mxu0 0.0
    %1407 = vmatpush1.msra.mxu0 0.0
    %1408 = vmatprep.subr.mxu0 0.0
    %1409 = vmatpush1.msra.mxu0 0.0
    %1410 = vmatprep.subr.mxu0 0.0
    %1411 = vmatpush1.msra.mxu0 0.0
    %1412 = vmatprep.subr.mxu0 0.0
    %1413 = vmatpush1.msra.mxu0 0.0
    %1414 = vmatprep.subr.mxu0 0.0
    %1415 = vmatpush1.msra.mxu0 0.0
    %1416 = vmatprep.subr.mxu0 0.0
    %1417 = vmatpush1.msra.mxu0 0.0
    %1418 = vmatprep.subr.mxu0 0.0
    %1419 = vmatpush1.msra.mxu0 0.0
    %1420 = vmatprep.subr.mxu0 0.0
    %1421 = vmatpush1.msra.mxu0 0.0
    %1422 = vmatprep.subr.mxu0 0.0
    %1423 = vmatpush1.msra.mxu0 0.0
    %1424 = vmatprep.subr.mxu0 0.0
    %1425 = vmatpush1.msra.mxu0 0.0
    %1426 = vmatprep.subr.mxu0 0.0
    %1427 = vmatpush1.msra.mxu0 0.0
    %1428 = vmatprep.subr.mxu0 0.0
    %1429 = vmatpush1.msra.mxu0 0.0
    %1430 = vmatprep.subr.mxu0 0.0
    %1431 = vmatpush1.msra.mxu0 %v1395
    %1432 = vmatprep.subr.mxu0 0.0
    %1433 = vmatpush2.msra.mxu0 0.0
    %1434 = vmatprep.subr.mxu0 0.0
    %1435 = vmatpush2.msra.mxu0 0.0
    %1436 = vmatprep.subr.mxu0 0.0
    %1437 = vmatpush2.msra.mxu0 0.0
    %1438 = vmatprep.subr.mxu0 0.0
    %1439 = vmatpush2.msra.mxu0 0.0
    %1440 = vmatprep.subr.mxu0 0.0
    %1441 = vmatpush2.msra.mxu0 0.0
    %1442 = vmatprep.subr.mxu0 0.0
    %1443 = vmatpush2.msra.mxu0 0.0
    %1444 = vmatprep.subr.mxu0 0.0
    %1445 = vmatpush2.msra.mxu0 0.0
    %1446 = vmatprep.subr.mxu0 0.0
    %1447 = vmatpush2.msra.mxu0 0.0
    %1448 = vmatprep.subr.mxu0 0.0
    %1449 = vmatpush2.msra.mxu0 0.0
    %1450 = vmatprep.subr.mxu0 0.0
    %1451 = vmatpush2.msra.mxu0 0.0
    %1452 = vmatprep.subr.mxu0 0.0
    %1453 = vmatpush2.msra.mxu0 0.0
    %1454 = vmatprep.subr.mxu0 0.0
    %1455 = vmatpush2.msra.mxu0 0.0
    %1456 = vmatprep.subr.mxu0 0.0
    %1457 = vmatpush2.msra.mxu0 0.0
    %1458 = vmatprep.subr.mxu0 0.0
    %1459 = vmatpush2.msra.mxu0 0.0
    %1460 = vmatprep.subr.mxu0 0.0
    %1461 = vmatpush2.msra.mxu0 0.0
    %1462 = vmatprep.subr.mxu0 0.0
    %1463 = vmatpush2.msra.mxu0 0.0
    %1464 = vmatprep.mubr.f32.mxu0 0.0
    %1465 = vmatmul.mubr.f32.gmra.mxu0 %v1398
    %v1466 = vpop.f32.mrf.mxu0
    %v1467 = vadd.f32 0.0, %v1466
    %v1468 = vpop.f32.mrf.mxu0
    %1469 = vdwg.mxu0
    %1470 = vrot.lane.b32.xlu0 %v228, 64
    %v1471 = vpop.permute.xlu0 %1470
    %v1474 = vsel %vm243, %v937, 0
    %1476 = vmatprep.subr.mxu0 0.0
    %1477 = vmatpush1.msra.mxu0 0.0
    %1478 = vmatprep.subr.mxu0 0.0
    %1479 = vmatpush1.msra.mxu0 0.0
    %1480 = vmatprep.subr.mxu0 0.0
    %1481 = vmatpush1.msra.mxu0 0.0
    %1482 = vmatprep.subr.mxu0 0.0
    %1483 = vmatpush1.msra.mxu0 0.0
    %1484 = vmatprep.subr.mxu0 0.0
    %1485 = vmatpush1.msra.mxu0 0.0
    %1486 = vmatprep.subr.mxu0 0.0
    %1487 = vmatpush1.msra.mxu0 0.0
    %1488 = vmatprep.subr.mxu0 0.0
    %1489 = vmatpush1.msra.mxu0 0.0
    %1490 = vmatprep.subr.mxu0 0.0
    %1491 = vmatpush1.msra.mxu0 0.0
    %1492 = vmatprep.subr.mxu0 0.0
    %1493 = vmatpush1.msra.mxu0 0.0
    %1494 = vmatprep.subr.mxu0 0.0
    %1495 = vmatpush1.msra.mxu0 0.0
    %1496 = vmatprep.subr.mxu0 0.0
    %1497 = vmatpush1.msra.mxu0 0.0
    %1498 = vmatprep.subr.mxu0 0.0
    %1499 = vmatpush1.msra.mxu0 0.0
    %1500 = vmatprep.subr.mxu0 0.0
    %1501 = vmatpush1.msra.mxu0 0.0
    %1502 = vmatprep.subr.mxu0 0.0
    %1503 = vmatpush1.msra.mxu0 0.0
    %1504 = vmatprep.subr.mxu0 0.0
    %1505 = vmatpush1.msra.mxu0 0.0
    %1506 = vmatprep.subr.mxu0 0.0
    %1507 = vmatpush1.msra.mxu0 %v1471
    %1508 = vmatprep.subr.mxu0 0.0
    %1509 = vmatpush2.msra.mxu0 0.0
    %1510 = vmatprep.subr.mxu0 0.0
    %1511 = vmatpush2.msra.mxu0 0.0
    %1512 = vmatprep.subr.mxu0 0.0
    %1513 = vmatpush2.msra.mxu0 0.0
    %1514 = vmatprep.subr.mxu0 0.0
    %1515 = vmatpush2.msra.mxu0 0.0
    %1516 = vmatprep.subr.mxu0 0.0
    %1517 = vmatpush2.msra.mxu0 0.0
    %1518 = vmatprep.subr.mxu0 0.0
    %1519 = vmatpush2.msra.mxu0 0.0
    %1520 = vmatprep.subr.mxu0 0.0
    %1521 = vmatpush2.msra.mxu0 0.0
    %1522 = vmatprep.subr.mxu0 0.0
    %1523 = vmatpush2.msra.mxu0 0.0
    %1524 = vmatprep.subr.mxu0 0.0
    %1525 = vmatpush2.msra.mxu0 0.0
    %1526 = vmatprep.subr.mxu0 0.0
    %1527 = vmatpush2.msra.mxu0 0.0
    %1528 = vmatprep.subr.mxu0 0.0
    %1529 = vmatpush2.msra.mxu0 0.0
    %1530 = vmatprep.subr.mxu0 0.0
    %1531 = vmatpush2.msra.mxu0 0.0
    %1532 = vmatprep.subr.mxu0 0.0
    %1533 = vmatpush2.msra.mxu0 0.0
    %1534 = vmatprep.subr.mxu0 0.0
    %1535 = vmatpush2.msra.mxu0 0.0
    %1536 = vmatprep.subr.mxu0 0.0
    %1537 = vmatpush2.msra.mxu0 0.0
    %1538 = vmatprep.subr.mxu0 0.0
    %1539 = vmatpush2.msra.mxu0 0.0
    %1540 = vmatprep.mubr.f32.mxu0 0.0
    %1541 = vmatmul.mubr.f32.gmra.mxu0 %v1474
    %v1542 = vpop.f32.mrf.mxu0
    %v1543 = vadd.f32 0.0, %v1542
    %v1544 = vpop.f32.mrf.mxu0
    %1545 = vdwg.mxu0
    %1548 = vrot.lane.b32.xlu0 %v1163, 8
    %v1549 = vpop.permute.xlu0 %1548
    %1550 = vrot.lane.b32.xlu0 %v1239, 8
    %v1551 = vpop.permute.xlu0 %1550
    %1556 = vrot.lane.b32.xlu0 %v1315, 16
    %v1557 = vpop.permute.xlu0 %1556
    %1558 = vrot.lane.b32.xlu0 %v1391, 16
    %v1559 = vpop.permute.xlu0 %1558
    %1564 = vrot.lane.b32.xlu0 %v1467, 24
    %v1565 = vpop.permute.xlu0 %1564
    %1566 = vrot.lane.b32.xlu0 %v1543, 24
    %v1567 = vpop.permute.xlu0 %1566
    %v1570 = vsel %vm243, %v1011, %v1549
    %v1571 = vsel %vm243, %v1087, %v1551
    %vm1572 = vcmask 130048
    %v1573 = vsel %vm1572, %v1570, %v1557
    %v1574 = vsel %vm1572, %v1571, %v1559
    %vm1575 = vcmask 195584
    %v1576 = vsel %vm1575, %v1573, %v1565
    %v1577 = vsel %vm1575, %v1574, %v1567
    %v1578 = vld [vmem:[%s4] sm:$0xff]
    %v1579 = vld [vmem:[%s4 + $0x8] sm:$0xff]
    %v1580 = vld [vmem:[%s4 + $0x10] sm:$0xff]
    %v1581 = vld [vmem:[%s4 + $0x18] sm:$0xff]
    %v1582 = vlaneseq
    %v1583 = vshrl.u32 %v1582, 7
    %v1584 = vsub.s32 2, %v1583
    %v1585 = vrot.slane %v109, %v1584
    %v1587 = vsel %vm40, %v1576, 0
    %v1590 = vsel %vm40, %v1577, 0
    %1592 = vmatprep.subr.mxu0 0.0
    %1593 = vmatpush1.msra.mxu0 0.0
    %1594 = vmatprep.subr.mxu0 0.0
    %1595 = vmatpush1.msra.mxu0 0.0
    %1596 = vmatprep.subr.mxu0 0.0
    %1597 = vmatpush1.msra.mxu0 0.0
    %1598 = vmatprep.subr.mxu0 0.0
    %1599 = vmatpush1.msra.mxu0 0.0
    %1600 = vmatprep.subr.mxu0 0.0
    %1601 = vmatpush1.msra.mxu0 0.0
    %1602 = vmatprep.subr.mxu0 0.0
    %1603 = vmatpush1.msra.mxu0 0.0
    %1604 = vmatprep.subr.mxu0 0.0
    %1605 = vmatpush1.msra.mxu0 0.0
    %1606 = vmatprep.subr.mxu0 0.0
    %1607 = vmatpush1.msra.mxu0 0.0
    %1608 = vmatprep.subr.mxu0 0.0
    %1609 = vmatpush1.msra.mxu0 0.0
    %1610 = vmatprep.subr.mxu0 0.0
    %1611 = vmatpush1.msra.mxu0 0.0
    %1612 = vmatprep.subr.mxu0 0.0
    %1613 = vmatpush1.msra.mxu0 0.0
    %1614 = vmatprep.subr.mxu0 0.0
    %1615 = vmatpush1.msra.mxu0 0.0
    %1616 = vmatprep.subr.mxu0 0.0
    %1617 = vmatpush1.msra.mxu0 %v1581
    %1618 = vmatprep.subr.mxu0 0.0
    %1619 = vmatpush1.msra.mxu0 %v1580
    %1620 = vmatprep.subr.mxu0 0.0
    %1621 = vmatpush1.msra.mxu0 %v1579
    %1622 = vmatprep.subr.mxu0 0.0
    %1623 = vmatpush1.msra.mxu0 %v1578
    %1624 = vmatprep.subr.mxu0 0.0
    %1625 = vmatpush2.msra.mxu0 0.0
    %1626 = vmatprep.subr.mxu0 0.0
    %1627 = vmatpush2.msra.mxu0 0.0
    %1628 = vmatprep.subr.mxu0 0.0
    %1629 = vmatpush2.msra.mxu0 0.0
    %1630 = vmatprep.subr.mxu0 0.0
    %1631 = vmatpush2.msra.mxu0 0.0
    %1632 = vmatprep.subr.mxu0 0.0
    %1633 = vmatpush2.msra.mxu0 0.0
    %1634 = vmatprep.subr.mxu0 0.0
    %1635 = vmatpush2.msra.mxu0 0.0
    %1636 = vmatprep.subr.mxu0 0.0
    %1637 = vmatpush2.msra.mxu0 0.0
    %1638 = vmatprep.subr.mxu0 0.0
    %1639 = vmatpush2.msra.mxu0 0.0
    %1640 = vmatprep.subr.mxu0 0.0
    %1641 = vmatpush2.msra.mxu0 0.0
    %1642 = vmatprep.subr.mxu0 0.0
    %1643 = vmatpush2.msra.mxu0 0.0
    %1644 = vmatprep.subr.mxu0 0.0
    %1645 = vmatpush2.msra.mxu0 0.0
    %1646 = vmatprep.subr.mxu0 0.0
    %1647 = vmatpush2.msra.mxu0 0.0
    %1648 = vmatprep.subr.mxu0 0.0
    %1649 = vmatpush2.msra.mxu0 0.0
    %1650 = vmatprep.subr.mxu0 0.0
    %1651 = vmatpush2.msra.mxu0 0.0
    %1652 = vmatprep.subr.mxu0 0.0
    %1653 = vmatpush2.msra.mxu0 0.0
    %1654 = vmatprep.subr.mxu0 0.0
    %1655 = vmatpush2.msra.mxu0 0.0
    %1656 = vmatprep.mubr.f32.mxu0 0.0
    %1657 = vmatmul.mubr.f32.gmra.mxu0 %v1587
    %v1658 = vpop.f32.mrf.mxu0
    %v1659 = vadd.f32 %v1585, %v1658
    %v1660 = vpop.f32.mrf.mxu0
    %1661 = vmatprep.mubr.f32.mxu0 0.0
    %1662 = vmatmul.mubr.f32.gmra.mxu0 %v1590
    %v1663 = vpop.f32.mrf.mxu0
    %v1664 = vadd.f32 %v1585, %v1663
    %v1665 = vpop.f32.mrf.mxu0
    %1666 = vdwg.mxu0
    %v1667 = vadd.f32 %v78, %v1659
    %v1668 = vadd.f32 %v79, %v1664
    %v1669 = vsel %vm40, %v1667, 0.0
    %1670 = vadd.xlane.f32.xlu0 %v1669
    %v1671 = vpop.xlane.xlu0 %1670
    %v1672 = vsel %vm40, %v1668, 0.0
    %1673 = vadd.xlane.f32.xlu0 %v1672
    %v1674 = vpop.xlane.xlu0 %1673
    %v1675 = vmul.f32 %v1671, %v47
    %v1676 = vmul.f32 %v1674, %v47
    %v1677 = vsub.f32 %v1667, %v1675
    %v1678 = vsub.f32 %v1668, %v1676
    %v1679 = vmul.f32 %v1677, %v1677
    %v1680 = vmul.f32 %v1678, %v1678
    %v1681 = vsel %vm40, %v1679, 0.0
    %1682 = vadd.xlane.f32.xlu0 %v1681
    %v1683 = vpop.xlane.xlu0 %1682
    %v1684 = vsel %vm40, %v1680, 0.0
    %1685 = vadd.xlane.f32.xlu0 %v1684
    %v1686 = vpop.xlane.xlu0 %1685
    %v1687 = vmul.f32 %v1683, %v47
    %v1688 = vmul.f32 %v1686, %v47
    %v1689 = vadd.f32 %v1687, 1e-12
    %v1690 = vadd.f32 %v1688, 1e-12
    %v1691 = vrsqrt.pop %v1689
    %v1692 = vrsqrt.pop %v1690
    %v1693 = vmul.f32 %v1677, %v1691
    %v1694 = vmul.f32 %v1678, %v1692
    %v1695 = vlaneseq
    %v1696 = vshrl.u32 %v1695, 7
    %v1697 = vsub.s32 3, %v1696
    %v1698 = vrot.slane %v109, %v1697
    %v1699 = vmul.f32 %v1693, %v1698
    %v1700 = vmul.f32 %v1694, %v1698
    %v1701 = vlaneseq
    %v1702 = vshrl.u32 %v1701, 7
    %v1703 = vsub.s32 4, %v1702
    %v1704 = vrot.slane %v109, %v1703
    %v1705 = vadd.f32 %v1699, %v1704
    %v1706 = vadd.f32 %v1700, %v1704
    %v1707 = vld [vmem:[%s5] sm:$0xff]
    %v1708 = vld [vmem:[%s5 + $0x8] sm:$0xff]
    %v1709 = vld [vmem:[%s5 + $0x10] sm:$0xff]
    %v1710 = vld [vmem:[%s5 + $0x18] sm:$0xff]
    %v1711 = vlaneseq
    %v1712 = vshrl.u32 %v1711, 7
    %v1713 = vsub.s32 1, %v1712
    %v1714 = vrot.slane %v109, %v1713
    %v1716 = vsel %vm40, %v1705, 0
    %v1719 = vsel %vm40, %v1706, 0
    %1721 = vmatprep.subr.mxu0 0.0
    %1722 = vmatpush1.msra.mxu0 0.0
    %1723 = vmatprep.subr.mxu0 0.0
    %1724 = vmatpush1.msra.mxu0 0.0
    %1725 = vmatprep.subr.mxu0 0.0
    %1726 = vmatpush1.msra.mxu0 0.0
    %1727 = vmatprep.subr.mxu0 0.0
    %1728 = vmatpush1.msra.mxu0 0.0
    %1729 = vmatprep.subr.mxu0 0.0
    %1730 = vmatpush1.msra.mxu0 0.0
    %1731 = vmatprep.subr.mxu0 0.0
    %1732 = vmatpush1.msra.mxu0 0.0
    %1733 = vmatprep.subr.mxu0 0.0
    %1734 = vmatpush1.msra.mxu0 0.0
    %1735 = vmatprep.subr.mxu0 0.0
    %1736 = vmatpush1.msra.mxu0 0.0
    %1737 = vmatprep.subr.mxu0 0.0
    %1738 = vmatpush1.msra.mxu0 0.0
    %1739 = vmatprep.subr.mxu0 0.0
    %1740 = vmatpush1.msra.mxu0 0.0
    %1741 = vmatprep.subr.mxu0 0.0
    %1742 = vmatpush1.msra.mxu0 0.0
    %1743 = vmatprep.subr.mxu0 0.0
    %1744 = vmatpush1.msra.mxu0 0.0
    %1745 = vmatprep.subr.mxu0 0.0
    %1746 = vmatpush1.msra.mxu0 %v1710
    %1747 = vmatprep.subr.mxu0 0.0
    %1748 = vmatpush1.msra.mxu0 %v1709
    %1749 = vmatprep.subr.mxu0 0.0
    %1750 = vmatpush1.msra.mxu0 %v1708
    %1751 = vmatprep.subr.mxu0 0.0
    %1752 = vmatpush1.msra.mxu0 %v1707
    %1753 = vmatprep.subr.mxu0 0.0
    %1754 = vmatpush2.msra.mxu0 0.0
    %1755 = vmatprep.subr.mxu0 0.0
    %1756 = vmatpush2.msra.mxu0 0.0
    %1757 = vmatprep.subr.mxu0 0.0
    %1758 = vmatpush2.msra.mxu0 0.0
    %1759 = vmatprep.subr.mxu0 0.0
    %1760 = vmatpush2.msra.mxu0 0.0
    %1761 = vmatprep.subr.mxu0 0.0
    %1762 = vmatpush2.msra.mxu0 0.0
    %1763 = vmatprep.subr.mxu0 0.0
    %1764 = vmatpush2.msra.mxu0 0.0
    %1765 = vmatprep.subr.mxu0 0.0
    %1766 = vmatpush2.msra.mxu0 0.0
    %1767 = vmatprep.subr.mxu0 0.0
    %1768 = vmatpush2.msra.mxu0 0.0
    %1769 = vmatprep.subr.mxu0 0.0
    %1770 = vmatpush2.msra.mxu0 0.0
    %1771 = vmatprep.subr.mxu0 0.0
    %1772 = vmatpush2.msra.mxu0 0.0
    %1773 = vmatprep.subr.mxu0 0.0
    %1774 = vmatpush2.msra.mxu0 0.0
    %1775 = vmatprep.subr.mxu0 0.0
    %1776 = vmatpush2.msra.mxu0 0.0
    %1777 = vmatprep.subr.mxu0 0.0
    %1778 = vmatpush2.msra.mxu0 0.0
    %1779 = vmatprep.subr.mxu0 0.0
    %1780 = vmatpush2.msra.mxu0 0.0
    %1781 = vmatprep.subr.mxu0 0.0
    %1782 = vmatpush2.msra.mxu0 0.0
    %1783 = vmatprep.subr.mxu0 0.0
    %1784 = vmatpush2.msra.mxu0 0.0
    %1785 = vmatprep.mubr.f32.mxu0 0.0
    %1786 = vmatmul.mubr.f32.gmra.mxu0 %v1716
    %v1787 = vpop.f32.mrf.mxu0
    %v1788 = vadd.f32 %v1714, %v1787
    %v1789 = vpop.f32.mrf.mxu0
    %1790 = vmatprep.mubr.f32.mxu0 0.0
    %1791 = vmatmul.mubr.f32.gmra.mxu0 %v1719
    %v1792 = vpop.f32.mrf.mxu0
    %v1793 = vadd.f32 %v1714, %v1792
    %v1794 = vpop.f32.mrf.mxu0
    %1795 = vdwg.mxu0
    %v1796 = vmul.f32 %v1788, 0.5
    %v1797 = vmul.f32 %v1793, 0.5
    %v1798 = vmul.f32 %v1788, 0.044715
    %v1799 = vmul.f32 %v1793, 0.044715
    %v1800 = vmul.f32 %v1798, %v1788
    %v1801 = vmul.f32 %v1799, %v1793
    %v1802 = vmul.f32 %v1800, %v1788
    %v1803 = vmul.f32 %v1801, %v1793
    %v1804 = vadd.f32 %v1788, %v1802
    %v1805 = vadd.f32 %v1793, %v1803
    %v1806 = vmul.f32 %v1804, 0.7978846
    %v1807 = vmul.f32 %v1805, 0.7978846
    %v1808 = vtanh.pop %v1806
    %v1809 = vtanh.pop %v1807
    %v1810 = vadd.f32 %v1808, 1.0
    %v1811 = vadd.f32 %v1809, 1.0
    %v1812 = vmul.f32 %v1796, %v1810
    %v1813 = vmul.f32 %v1797, %v1811
    %v1814 = vld [vmem:[%s6] sm:$0xff]
    %v1815 = vld [vmem:[%s6 + $0x8] sm:$0xff]
    %v1816 = vld [vmem:[%s6 + $0x10] sm:$0xff]
    %v1817 = vld [vmem:[%s6 + $0x18] sm:$0xff]
    %v1818 = vld [vmem:[%s6 + $0x20] sm:$0xff]
    %v1819 = vld [vmem:[%s6 + $0x28] sm:$0xff]
    %v1820 = vld [vmem:[%s6 + $0x30] sm:$0xff]
    %v1821 = vld [vmem:[%s6 + $0x38] sm:$0xff]
    %v1822 = vlaneseq
    %v1823 = vshrl.u32 %v1822, 7
    %v1824 = vsub.s32 5, %v1823
    %v1825 = vrot.slane %v109, %v1824
    %vm1826 = vcmask 523264
    %v1828 = vsel %vm1826, %v1812, 0
    %v1831 = vsel %vm1826, %v1813, 0
    %1833 = vmatprep.subr.mxu0 0.0
    %1834 = vmatpush1.msra.mxu0 0.0
    %1835 = vmatprep.subr.mxu0 0.0
    %1836 = vmatpush1.msra.mxu0 0.0
    %1837 = vmatprep.subr.mxu0 0.0
    %1838 = vmatpush1.msra.mxu0 0.0
    %1839 = vmatprep.subr.mxu0 0.0
    %1840 = vmatpush1.msra.mxu0 0.0
    %1841 = vmatprep.subr.mxu0 0.0
    %1842 = vmatpush1.msra.mxu0 0.0
    %1843 = vmatprep.subr.mxu0 0.0
    %1844 = vmatpush1.msra.mxu0 0.0
    %1845 = vmatprep.subr.mxu0 0.0
    %1846 = vmatpush1.msra.mxu0 0.0
    %1847 = vmatprep.subr.mxu0 0.0
    %1848 = vmatpush1.msra.mxu0 0.0
    %1849 = vmatprep.subr.mxu0 0.0
    %1850 = vmatpush1.msra.mxu0 %v1821
    %1851 = vmatprep.subr.mxu0 0.0
    %1852 = vmatpush1.msra.mxu0 %v1820
    %1853 = vmatprep.subr.mxu0 0.0
    %1854 = vmatpush1.msra.mxu0 %v1819
    %1855 = vmatprep.subr.mxu0 0.0
    %1856 = vmatpush1.msra.mxu0 %v1818
    %1857 = vmatprep.subr.mxu0 0.0
    %1858 = vmatpush1.msra.mxu0 %v1817
    %1859 = vmatprep.subr.mxu0 0.0
    %1860 = vmatpush1.msra.mxu0 %v1816
    %1861 = vmatprep.subr.mxu0 0.0
    %1862 = vmatpush1.msra.mxu0 %v1815
    %1863 = vmatprep.subr.mxu0 0.0
    %1864 = vmatpush1.msra.mxu0 %v1814
    %1865 = vmatprep.subr.mxu0 0.0
    %1866 = vmatpush2.msra.mxu0 0.0
    %1867 = vmatprep.subr.mxu0 0.0
    %1868 = vmatpush2.msra.mxu0 0.0
    %1869 = vmatprep.subr.mxu0 0.0
    %1870 = vmatpush2.msra.mxu0 0.0
    %1871 = vmatprep.subr.mxu0 0.0
    %1872 = vmatpush2.msra.mxu0 0.0
    %1873 = vmatprep.subr.mxu0 0.0
    %1874 = vmatpush2.msra.mxu0 0.0
    %1875 = vmatprep.subr.mxu0 0.0
    %1876 = vmatpush2.msra.mxu0 0.0
    %1877 = vmatprep.subr.mxu0 0.0
    %1878 = vmatpush2.msra.mxu0 0.0
    %1879 = vmatprep.subr.mxu0 0.0
    %1880 = vmatpush2.msra.mxu0 0.0
    %1881 = vmatprep.subr.mxu0 0.0
    %1882 = vmatpush2.msra.mxu0 0.0
    %1883 = vmatprep.subr.mxu0 0.0
    %1884 = vmatpush2.msra.mxu0 0.0
    %1885 = vmatprep.subr.mxu0 0.0
    %1886 = vmatpush2.msra.mxu0 0.0
    %1887 = vmatprep.subr.mxu0 0.0
    %1888 = vmatpush2.msra.mxu0 0.0
    %1889 = vmatprep.subr.mxu0 0.0
    %1890 = vmatpush2.msra.mxu0 0.0
    %1891 = vmatprep.subr.mxu0 0.0
    %1892 = vmatpush2.msra.mxu0 0.0
    %1893 = vmatprep.subr.mxu0 0.0
    %1894 = vmatpush2.msra.mxu0 0.0
    %1895 = vmatprep.subr.mxu0 0.0
    %1896 = vmatpush2.msra.mxu0 0.0
    %1897 = vmatprep.mubr.f32.mxu0 0.0
    %1898 = vmatmul.mubr.f32.gmra.mxu0 %v1828
    %v1899 = vpop.f32.mrf.mxu0
    %v1900 = vadd.f32 %v1825, %v1899
    %v1901 = vpop.f32.mrf.mxu0
    %1902 = vmatprep.mubr.f32.mxu0 0.0
    %1903 = vmatmul.mubr.f32.gmra.mxu0 %v1831
    %v1904 = vpop.f32.mrf.mxu0
    %v1905 = vadd.f32 %v1825, %v1904
    %v1906 = vpop.f32.mrf.mxu0
    %1907 = vdwg.mxu0
    %v1908 = vadd.f32 %v1705, %v1900
    %v1909 = vadd.f32 %v1706, %v1905
    %v1910 = vsel %vm40, %v1908, 0.0
    %1911 = vadd.xlane.f32.xlu0 %v1910
    %v1912 = vpop.xlane.xlu0 %1911
    %v1913 = vsel %vm40, %v1909, 0.0
    %1914 = vadd.xlane.f32.xlu0 %v1913
    %v1915 = vpop.xlane.xlu0 %1914
    %v1916 = vmul.f32 %v1912, %v47
    %v1917 = vmul.f32 %v1915, %v47
    %v1918 = vsub.f32 %v1908, %v1916
    %v1919 = vsub.f32 %v1909, %v1917
    %v1920 = vmul.f32 %v1918, %v1918
    %v1921 = vmul.f32 %v1919, %v1919
    %v1922 = vsel %vm40, %v1920, 0.0
    %1923 = vadd.xlane.f32.xlu0 %v1922
    %v1924 = vpop.xlane.xlu0 %1923
    %v1925 = vsel %vm40, %v1921, 0.0
    %1926 = vadd.xlane.f32.xlu0 %v1925
    %v1927 = vpop.xlane.xlu0 %1926
    %v1928 = vmul.f32 %v1924, %v47
    %v1929 = vmul.f32 %v1927, %v47
    %v1930 = vadd.f32 %v1928, 1e-12
    %v1931 = vadd.f32 %v1929, 1e-12
    %v1932 = vrsqrt.pop %v1930
    %v1933 = vrsqrt.pop %v1931
    %v1934 = vmul.f32 %v1918, %v1932
    %v1935 = vmul.f32 %v1919, %v1933
    %v1936 = vlaneseq
    %v1937 = vshrl.u32 %v1936, 7
    %v1938 = vsub.s32 6, %v1937
    %v1939 = vrot.slane %v109, %v1938
    %v1940 = vmul.f32 %v1934, %v1939
    %v1941 = vmul.f32 %v1935, %v1939
    %v1942 = vlaneseq
    %v1943 = vshrl.u32 %v1942, 7
    %v1944 = vsub.s32 7, %v1943
    %v1945 = vrot.slane %v109, %v1944
    %v1946 = vadd.f32 %v1940, %v1945
    %v1947 = vadd.f32 %v1941, %v1945
    %s1948 = scalar_lea.vmem %s7, 8
    %v1949 = vld [vmem:[%s1948] sm:$0xff]
    %s1950 = scalar_lea.vmem %s3, 32
    %v1951 = vld [vmem:[%s1950] sm:$0xff]
    %v1952 = vld [vmem:[%s1950 + $0x8] sm:$0xff]
    %v1953 = vld [vmem:[%s1950 + $0x10] sm:$0xff]
    %v1954 = vld [vmem:[%s1950 + $0x18] sm:$0xff]
    %v1955 = vlaneseq
    %v1956 = vshrl.u32 %v1955, 7
    %v1957 = vsub.s32 0, %v1956
    %v1958 = vrot.slane %v1949, %v1957
    %v1960 = vsel %vm40, %v1946, 0
    %v1963 = vsel %vm40, %v1947, 0
    %1965 = vmatprep.subr.mxu0 0.0
    %1966 = vmatpush1.msra.mxu0 0.0
    %1967 = vmatprep.subr.mxu0 0.0
    %1968 = vmatpush1.msra.mxu0 0.0
    %1969 = vmatprep.subr.mxu0 0.0
    %1970 = vmatpush1.msra.mxu0 0.0
    %1971 = vmatprep.subr.mxu0 0.0
    %1972 = vmatpush1.msra.mxu0 0.0
    %1973 = vmatprep.subr.mxu0 0.0
    %1974 = vmatpush1.msra.mxu0 0.0
    %1975 = vmatprep.subr.mxu0 0.0
    %1976 = vmatpush1.msra.mxu0 0.0
    %1977 = vmatprep.subr.mxu0 0.0
    %1978 = vmatpush1.msra.mxu0 0.0
    %1979 = vmatprep.subr.mxu0 0.0
    %1980 = vmatpush1.msra.mxu0 0.0
    %1981 = vmatprep.subr.mxu0 0.0
    %1982 = vmatpush1.msra.mxu0 0.0
    %1983 = vmatprep.subr.mxu0 0.0
    %1984 = vmatpush1.msra.mxu0 0.0
    %1985 = vmatprep.subr.mxu0 0.0
    %1986 = vmatpush1.msra.mxu0 0.0
    %1987 = vmatprep.subr.mxu0 0.0
    %1988 = vmatpush1.msra.mxu0 0.0
    %1989 = vmatprep.subr.mxu0 0.0
    %1990 = vmatpush1.msra.mxu0 %v1954
    %1991 = vmatprep.subr.mxu0 0.0
    %1992 = vmatpush1.msra.mxu0 %v1953
    %1993 = vmatprep.subr.mxu0 0.0
    %1994 = vmatpush1.msra.mxu0 %v1952
    %1995 = vmatprep.subr.mxu0 0.0
    %1996 = vmatpush1.msra.mxu0 %v1951
    %1997 = vmatprep.subr.mxu0 0.0
    %1998 = vmatpush2.msra.mxu0 0.0
    %1999 = vmatprep.subr.mxu0 0.0
    %2000 = vmatpush2.msra.mxu0 0.0
    %2001 = vmatprep.subr.mxu0 0.0
    %2002 = vmatpush2.msra.mxu0 0.0
    %2003 = vmatprep.subr.mxu0 0.0
    %2004 = vmatpush2.msra.mxu0 0.0
    %2005 = vmatprep.subr.mxu0 0.0
    %2006 = vmatpush2.msra.mxu0 0.0
    %2007 = vmatprep.subr.mxu0 0.0
    %2008 = vmatpush2.msra.mxu0 0.0
    %2009 = vmatprep.subr.mxu0 0.0
    %2010 = vmatpush2.msra.mxu0 0.0
    %2011 = vmatprep.subr.mxu0 0.0
    %2012 = vmatpush2.msra.mxu0 0.0
    %2013 = vmatprep.subr.mxu0 0.0
    %2014 = vmatpush2.msra.mxu0 0.0
    %2015 = vmatprep.subr.mxu0 0.0
    %2016 = vmatpush2.msra.mxu0 0.0
    %2017 = vmatprep.subr.mxu0 0.0
    %2018 = vmatpush2.msra.mxu0 0.0
    %2019 = vmatprep.subr.mxu0 0.0
    %2020 = vmatpush2.msra.mxu0 0.0
    %2021 = vmatprep.subr.mxu0 0.0
    %2022 = vmatpush2.msra.mxu0 0.0
    %2023 = vmatprep.subr.mxu0 0.0
    %2024 = vmatpush2.msra.mxu0 0.0
    %2025 = vmatprep.subr.mxu0 0.0
    %2026 = vmatpush2.msra.mxu0 0.0
    %2027 = vmatprep.subr.mxu0 0.0
    %2028 = vmatpush2.msra.mxu0 0.0
    %2029 = vmatprep.mubr.f32.mxu0 0.0
    %2030 = vmatmul.mubr.f32.gmra.mxu0 %v1960
    %v2031 = vpop.f32.mrf.mxu0
    %v2032 = vadd.f32 %v1958, %v2031
    %v2033 = vpop.f32.mrf.mxu0
    %2034 = vmatprep.mubr.f32.mxu0 0.0
    %2035 = vmatmul.mubr.f32.gmra.mxu0 %v1963
    %v2036 = vpop.f32.mrf.mxu0
    %v2037 = vadd.f32 %v1958, %v2036
    %v2038 = vpop.f32.mrf.mxu0
    %2039 = vdwg.mxu0
    %v2040 = vmul.f32 %v2032, 0.35355338
    %v2041 = vmul.f32 %v2037, 0.35355338
    %2044 = vrot.lane.b32.xlu0 %v2040, 120
    %v2045 = vpop.permute.xlu0 %2044
    %2046 = vrot.lane.b32.xlu0 %v2041, 120
    %v2047 = vpop.permute.xlu0 %2046
    %2048 = vrot.lane.b32.xlu0 %v2040, 112
    %v2049 = vpop.permute.xlu0 %2048
    %2050 = vrot.lane.b32.xlu0 %v2041, 112
    %v2051 = vpop.permute.xlu0 %2050
    %2052 = vrot.lane.b32.xlu0 %v2040, 104
    %v2053 = vpop.permute.xlu0 %2052
    %2054 = vrot.lane.b32.xlu0 %v2041, 104
    %v2055 = vpop.permute.xlu0 %2054
    %2058 = vrot.lane.b32.xlu0 %v2032, 120
    %v2059 = vpop.permute.xlu0 %2058
    %2060 = vrot.lane.b32.xlu0 %v2037, 120
    %v2061 = vpop.permute.xlu0 %2060
    %2062 = vrot.lane.b32.xlu0 %v2032, 112
    %v2063 = vpop.permute.xlu0 %2062
    %2064 = vrot.lane.b32.xlu0 %v2037, 112
    %v2065 = vpop.permute.xlu0 %2064
    %2066 = vrot.lane.b32.xlu0 %v2032, 104
    %v2067 = vpop.permute.xlu0 %2066
    %2068 = vrot.lane.b32.xlu0 %v2037, 104
    %v2069 = vpop.permute.xlu0 %2068
    %2070 = vrot.lane.b32.xlu0 %v2032, 96
    %v2071 = vpop.permute.xlu0 %2070
    %v2072 = vsel %vm243, %v2040, 0
    %v2074 = vsel %vm243, %v2071, 0
    %2076 = vmatprep.subr.mxu0 0.0
    %2077 = vmatpush1.xpose.msra.mxu0 0.0
    %2078 = vmatprep.subr.mxu0 0.0
    %2079 = vmatpush1.xpose.msra.mxu0 0.0
    %2080 = vmatprep.subr.mxu0 0.0
    %2081 = vmatpush1.xpose.msra.mxu0 0.0
    %2082 = vmatprep.subr.mxu0 0.0
    %2083 = vmatpush1.xpose.msra.mxu0 0.0
    %2084 = vmatprep.subr.mxu0 0.0
    %2085 = vmatpush1.xpose.msra.mxu0 0.0
    %2086 = vmatprep.subr.mxu0 0.0
    %2087 = vmatpush1.xpose.msra.mxu0 0.0
    %2088 = vmatprep.subr.mxu0 0.0
    %2089 = vmatpush1.xpose.msra.mxu0 0.0
    %2090 = vmatprep.subr.mxu0 0.0
    %2091 = vmatpush1.xpose.msra.mxu0 0.0
    %2092 = vmatprep.subr.mxu0 0.0
    %2093 = vmatpush1.xpose.msra.mxu0 0.0
    %2094 = vmatprep.subr.mxu0 0.0
    %2095 = vmatpush1.xpose.msra.mxu0 0.0
    %2096 = vmatprep.subr.mxu0 0.0
    %2097 = vmatpush1.xpose.msra.mxu0 0.0
    %2098 = vmatprep.subr.mxu0 0.0
    %2099 = vmatpush1.xpose.msra.mxu0 0.0
    %2100 = vmatprep.subr.mxu0 0.0
    %2101 = vmatpush1.xpose.msra.mxu0 0.0
    %2102 = vmatprep.subr.mxu0 0.0
    %2103 = vmatpush1.xpose.msra.mxu0 0.0
    %2104 = vmatprep.subr.mxu0 0.0
    %2105 = vmatpush1.xpose.msra.mxu0 0.0
    %2106 = vmatprep.subr.mxu0 0.0
    %2107 = vmatpush1.xpose.msra.mxu0 %v2074
    %2108 = vmatprep.subr.mxu0 0.0
    %2109 = vmatpush2.xpose.msra.mxu0 0.0
    %2110 = vmatprep.subr.mxu0 0.0
    %2111 = vmatpush2.xpose.msra.mxu0 0.0
    %2112 = vmatprep.subr.mxu0 0.0
    %2113 = vmatpush2.xpose.msra.mxu0 0.0
    %2114 = vmatprep.subr.mxu0 0.0
    %2115 = vmatpush2.xpose.msra.mxu0 0.0
    %2116 = vmatprep.subr.mxu0 0.0
    %2117 = vmatpush2.xpose.msra.mxu0 0.0
    %2118 = vmatprep.subr.mxu0 0.0
    %2119 = vmatpush2.xpose.msra.mxu0 0.0
    %2120 = vmatprep.subr.mxu0 0.0
    %2121 = vmatpush2.xpose.msra.mxu0 0.0
    %2122 = vmatprep.subr.mxu0 0.0
    %2123 = vmatpush2.xpose.msra.mxu0 0.0
    %2124 = vmatprep.subr.mxu0 0.0
    %2125 = vmatpush2.xpose.msra.mxu0 0.0
    %2126 = vmatprep.subr.mxu0 0.0
    %2127 = vmatpush2.xpose.msra.mxu0 0.0
    %2128 = vmatprep.subr.mxu0 0.0
    %2129 = vmatpush2.xpose.msra.mxu0 0.0
    %2130 = vmatprep.subr.mxu0 0.0
    %2131 = vmatpush2.xpose.msra.mxu0 0.0
    %2132 = vmatprep.subr.mxu0 0.0
    %2133 = vmatpush2.xpose.msra.mxu0 0.0
    %2134 = vmatprep.subr.mxu0 0.0
    %2135 = vmatpush2.xpose.msra.mxu0 0.0
    %2136 = vmatprep.subr.mxu0 0.0
    %2137 = vmatpush2.xpose.msra.mxu0 0.0
    %2138 = vmatprep.subr.mxu0 0.0
    %2139 = vmatpush2.xpose.msra.mxu0 0.0
    %2140 = vmatprep.mubr.f32.mxu0 0.0
    %2141 = vmatmul.mubr.f32.gmra.mxu0 %v2072
    %v2142 = vpop.f32.mrf.mxu0
    %v2143 = vadd.f32 %v234, %v2142
    %v2144 = vpop.f32.mrf.mxu0
    %2145 = vdwg.mxu0
    %2146 = vrot.lane.b32.xlu0 %v2037, 96
    %v2147 = vpop.permute.xlu0 %2146
    %v2148 = vsel %vm243, %v2041, 0
    %v2150 = vsel %vm243, %v2147, 0
    %2152 = vmatprep.subr.mxu0 0.0
    %2153 = vmatpush1.xpose.msra.mxu0 0.0
    %2154 = vmatprep.subr.mxu0 0.0
    %2155 = vmatpush1.xpose.msra.mxu0 0.0
    %2156 = vmatprep.subr.mxu0 0.0
    %2157 = vmatpush1.xpose.msra.mxu0 0.0
    %2158 = vmatprep.subr.mxu0 0.0
    %2159 = vmatpush1.xpose.msra.mxu0 0.0
    %2160 = vmatprep.subr.mxu0 0.0
    %2161 = vmatpush1.xpose.msra.mxu0 0.0
    %2162 = vmatprep.subr.mxu0 0.0
    %2163 = vmatpush1.xpose.msra.mxu0 0.0
    %2164 = vmatprep.subr.mxu0 0.0
    %2165 = vmatpush1.xpose.msra.mxu0 0.0
    %2166 = vmatprep.subr.mxu0 0.0
    %2167 = vmatpush1.xpose.msra.mxu0 0.0
    %2168 = vmatprep.subr.mxu0 0.0
    %2169 = vmatpush1.xpose.msra.mxu0 0.0
    %2170 = vmatprep.subr.mxu0 0.0
    %2171 = vmatpush1.xpose.msra.mxu0 0.0
    %2172 = vmatprep.subr.mxu0 0.0
    %2173 = vmatpush1.xpose.msra.mxu0 0.0
    %2174 = vmatprep.subr.mxu0 0.0
    %2175 = vmatpush1.xpose.msra.mxu0 0.0
    %2176 = vmatprep.subr.mxu0 0.0
    %2177 = vmatpush1.xpose.msra.mxu0 0.0
    %2178 = vmatprep.subr.mxu0 0.0
    %2179 = vmatpush1.xpose.msra.mxu0 0.0
    %2180 = vmatprep.subr.mxu0 0.0
    %2181 = vmatpush1.xpose.msra.mxu0 0.0
    %2182 = vmatprep.subr.mxu0 0.0
    %2183 = vmatpush1.xpose.msra.mxu0 %v2150
    %2184 = vmatprep.subr.mxu0 0.0
    %2185 = vmatpush2.xpose.msra.mxu0 0.0
    %2186 = vmatprep.subr.mxu0 0.0
    %2187 = vmatpush2.xpose.msra.mxu0 0.0
    %2188 = vmatprep.subr.mxu0 0.0
    %2189 = vmatpush2.xpose.msra.mxu0 0.0
    %2190 = vmatprep.subr.mxu0 0.0
    %2191 = vmatpush2.xpose.msra.mxu0 0.0
    %2192 = vmatprep.subr.mxu0 0.0
    %2193 = vmatpush2.xpose.msra.mxu0 0.0
    %2194 = vmatprep.subr.mxu0 0.0
    %2195 = vmatpush2.xpose.msra.mxu0 0.0
    %2196 = vmatprep.subr.mxu0 0.0
    %2197 = vmatpush2.xpose.msra.mxu0 0.0
    %2198 = vmatprep.subr.mxu0 0.0
    %2199 = vmatpush2.xpose.msra.mxu0 0.0
    %2200 = vmatprep.subr.mxu0 0.0
    %2201 = vmatpush2.xpose.msra.mxu0 0.0
    %2202 = vmatprep.subr.mxu0 0.0
    %2203 = vmatpush2.xpose.msra.mxu0 0.0
    %2204 = vmatprep.subr.mxu0 0.0
    %2205 = vmatpush2.xpose.msra.mxu0 0.0
    %2206 = vmatprep.subr.mxu0 0.0
    %2207 = vmatpush2.xpose.msra.mxu0 0.0
    %2208 = vmatprep.subr.mxu0 0.0
    %2209 = vmatpush2.xpose.msra.mxu0 0.0
    %2210 = vmatprep.subr.mxu0 0.0
    %2211 = vmatpush2.xpose.msra.mxu0 0.0
    %2212 = vmatprep.subr.mxu0 0.0
    %2213 = vmatpush2.xpose.msra.mxu0 0.0
    %2214 = vmatprep.subr.mxu0 0.0
    %2215 = vmatpush2.xpose.msra.mxu0 0.0
    %2216 = vmatprep.mubr.f32.mxu0 0.0
    %2217 = vmatmul.mubr.f32.gmra.mxu0 %v2148
    %v2218 = vpop.f32.mrf.mxu0
    %v2219 = vadd.f32 %v238, %v2218
    %v2220 = vpop.f32.mrf.mxu0
    %2221 = vdwg.mxu0
    %2222 = vrot.lane.b32.xlu0 %v2059, 96
    %v2223 = vpop.permute.xlu0 %2222
    %v2224 = vsel %vm243, %v2045, 0
    %v2226 = vsel %vm243, %v2223, 0
    %2228 = vmatprep.subr.mxu0 0.0
    %2229 = vmatpush1.xpose.msra.mxu0 0.0
    %2230 = vmatprep.subr.mxu0 0.0
    %2231 = vmatpush1.xpose.msra.mxu0 0.0
    %2232 = vmatprep.subr.mxu0 0.0
    %2233 = vmatpush1.xpose.msra.mxu0 0.0
    %2234 = vmatprep.subr.mxu0 0.0
    %2235 = vmatpush1.xpose.msra.mxu0 0.0
    %2236 = vmatprep.subr.mxu0 0.0
    %2237 = vmatpush1.xpose.msra.mxu0 0.0
    %2238 = vmatprep.subr.mxu0 0.0
    %2239 = vmatpush1.xpose.msra.mxu0 0.0
    %2240 = vmatprep.subr.mxu0 0.0
    %2241 = vmatpush1.xpose.msra.mxu0 0.0
    %2242 = vmatprep.subr.mxu0 0.0
    %2243 = vmatpush1.xpose.msra.mxu0 0.0
    %2244 = vmatprep.subr.mxu0 0.0
    %2245 = vmatpush1.xpose.msra.mxu0 0.0
    %2246 = vmatprep.subr.mxu0 0.0
    %2247 = vmatpush1.xpose.msra.mxu0 0.0
    %2248 = vmatprep.subr.mxu0 0.0
    %2249 = vmatpush1.xpose.msra.mxu0 0.0
    %2250 = vmatprep.subr.mxu0 0.0
    %2251 = vmatpush1.xpose.msra.mxu0 0.0
    %2252 = vmatprep.subr.mxu0 0.0
    %2253 = vmatpush1.xpose.msra.mxu0 0.0
    %2254 = vmatprep.subr.mxu0 0.0
    %2255 = vmatpush1.xpose.msra.mxu0 0.0
    %2256 = vmatprep.subr.mxu0 0.0
    %2257 = vmatpush1.xpose.msra.mxu0 0.0
    %2258 = vmatprep.subr.mxu0 0.0
    %2259 = vmatpush1.xpose.msra.mxu0 %v2226
    %2260 = vmatprep.subr.mxu0 0.0
    %2261 = vmatpush2.xpose.msra.mxu0 0.0
    %2262 = vmatprep.subr.mxu0 0.0
    %2263 = vmatpush2.xpose.msra.mxu0 0.0
    %2264 = vmatprep.subr.mxu0 0.0
    %2265 = vmatpush2.xpose.msra.mxu0 0.0
    %2266 = vmatprep.subr.mxu0 0.0
    %2267 = vmatpush2.xpose.msra.mxu0 0.0
    %2268 = vmatprep.subr.mxu0 0.0
    %2269 = vmatpush2.xpose.msra.mxu0 0.0
    %2270 = vmatprep.subr.mxu0 0.0
    %2271 = vmatpush2.xpose.msra.mxu0 0.0
    %2272 = vmatprep.subr.mxu0 0.0
    %2273 = vmatpush2.xpose.msra.mxu0 0.0
    %2274 = vmatprep.subr.mxu0 0.0
    %2275 = vmatpush2.xpose.msra.mxu0 0.0
    %2276 = vmatprep.subr.mxu0 0.0
    %2277 = vmatpush2.xpose.msra.mxu0 0.0
    %2278 = vmatprep.subr.mxu0 0.0
    %2279 = vmatpush2.xpose.msra.mxu0 0.0
    %2280 = vmatprep.subr.mxu0 0.0
    %2281 = vmatpush2.xpose.msra.mxu0 0.0
    %2282 = vmatprep.subr.mxu0 0.0
    %2283 = vmatpush2.xpose.msra.mxu0 0.0
    %2284 = vmatprep.subr.mxu0 0.0
    %2285 = vmatpush2.xpose.msra.mxu0 0.0
    %2286 = vmatprep.subr.mxu0 0.0
    %2287 = vmatpush2.xpose.msra.mxu0 0.0
    %2288 = vmatprep.subr.mxu0 0.0
    %2289 = vmatpush2.xpose.msra.mxu0 0.0
    %2290 = vmatprep.subr.mxu0 0.0
    %2291 = vmatpush2.xpose.msra.mxu0 0.0
    %2292 = vmatprep.mubr.f32.mxu0 0.0
    %2293 = vmatmul.mubr.f32.gmra.mxu0 %v2224
    %v2294 = vpop.f32.mrf.mxu0
    %v2295 = vadd.f32 %v234, %v2294
    %v2296 = vpop.f32.mrf.mxu0
    %2297 = vdwg.mxu0
    %2298 = vrot.lane.b32.xlu0 %v2061, 96
    %v2299 = vpop.permute.xlu0 %2298
    %v2300 = vsel %vm243, %v2047, 0
    %v2302 = vsel %vm243, %v2299, 0
    %2304 = vmatprep.subr.mxu0 0.0
    %2305 = vmatpush1.xpose.msra.mxu0 0.0
    %2306 = vmatprep.subr.mxu0 0.0
    %2307 = vmatpush1.xpose.msra.mxu0 0.0
    %2308 = vmatprep.subr.mxu0 0.0
    %2309 = vmatpush1.xpose.msra.mxu0 0.0
    %2310 = vmatprep.subr.mxu0 0.0
    %2311 = vmatpush1.xpose.msra.mxu0 0.0
    %2312 = vmatprep.subr.mxu0 0.0
    %2313 = vmatpush1.xpose.msra.mxu0 0.0
    %2314 = vmatprep.subr.mxu0 0.0
    %2315 = vmatpush1.xpose.msra.mxu0 0.0
    %2316 = vmatprep.subr.mxu0 0.0
    %2317 = vmatpush1.xpose.msra.mxu0 0.0
    %2318 = vmatprep.subr.mxu0 0.0
    %2319 = vmatpush1.xpose.msra.mxu0 0.0
    %2320 = vmatprep.subr.mxu0 0.0
    %2321 = vmatpush1.xpose.msra.mxu0 0.0
    %2322 = vmatprep.subr.mxu0 0.0
    %2323 = vmatpush1.xpose.msra.mxu0 0.0
    %2324 = vmatprep.subr.mxu0 0.0
    %2325 = vmatpush1.xpose.msra.mxu0 0.0
    %2326 = vmatprep.subr.mxu0 0.0
    %2327 = vmatpush1.xpose.msra.mxu0 0.0
    %2328 = vmatprep.subr.mxu0 0.0
    %2329 = vmatpush1.xpose.msra.mxu0 0.0
    %2330 = vmatprep.subr.mxu0 0.0
    %2331 = vmatpush1.xpose.msra.mxu0 0.0
    %2332 = vmatprep.subr.mxu0 0.0
    %2333 = vmatpush1.xpose.msra.mxu0 0.0
    %2334 = vmatprep.subr.mxu0 0.0
    %2335 = vmatpush1.xpose.msra.mxu0 %v2302
    %2336 = vmatprep.subr.mxu0 0.0
    %2337 = vmatpush2.xpose.msra.mxu0 0.0
    %2338 = vmatprep.subr.mxu0 0.0
    %2339 = vmatpush2.xpose.msra.mxu0 0.0
    %2340 = vmatprep.subr.mxu0 0.0
    %2341 = vmatpush2.xpose.msra.mxu0 0.0
    %2342 = vmatprep.subr.mxu0 0.0
    %2343 = vmatpush2.xpose.msra.mxu0 0.0
    %2344 = vmatprep.subr.mxu0 0.0
    %2345 = vmatpush2.xpose.msra.mxu0 0.0
    %2346 = vmatprep.subr.mxu0 0.0
    %2347 = vmatpush2.xpose.msra.mxu0 0.0
    %2348 = vmatprep.subr.mxu0 0.0
    %2349 = vmatpush2.xpose.msra.mxu0 0.0
    %2350 = vmatprep.subr.mxu0 0.0
    %2351 = vmatpush2.xpose.msra.mxu0 0.0
    %2352 = vmatprep.subr.mxu0 0.0
    %2353 = vmatpush2.xpose.msra.mxu0 0.0
    %2354 = vmatprep.subr.mxu0 0.0
    %2355 = vmatpush2.xpose.msra.mxu0 0.0
    %2356 = vmatprep.subr.mxu0 0.0
    %2357 = vmatpush2.xpose.msra.mxu0 0.0
    %2358 = vmatprep.subr.mxu0 0.0
    %2359 = vmatpush2.xpose.msra.mxu0 0.0
    %2360 = vmatprep.subr.mxu0 0.0
    %2361 = vmatpush2.xpose.msra.mxu0 0.0
    %2362 = vmatprep.subr.mxu0 0.0
    %2363 = vmatpush2.xpose.msra.mxu0 0.0
    %2364 = vmatprep.subr.mxu0 0.0
    %2365 = vmatpush2.xpose.msra.mxu0 0.0
    %2366 = vmatprep.subr.mxu0 0.0
    %2367 = vmatpush2.xpose.msra.mxu0 0.0
    %2368 = vmatprep.mubr.f32.mxu0 0.0
    %2369 = vmatmul.mubr.f32.gmra.mxu0 %v2300
    %v2370 = vpop.f32.mrf.mxu0
    %v2371 = vadd.f32 %v238, %v2370
    %v2372 = vpop.f32.mrf.mxu0
    %2373 = vdwg.mxu0
    %2374 = vrot.lane.b32.xlu0 %v2063, 96
    %v2375 = vpop.permute.xlu0 %2374
    %v2376 = vsel %vm243, %v2049, 0
    %v2378 = vsel %vm243, %v2375, 0
    %2380 = vmatprep.subr.mxu0 0.0
    %2381 = vmatpush1.xpose.msra.mxu0 0.0
    %2382 = vmatprep.subr.mxu0 0.0
    %2383 = vmatpush1.xpose.msra.mxu0 0.0
    %2384 = vmatprep.subr.mxu0 0.0
    %2385 = vmatpush1.xpose.msra.mxu0 0.0
    %2386 = vmatprep.subr.mxu0 0.0
    %2387 = vmatpush1.xpose.msra.mxu0 0.0
    %2388 = vmatprep.subr.mxu0 0.0
    %2389 = vmatpush1.xpose.msra.mxu0 0.0
    %2390 = vmatprep.subr.mxu0 0.0
    %2391 = vmatpush1.xpose.msra.mxu0 0.0
    %2392 = vmatprep.subr.mxu0 0.0
    %2393 = vmatpush1.xpose.msra.mxu0 0.0
    %2394 = vmatprep.subr.mxu0 0.0
    %2395 = vmatpush1.xpose.msra.mxu0 0.0
    %2396 = vmatprep.subr.mxu0 0.0
    %2397 = vmatpush1.xpose.msra.mxu0 0.0
    %2398 = vmatprep.subr.mxu0 0.0
    %2399 = vmatpush1.xpose.msra.mxu0 0.0
    %2400 = vmatprep.subr.mxu0 0.0
    %2401 = vmatpush1.xpose.msra.mxu0 0.0
    %2402 = vmatprep.subr.mxu0 0.0
    %2403 = vmatpush1.xpose.msra.mxu0 0.0
    %2404 = vmatprep.subr.mxu0 0.0
    %2405 = vmatpush1.xpose.msra.mxu0 0.0
    %2406 = vmatprep.subr.mxu0 0.0
    %2407 = vmatpush1.xpose.msra.mxu0 0.0
    %2408 = vmatprep.subr.mxu0 0.0
    %2409 = vmatpush1.xpose.msra.mxu0 0.0
    %2410 = vmatprep.subr.mxu0 0.0
    %2411 = vmatpush1.xpose.msra.mxu0 %v2378
    %2412 = vmatprep.subr.mxu0 0.0
    %2413 = vmatpush2.xpose.msra.mxu0 0.0
    %2414 = vmatprep.subr.mxu0 0.0
    %2415 = vmatpush2.xpose.msra.mxu0 0.0
    %2416 = vmatprep.subr.mxu0 0.0
    %2417 = vmatpush2.xpose.msra.mxu0 0.0
    %2418 = vmatprep.subr.mxu0 0.0
    %2419 = vmatpush2.xpose.msra.mxu0 0.0
    %2420 = vmatprep.subr.mxu0 0.0
    %2421 = vmatpush2.xpose.msra.mxu0 0.0
    %2422 = vmatprep.subr.mxu0 0.0
    %2423 = vmatpush2.xpose.msra.mxu0 0.0
    %2424 = vmatprep.subr.mxu0 0.0
    %2425 = vmatpush2.xpose.msra.mxu0 0.0
    %2426 = vmatprep.subr.mxu0 0.0
    %2427 = vmatpush2.xpose.msra.mxu0 0.0
    %2428 = vmatprep.subr.mxu0 0.0
    %2429 = vmatpush2.xpose.msra.mxu0 0.0
    %2430 = vmatprep.subr.mxu0 0.0
    %2431 = vmatpush2.xpose.msra.mxu0 0.0
    %2432 = vmatprep.subr.mxu0 0.0
    %2433 = vmatpush2.xpose.msra.mxu0 0.0
    %2434 = vmatprep.subr.mxu0 0.0
    %2435 = vmatpush2.xpose.msra.mxu0 0.0
    %2436 = vmatprep.subr.mxu0 0.0
    %2437 = vmatpush2.xpose.msra.mxu0 0.0
    %2438 = vmatprep.subr.mxu0 0.0
    %2439 = vmatpush2.xpose.msra.mxu0 0.0
    %2440 = vmatprep.subr.mxu0 0.0
    %2441 = vmatpush2.xpose.msra.mxu0 0.0
    %2442 = vmatprep.subr.mxu0 0.0
    %2443 = vmatpush2.xpose.msra.mxu0 0.0
    %2444 = vmatprep.mubr.f32.mxu0 0.0
    %2445 = vmatmul.mubr.f32.gmra.mxu0 %v2376
    %v2446 = vpop.f32.mrf.mxu0
    %v2447 = vadd.f32 %v234, %v2446
    %v2448 = vpop.f32.mrf.mxu0
    %2449 = vdwg.mxu0
    %2450 = vrot.lane.b32.xlu0 %v2065, 96
    %v2451 = vpop.permute.xlu0 %2450
    %v2452 = vsel %vm243, %v2051, 0
    %v2454 = vsel %vm243, %v2451, 0
    %2456 = vmatprep.subr.mxu0 0.0
    %2457 = vmatpush1.xpose.msra.mxu0 0.0
    %2458 = vmatprep.subr.mxu0 0.0
    %2459 = vmatpush1.xpose.msra.mxu0 0.0
    %2460 = vmatprep.subr.mxu0 0.0
    %2461 = vmatpush1.xpose.msra.mxu0 0.0
    %2462 = vmatprep.subr.mxu0 0.0
    %2463 = vmatpush1.xpose.msra.mxu0 0.0
    %2464 = vmatprep.subr.mxu0 0.0
    %2465 = vmatpush1.xpose.msra.mxu0 0.0
    %2466 = vmatprep.subr.mxu0 0.0
    %2467 = vmatpush1.xpose.msra.mxu0 0.0
    %2468 = vmatprep.subr.mxu0 0.0
    %2469 = vmatpush1.xpose.msra.mxu0 0.0
    %2470 = vmatprep.subr.mxu0 0.0
    %2471 = vmatpush1.xpose.msra.mxu0 0.0
    %2472 = vmatprep.subr.mxu0 0.0
    %2473 = vmatpush1.xpose.msra.mxu0 0.0
    %2474 = vmatprep.subr.mxu0 0.0
    %2475 = vmatpush1.xpose.msra.mxu0 0.0
    %2476 = vmatprep.subr.mxu0 0.0
    %2477 = vmatpush1.xpose.msra.mxu0 0.0
    %2478 = vmatprep.subr.mxu0 0.0
    %2479 = vmatpush1.xpose.msra.mxu0 0.0
    %2480 = vmatprep.subr.mxu0 0.0
    %2481 = vmatpush1.xpose.msra.mxu0 0.0
    %2482 = vmatprep.subr.mxu0 0.0
    %2483 = vmatpush1.xpose.msra.mxu0 0.0
    %2484 = vmatprep.subr.mxu0 0.0
    %2485 = vmatpush1.xpose.msra.mxu0 0.0
    %2486 = vmatprep.subr.mxu0 0.0
    %2487 = vmatpush1.xpose.msra.mxu0 %v2454
    %2488 = vmatprep.subr.mxu0 0.0
    %2489 = vmatpush2.xpose.msra.mxu0 0.0
    %2490 = vmatprep.subr.mxu0 0.0
    %2491 = vmatpush2.xpose.msra.mxu0 0.0
    %2492 = vmatprep.subr.mxu0 0.0
    %2493 = vmatpush2.xpose.msra.mxu0 0.0
    %2494 = vmatprep.subr.mxu0 0.0
    %2495 = vmatpush2.xpose.msra.mxu0 0.0
    %2496 = vmatprep.subr.mxu0 0.0
    %2497 = vmatpush2.xpose.msra.mxu0 0.0
    %2498 = vmatprep.subr.mxu0 0.0
    %2499 = vmatpush2.xpose.msra.mxu0 0.0
    %2500 = vmatprep.subr.mxu0 0.0
    %2501 = vmatpush2.xpose.msra.mxu0 0.0
    %2502 = vmatprep.subr.mxu0 0.0
    %2503 = vmatpush2.xpose.msra.mxu0 0.0
    %2504 = vmatprep.subr.mxu0 0.0
    %2505 = vmatpush2.xpose.msra.mxu0 0.0
    %2506 = vmatprep.subr.mxu0 0.0
    %2507 = vmatpush2.xpose.msra.mxu0 0.0
    %2508 = vmatprep.subr.mxu0 0.0
    %2509 = vmatpush2.xpose.msra.mxu0 0.0
    %2510 = vmatprep.subr.mxu0 0.0
    %2511 = vmatpush2.xpose.msra.mxu0 0.0
    %2512 = vmatprep.subr.mxu0 0.0
    %2513 = vmatpush2.xpose.msra.mxu0 0.0
    %2514 = vmatprep.subr.mxu0 0.0
    %2515 = vmatpush2.xpose.msra.mxu0 0.0
    %2516 = vmatprep.subr.mxu0 0.0
    %2517 = vmatpush2.xpose.msra.mxu0 0.0
    %2518 = vmatprep.subr.mxu0 0.0
    %2519 = vmatpush2.xpose.msra.mxu0 0.0
    %2520 = vmatprep.mubr.f32.mxu0 0.0
    %2521 = vmatmul.mubr.f32.gmra.mxu0 %v2452
    %v2522 = vpop.f32.mrf.mxu0
    %v2523 = vadd.f32 %v238, %v2522
    %v2524 = vpop.f32.mrf.mxu0
    %2525 = vdwg.mxu0
    %2526 = vrot.lane.b32.xlu0 %v2067, 96
    %v2527 = vpop.permute.xlu0 %2526
    %v2528 = vsel %vm243, %v2053, 0
    %v2530 = vsel %vm243, %v2527, 0
    %2532 = vmatprep.subr.mxu0 0.0
    %2533 = vmatpush1.xpose.msra.mxu0 0.0
    %2534 = vmatprep.subr.mxu0 0.0
    %2535 = vmatpush1.xpose.msra.mxu0 0.0
    %2536 = vmatprep.subr.mxu0 0.0
    %2537 = vmatpush1.xpose.msra.mxu0 0.0
    %2538 = vmatprep.subr.mxu0 0.0
    %2539 = vmatpush1.xpose.msra.mxu0 0.0
    %2540 = vmatprep.subr.mxu0 0.0
    %2541 = vmatpush1.xpose.msra.mxu0 0.0
    %2542 = vmatprep.subr.mxu0 0.0
    %2543 = vmatpush1.xpose.msra.mxu0 0.0
    %2544 = vmatprep.subr.mxu0 0.0
    %2545 = vmatpush1.xpose.msra.mxu0 0.0
    %2546 = vmatprep.subr.mxu0 0.0
    %2547 = vmatpush1.xpose.msra.mxu0 0.0
    %2548 = vmatprep.subr.mxu0 0.0
    %2549 = vmatpush1.xpose.msra.mxu0 0.0
    %2550 = vmatprep.subr.mxu0 0.0
    %2551 = vmatpush1.xpose.msra.mxu0 0.0
    %2552 = vmatprep.subr.mxu0 0.0
    %2553 = vmatpush1.xpose.msra.mxu0 0.0
    %2554 = vmatprep.subr.mxu0 0.0
    %2555 = vmatpush1.xpose.msra.mxu0 0.0
    %2556 = vmatprep.subr.mxu0 0.0
    %2557 = vmatpush1.xpose.msra.mxu0 0.0
    %2558 = vmatprep.subr.mxu0 0.0
    %2559 = vmatpush1.xpose.msra.mxu0 0.0
    %2560 = vmatprep.subr.mxu0 0.0
    %2561 = vmatpush1.xpose.msra.mxu0 0.0
    %2562 = vmatprep.subr.mxu0 0.0
    %2563 = vmatpush1.xpose.msra.mxu0 %v2530
    %2564 = vmatprep.subr.mxu0 0.0
    %2565 = vmatpush2.xpose.msra.mxu0 0.0
    %2566 = vmatprep.subr.mxu0 0.0
    %2567 = vmatpush2.xpose.msra.mxu0 0.0
    %2568 = vmatprep.subr.mxu0 0.0
    %2569 = vmatpush2.xpose.msra.mxu0 0.0
    %2570 = vmatprep.subr.mxu0 0.0
    %2571 = vmatpush2.xpose.msra.mxu0 0.0
    %2572 = vmatprep.subr.mxu0 0.0
    %2573 = vmatpush2.xpose.msra.mxu0 0.0
    %2574 = vmatprep.subr.mxu0 0.0
    %2575 = vmatpush2.xpose.msra.mxu0 0.0
    %2576 = vmatprep.subr.mxu0 0.0
    %2577 = vmatpush2.xpose.msra.mxu0 0.0
    %2578 = vmatprep.subr.mxu0 0.0
    %2579 = vmatpush2.xpose.msra.mxu0 0.0
    %2580 = vmatprep.subr.mxu0 0.0
    %2581 = vmatpush2.xpose.msra.mxu0 0.0
    %2582 = vmatprep.subr.mxu0 0.0
    %2583 = vmatpush2.xpose.msra.mxu0 0.0
    %2584 = vmatprep.subr.mxu0 0.0
    %2585 = vmatpush2.xpose.msra.mxu0 0.0
    %2586 = vmatprep.subr.mxu0 0.0
    %2587 = vmatpush2.xpose.msra.mxu0 0.0
    %2588 = vmatprep.subr.mxu0 0.0
    %2589 = vmatpush2.xpose.msra.mxu0 0.0
    %2590 = vmatprep.subr.mxu0 0.0
    %2591 = vmatpush2.xpose.msra.mxu0 0.0
    %2592 = vmatprep.subr.mxu0 0.0
    %2593 = vmatpush2.xpose.msra.mxu0 0.0
    %2594 = vmatprep.subr.mxu0 0.0
    %2595 = vmatpush2.xpose.msra.mxu0 0.0
    %2596 = vmatprep.mubr.f32.mxu0 0.0
    %2597 = vmatmul.mubr.f32.gmra.mxu0 %v2528
    %v2598 = vpop.f32.mrf.mxu0
    %v2599 = vadd.f32 %v234, %v2598
    %v2600 = vpop.f32.mrf.mxu0
    %2601 = vdwg.mxu0
    %2602 = vrot.lane.b32.xlu0 %v2069, 96
    %v2603 = vpop.permute.xlu0 %2602
    %v2604 = vsel %vm243, %v2055, 0
    %v2606 = vsel %vm243, %v2603, 0
    %2608 = vmatprep.subr.mxu0 0.0
    %2609 = vmatpush1.xpose.msra.mxu0 0.0
    %2610 = vmatprep.subr.mxu0 0.0
    %2611 = vmatpush1.xpose.msra.mxu0 0.0
    %2612 = vmatprep.subr.mxu0 0.0
    %2613 = vmatpush1.xpose.msra.mxu0 0.0
    %2614 = vmatprep.subr.mxu0 0.0
    %2615 = vmatpush1.xpose.msra.mxu0 0.0
    %2616 = vmatprep.subr.mxu0 0.0
    %2617 = vmatpush1.xpose.msra.mxu0 0.0
    %2618 = vmatprep.subr.mxu0 0.0
    %2619 = vmatpush1.xpose.msra.mxu0 0.0
    %2620 = vmatprep.subr.mxu0 0.0
    %2621 = vmatpush1.xpose.msra.mxu0 0.0
    %2622 = vmatprep.subr.mxu0 0.0
    %2623 = vmatpush1.xpose.msra.mxu0 0.0
    %2624 = vmatprep.subr.mxu0 0.0
    %2625 = vmatpush1.xpose.msra.mxu0 0.0
    %2626 = vmatprep.subr.mxu0 0.0
    %2627 = vmatpush1.xpose.msra.mxu0 0.0
    %2628 = vmatprep.subr.mxu0 0.0
    %2629 = vmatpush1.xpose.msra.mxu0 0.0
    %2630 = vmatprep.subr.mxu0 0.0
    %2631 = vmatpush1.xpose.msra.mxu0 0.0
    %2632 = vmatprep.subr.mxu0 0.0
    %2633 = vmatpush1.xpose.msra.mxu0 0.0
    %2634 = vmatprep.subr.mxu0 0.0
    %2635 = vmatpush1.xpose.msra.mxu0 0.0
    %2636 = vmatprep.subr.mxu0 0.0
    %2637 = vmatpush1.xpose.msra.mxu0 0.0
    %2638 = vmatprep.subr.mxu0 0.0
    %2639 = vmatpush1.xpose.msra.mxu0 %v2606
    %2640 = vmatprep.subr.mxu0 0.0
    %2641 = vmatpush2.xpose.msra.mxu0 0.0
    %2642 = vmatprep.subr.mxu0 0.0
    %2643 = vmatpush2.xpose.msra.mxu0 0.0
    %2644 = vmatprep.subr.mxu0 0.0
    %2645 = vmatpush2.xpose.msra.mxu0 0.0
    %2646 = vmatprep.subr.mxu0 0.0
    %2647 = vmatpush2.xpose.msra.mxu0 0.0
    %2648 = vmatprep.subr.mxu0 0.0
    %2649 = vmatpush2.xpose.msra.mxu0 0.0
    %2650 = vmatprep.subr.mxu0 0.0
    %2651 = vmatpush2.xpose.msra.mxu0 0.0
    %2652 = vmatprep.subr.mxu0 0.0
    %2653 = vmatpush2.xpose.msra.mxu0 0.0
    %2654 = vmatprep.subr.mxu0 0.0
    %2655 = vmatpush2.xpose.msra.mxu0 0.0
    %2656 = vmatprep.subr.mxu0 0.0
    %2657 = vmatpush2.xpose.msra.mxu0 0.0
    %2658 = vmatprep.subr.mxu0 0.0
    %2659 = vmatpush2.xpose.msra.mxu0 0.0
    %2660 = vmatprep.subr.mxu0 0.0
    %2661 = vmatpush2.xpose.msra.mxu0 0.0
    %2662 = vmatprep.subr.mxu0 0.0
    %2663 = vmatpush2.xpose.msra.mxu0 0.0
    %2664 = vmatprep.subr.mxu0 0.0
    %2665 = vmatpush2.xpose.msra.mxu0 0.0
    %2666 = vmatprep.subr.mxu0 0.0
    %2667 = vmatpush2.xpose.msra.mxu0 0.0
    %2668 = vmatprep.subr.mxu0 0.0
    %2669 = vmatpush2.xpose.msra.mxu0 0.0
    %2670 = vmatprep.subr.mxu0 0.0
    %2671 = vmatpush2.xpose.msra.mxu0 0.0
    %2672 = vmatprep.mubr.f32.mxu0 0.0
    %2673 = vmatmul.mubr.f32.gmra.mxu0 %v2604
    %v2674 = vpop.f32.mrf.mxu0
    %v2675 = vadd.f32 %v238, %v2674
    %v2676 = vpop.f32.mrf.mxu0
    %2677 = vdwg.mxu0
    %v2678 = vsel %vm243, %v2143, -inf
    %2679 = vmax.xlane.f32.xlu0 %v2678
    %v2680 = vpop.xlane.xlu0 %2679
    %v2681 = vsel %vm243, %v2219, -inf
    %2682 = vmax.xlane.f32.xlu0 %v2681
    %v2683 = vpop.xlane.xlu0 %2682
    %v2684 = vsel %vm243, %v2295, -inf
    %2685 = vmax.xlane.f32.xlu0 %v2684
    %v2686 = vpop.xlane.xlu0 %2685
    %v2687 = vsel %vm243, %v2371, -inf
    %2688 = vmax.xlane.f32.xlu0 %v2687
    %v2689 = vpop.xlane.xlu0 %2688
    %v2690 = vsel %vm243, %v2447, -inf
    %2691 = vmax.xlane.f32.xlu0 %v2690
    %v2692 = vpop.xlane.xlu0 %2691
    %v2693 = vsel %vm243, %v2523, -inf
    %2694 = vmax.xlane.f32.xlu0 %v2693
    %v2695 = vpop.xlane.xlu0 %2694
    %v2696 = vsel %vm243, %v2599, -inf
    %2697 = vmax.xlane.f32.xlu0 %v2696
    %v2698 = vpop.xlane.xlu0 %2697
    %v2699 = vsel %vm243, %v2675, -inf
    %2700 = vmax.xlane.f32.xlu0 %v2699
    %v2701 = vpop.xlane.xlu0 %2700
    %v2702 = vsub.f32 %v2143, %v2680
    %v2703 = vsub.f32 %v2219, %v2683
    %v2704 = vsub.f32 %v2295, %v2686
    %v2705 = vsub.f32 %v2371, %v2689
    %v2706 = vsub.f32 %v2447, %v2692
    %v2707 = vsub.f32 %v2523, %v2695
    %v2708 = vsub.f32 %v2599, %v2698
    %v2709 = vsub.f32 %v2675, %v2701
    %v2710 = vmul.f32 %v2702, 1.442695
    %v2711 = vpow.pop %v2710
    %v2712 = vmul.f32 %v2703, 1.442695
    %v2713 = vpow.pop %v2712
    %v2714 = vmul.f32 %v2704, 1.442695
    %v2715 = vpow.pop %v2714
    %v2716 = vmul.f32 %v2705, 1.442695
    %v2717 = vpow.pop %v2716
    %v2718 = vmul.f32 %v2706, 1.442695
    %v2719 = vpow.pop %v2718
    %v2720 = vmul.f32 %v2707, 1.442695
    %v2721 = vpow.pop %v2720
    %v2722 = vmul.f32 %v2708, 1.442695
    %v2723 = vpow.pop %v2722
    %v2724 = vmul.f32 %v2709, 1.442695
    %v2725 = vpow.pop %v2724
    %v2726 = vsel %vm243, %v2711, 0.0
    %2727 = vadd.xlane.f32.xlu0 %v2726
    %v2728 = vpop.xlane.xlu0 %2727
    %v2729 = vsel %vm243, %v2713, 0.0
    %2730 = vadd.xlane.f32.xlu0 %v2729
    %v2731 = vpop.xlane.xlu0 %2730
    %v2732 = vsel %vm243, %v2715, 0.0
    %2733 = vadd.xlane.f32.xlu0 %v2732
    %v2734 = vpop.xlane.xlu0 %2733
    %v2735 = vsel %vm243, %v2717, 0.0
    %2736 = vadd.xlane.f32.xlu0 %v2735
    %v2737 = vpop.xlane.xlu0 %2736
    %v2738 = vsel %vm243, %v2719, 0.0
    %2739 = vadd.xlane.f32.xlu0 %v2738
    %v2740 = vpop.xlane.xlu0 %2739
    %v2741 = vsel %vm243, %v2721, 0.0
    %2742 = vadd.xlane.f32.xlu0 %v2741
    %v2743 = vpop.xlane.xlu0 %2742
    %v2744 = vsel %vm243, %v2723, 0.0
    %2745 = vadd.xlane.f32.xlu0 %v2744
    %v2746 = vpop.xlane.xlu0 %2745
    %v2747 = vsel %vm243, %v2725, 0.0
    %2748 = vadd.xlane.f32.xlu0 %v2747
    %v2749 = vpop.xlane.xlu0 %2748
    %v2750 = vrcp.pop %v2728
    %v2751 = vrcp.pop %v2731
    %v2752 = vrcp.pop %v2734
    %v2753 = vrcp.pop %v2737
    %v2754 = vrcp.pop %v2740
    %v2755 = vrcp.pop %v2743
    %v2756 = vrcp.pop %v2746
    %v2757 = vrcp.pop %v2749
    %v2758 = vmul.f32 %v2711, %v2750
    %v2759 = vmul.f32 %v2713, %v2751
    %v2760 = vmul.f32 %v2715, %v2752
    %v2761 = vmul.f32 %v2717, %v2753
    %v2762 = vmul.f32 %v2719, %v2754
    %v2763 = vmul.f32 %v2721, %v2755
    %v2764 = vmul.f32 %v2723, %v2756
    %v2765 = vmul.f32 %v2725, %v2757
    %2766 = vrot.lane.b32.xlu0 %v2032, 64
    %v2767 = vpop.permute.xlu0 %2766
    %v2770 = vsel %vm243, %v2758, 0
    %2772 = vmatprep.subr.mxu0 0.0
    %2773 = vmatpush1.msra.mxu0 0.0
    %2774 = vmatprep.subr.mxu0 0.0
    %2775 = vmatpush1.msra.mxu0 0.0
    %2776 = vmatprep.subr.mxu0 0.0
    %2777 = vmatpush1.msra.mxu0 0.0
    %2778 = vmatprep.subr.mxu0 0.0
    %2779 = vmatpush1.msra.mxu0 0.0
    %2780 = vmatprep.subr.mxu0 0.0
    %2781 = vmatpush1.msra.mxu0 0.0
    %2782 = vmatprep.subr.mxu0 0.0
    %2783 = vmatpush1.msra.mxu0 0.0
    %2784 = vmatprep.subr.mxu0 0.0
    %2785 = vmatpush1.msra.mxu0 0.0
    %2786 = vmatprep.subr.mxu0 0.0
    %2787 = vmatpush1.msra.mxu0 0.0
    %2788 = vmatprep.subr.mxu0 0.0
    %2789 = vmatpush1.msra.mxu0 0.0
    %2790 = vmatprep.subr.mxu0 0.0
    %2791 = vmatpush1.msra.mxu0 0.0
    %2792 = vmatprep.subr.mxu0 0.0
    %2793 = vmatpush1.msra.mxu0 0.0
    %2794 = vmatprep.subr.mxu0 0.0
    %2795 = vmatpush1.msra.mxu0 0.0
    %2796 = vmatprep.subr.mxu0 0.0
    %2797 = vmatpush1.msra.mxu0 0.0
    %2798 = vmatprep.subr.mxu0 0.0
    %2799 = vmatpush1.msra.mxu0 0.0
    %2800 = vmatprep.subr.mxu0 0.0
    %2801 = vmatpush1.msra.mxu0 0.0
    %2802 = vmatprep.subr.mxu0 0.0
    %2803 = vmatpush1.msra.mxu0 %v2767
    %2804 = vmatprep.subr.mxu0 0.0
    %2805 = vmatpush2.msra.mxu0 0.0
    %2806 = vmatprep.subr.mxu0 0.0
    %2807 = vmatpush2.msra.mxu0 0.0
    %2808 = vmatprep.subr.mxu0 0.0
    %2809 = vmatpush2.msra.mxu0 0.0
    %2810 = vmatprep.subr.mxu0 0.0
    %2811 = vmatpush2.msra.mxu0 0.0
    %2812 = vmatprep.subr.mxu0 0.0
    %2813 = vmatpush2.msra.mxu0 0.0
    %2814 = vmatprep.subr.mxu0 0.0
    %2815 = vmatpush2.msra.mxu0 0.0
    %2816 = vmatprep.subr.mxu0 0.0
    %2817 = vmatpush2.msra.mxu0 0.0
    %2818 = vmatprep.subr.mxu0 0.0
    %2819 = vmatpush2.msra.mxu0 0.0
    %2820 = vmatprep.subr.mxu0 0.0
    %2821 = vmatpush2.msra.mxu0 0.0
    %2822 = vmatprep.subr.mxu0 0.0
    %2823 = vmatpush2.msra.mxu0 0.0
    %2824 = vmatprep.subr.mxu0 0.0
    %2825 = vmatpush2.msra.mxu0 0.0
    %2826 = vmatprep.subr.mxu0 0.0
    %2827 = vmatpush2.msra.mxu0 0.0
    %2828 = vmatprep.subr.mxu0 0.0
    %2829 = vmatpush2.msra.mxu0 0.0
    %2830 = vmatprep.subr.mxu0 0.0
    %2831 = vmatpush2.msra.mxu0 0.0
    %2832 = vmatprep.subr.mxu0 0.0
    %2833 = vmatpush2.msra.mxu0 0.0
    %2834 = vmatprep.subr.mxu0 0.0
    %2835 = vmatpush2.msra.mxu0 0.0
    %2836 = vmatprep.mubr.f32.mxu0 0.0
    %2837 = vmatmul.mubr.f32.gmra.mxu0 %v2770
    %v2838 = vpop.f32.mrf.mxu0
    %v2839 = vadd.f32 0.0, %v2838
    %v2840 = vpop.f32.mrf.mxu0
    %2841 = vdwg.mxu0
    %2842 = vrot.lane.b32.xlu0 %v2037, 64
    %v2843 = vpop.permute.xlu0 %2842
    %v2846 = vsel %vm243, %v2759, 0
    %2848 = vmatprep.subr.mxu0 0.0
    %2849 = vmatpush1.msra.mxu0 0.0
    %2850 = vmatprep.subr.mxu0 0.0
    %2851 = vmatpush1.msra.mxu0 0.0
    %2852 = vmatprep.subr.mxu0 0.0
    %2853 = vmatpush1.msra.mxu0 0.0
    %2854 = vmatprep.subr.mxu0 0.0
    %2855 = vmatpush1.msra.mxu0 0.0
    %2856 = vmatprep.subr.mxu0 0.0
    %2857 = vmatpush1.msra.mxu0 0.0
    %2858 = vmatprep.subr.mxu0 0.0
    %2859 = vmatpush1.msra.mxu0 0.0
    %2860 = vmatprep.subr.mxu0 0.0
    %2861 = vmatpush1.msra.mxu0 0.0
    %2862 = vmatprep.subr.mxu0 0.0
    %2863 = vmatpush1.msra.mxu0 0.0
    %2864 = vmatprep.subr.mxu0 0.0
    %2865 = vmatpush1.msra.mxu0 0.0
    %2866 = vmatprep.subr.mxu0 0.0
    %2867 = vmatpush1.msra.mxu0 0.0
    %2868 = vmatprep.subr.mxu0 0.0
    %2869 = vmatpush1.msra.mxu0 0.0
    %2870 = vmatprep.subr.mxu0 0.0
    %2871 = vmatpush1.msra.mxu0 0.0
    %2872 = vmatprep.subr.mxu0 0.0
    %2873 = vmatpush1.msra.mxu0 0.0
    %2874 = vmatprep.subr.mxu0 0.0
    %2875 = vmatpush1.msra.mxu0 0.0
    %2876 = vmatprep.subr.mxu0 0.0
    %2877 = vmatpush1.msra.mxu0 0.0
    %2878 = vmatprep.subr.mxu0 0.0
    %2879 = vmatpush1.msra.mxu0 %v2843
    %2880 = vmatprep.subr.mxu0 0.0
    %2881 = vmatpush2.msra.mxu0 0.0
    %2882 = vmatprep.subr.mxu0 0.0
    %2883 = vmatpush2.msra.mxu0 0.0
    %2884 = vmatprep.subr.mxu0 0.0
    %2885 = vmatpush2.msra.mxu0 0.0
    %2886 = vmatprep.subr.mxu0 0.0
    %2887 = vmatpush2.msra.mxu0 0.0
    %2888 = vmatprep.subr.mxu0 0.0
    %2889 = vmatpush2.msra.mxu0 0.0
    %2890 = vmatprep.subr.mxu0 0.0
    %2891 = vmatpush2.msra.mxu0 0.0
    %2892 = vmatprep.subr.mxu0 0.0
    %2893 = vmatpush2.msra.mxu0 0.0
    %2894 = vmatprep.subr.mxu0 0.0
    %2895 = vmatpush2.msra.mxu0 0.0
    %2896 = vmatprep.subr.mxu0 0.0
    %2897 = vmatpush2.msra.mxu0 0.0
    %2898 = vmatprep.subr.mxu0 0.0
    %2899 = vmatpush2.msra.mxu0 0.0
    %2900 = vmatprep.subr.mxu0 0.0
    %2901 = vmatpush2.msra.mxu0 0.0
    %2902 = vmatprep.subr.mxu0 0.0
    %2903 = vmatpush2.msra.mxu0 0.0
    %2904 = vmatprep.subr.mxu0 0.0
    %2905 = vmatpush2.msra.mxu0 0.0
    %2906 = vmatprep.subr.mxu0 0.0
    %2907 = vmatpush2.msra.mxu0 0.0
    %2908 = vmatprep.subr.mxu0 0.0
    %2909 = vmatpush2.msra.mxu0 0.0
    %2910 = vmatprep.subr.mxu0 0.0
    %2911 = vmatpush2.msra.mxu0 0.0
    %2912 = vmatprep.mubr.f32.mxu0 0.0
    %2913 = vmatmul.mubr.f32.gmra.mxu0 %v2846
    %v2914 = vpop.f32.mrf.mxu0
    %v2915 = vadd.f32 0.0, %v2914
    %v2916 = vpop.f32.mrf.mxu0
    %2917 = vdwg.mxu0
    %2918 = vrot.lane.b32.xlu0 %v2059, 64
    %v2919 = vpop.permute.xlu0 %2918
    %v2922 = vsel %vm243, %v2760, 0
    %2924 = vmatprep.subr.mxu0 0.0
    %2925 = vmatpush1.msra.mxu0 0.0
    %2926 = vmatprep.subr.mxu0 0.0
    %2927 = vmatpush1.msra.mxu0 0.0
    %2928 = vmatprep.subr.mxu0 0.0
    %2929 = vmatpush1.msra.mxu0 0.0
    %2930 = vmatprep.subr.mxu0 0.0
    %2931 = vmatpush1.msra.mxu0 0.0
    %2932 = vmatprep.subr.mxu0 0.0
    %2933 = vmatpush1.msra.mxu0 0.0
    %2934 = vmatprep.subr.mxu0 0.0
    %2935 = vmatpush1.msra.mxu0 0.0
    %2936 = vmatprep.subr.mxu0 0.0
    %2937 = vmatpush1.msra.mxu0 0.0
    %2938 = vmatprep.subr.mxu0 0.0
    %2939 = vmatpush1.msra.mxu0 0.0
    %2940 = vmatprep.subr.mxu0 0.0
    %2941 = vmatpush1.msra.mxu0 0.0
    %2942 = vmatprep.subr.mxu0 0.0
    %2943 = vmatpush1.msra.mxu0 0.0
    %2944 = vmatprep.subr.mxu0 0.0
    %2945 = vmatpush1.msra.mxu0 0.0
    %2946 = vmatprep.subr.mxu0 0.0
    %2947 = vmatpush1.msra.mxu0 0.0
    %2948 = vmatprep.subr.mxu0 0.0
    %2949 = vmatpush1.msra.mxu0 0.0
    %2950 = vmatprep.subr.mxu0 0.0
    %2951 = vmatpush1.msra.mxu0 0.0
    %2952 = vmatprep.subr.mxu0 0.0
    %2953 = vmatpush1.msra.mxu0 0.0
    %2954 = vmatprep.subr.mxu0 0.0
    %2955 = vmatpush1.msra.mxu0 %v2919
    %2956 = vmatprep.subr.mxu0 0.0
    %2957 = vmatpush2.msra.mxu0 0.0
    %2958 = vmatprep.subr.mxu0 0.0
    %2959 = vmatpush2.msra.mxu0 0.0
    %2960 = vmatprep.subr.mxu0 0.0
    %2961 = vmatpush2.msra.mxu0 0.0
    %2962 = vmatprep.subr.mxu0 0.0
    %2963 = vmatpush2.msra.mxu0 0.0
    %2964 = vmatprep.subr.mxu0 0.0
    %2965 = vmatpush2.msra.mxu0 0.0
    %2966 = vmatprep.subr.mxu0 0.0
    %2967 = vmatpush2.msra.mxu0 0.0
    %2968 = vmatprep.subr.mxu0 0.0
    %2969 = vmatpush2.msra.mxu0 0.0
    %2970 = vmatprep.subr.mxu0 0.0
    %2971 = vmatpush2.msra.mxu0 0.0
    %2972 = vmatprep.subr.mxu0 0.0
    %2973 = vmatpush2.msra.mxu0 0.0
    %2974 = vmatprep.subr.mxu0 0.0
    %2975 = vmatpush2.msra.mxu0 0.0
    %2976 = vmatprep.subr.mxu0 0.0
    %2977 = vmatpush2.msra.mxu0 0.0
    %2978 = vmatprep.subr.mxu0 0.0
    %2979 = vmatpush2.msra.mxu0 0.0
    %2980 = vmatprep.subr.mxu0 0.0
    %2981 = vmatpush2.msra.mxu0 0.0
    %2982 = vmatprep.subr.mxu0 0.0
    %2983 = vmatpush2.msra.mxu0 0.0
    %2984 = vmatprep.subr.mxu0 0.0
    %2985 = vmatpush2.msra.mxu0 0.0
    %2986 = vmatprep.subr.mxu0 0.0
    %2987 = vmatpush2.msra.mxu0 0.0
    %2988 = vmatprep.mubr.f32.mxu0 0.0
    %2989 = vmatmul.mubr.f32.gmra.mxu0 %v2922
    %v2990 = vpop.f32.mrf.mxu0
    %v2991 = vadd.f32 0.0, %v2990
    %v2992 = vpop.f32.mrf.mxu0
    %2993 = vdwg.mxu0
    %2994 = vrot.lane.b32.xlu0 %v2061, 64
    %v2995 = vpop.permute.xlu0 %2994
    %v2998 = vsel %vm243, %v2761, 0
    %3000 = vmatprep.subr.mxu0 0.0
    %3001 = vmatpush1.msra.mxu0 0.0
    %3002 = vmatprep.subr.mxu0 0.0
    %3003 = vmatpush1.msra.mxu0 0.0
    %3004 = vmatprep.subr.mxu0 0.0
    %3005 = vmatpush1.msra.mxu0 0.0
    %3006 = vmatprep.subr.mxu0 0.0
    %3007 = vmatpush1.msra.mxu0 0.0
    %3008 = vmatprep.subr.mxu0 0.0
    %3009 = vmatpush1.msra.mxu0 0.0
    %3010 = vmatprep.subr.mxu0 0.0
    %3011 = vmatpush1.msra.mxu0 0.0
    %3012 = vmatprep.subr.mxu0 0.0
    %3013 = vmatpush1.msra.mxu0 0.0
    %3014 = vmatprep.subr.mxu0 0.0
    %3015 = vmatpush1.msra.mxu0 0.0
    %3016 = vmatprep.subr.mxu0 0.0
    %3017 = vmatpush1.msra.mxu0 0.0
    %3018 = vmatprep.subr.mxu0 0.0
    %3019 = vmatpush1.msra.mxu0 0.0
    %3020 = vmatprep.subr.mxu0 0.0
    %3021 = vmatpush1.msra.mxu0 0.0
    %3022 = vmatprep.subr.mxu0 0.0
    %3023 = vmatpush1.msra.mxu0 0.0
    %3024 = vmatprep.subr.mxu0 0.0
    %3025 = vmatpush1.msra.mxu0 0.0
    %3026 = vmatprep.subr.mxu0 0.0
    %3027 = vmatpush1.msra.mxu0 0.0
    %3028 = vmatprep.subr.mxu0 0.0
    %3029 = vmatpush1.msra.mxu0 0.0
    %3030 = vmatprep.subr.mxu0 0.0
    %3031 = vmatpush1.msra.mxu0 %v2995
    %3032 = vmatprep.subr.mxu0 0.0
    %3033 = vmatpush2.msra.mxu0 0.0
    %3034 = vmatprep.subr.mxu0 0.0
    %3035 = vmatpush2.msra.mxu0 0.0
    %3036 = vmatprep.subr.mxu0 0.0
    %3037 = vmatpush2.msra.mxu0 0.0
    %3038 = vmatprep.subr.mxu0 0.0
    %3039 = vmatpush2.msra.mxu0 0.0
    %3040 = vmatprep.subr.mxu0 0.0
    %3041 = vmatpush2.msra.mxu0 0.0
    %3042 = vmatprep.subr.mxu0 0.0
    %3043 = vmatpush2.msra.mxu0 0.0
    %3044 = vmatprep.subr.mxu0 0.0
    %3045 = vmatpush2.msra.mxu0 0.0
    %3046 = vmatprep.subr.mxu0 0.0
    %3047 = vmatpush2.msra.mxu0 0.0
    %3048 = vmatprep.subr.mxu0 0.0
    %3049 = vmatpush2.msra.mxu0 0.0
    %3050 = vmatprep.subr.mxu0 0.0
    %3051 = vmatpush2.msra.mxu0 0.0
    %3052 = vmatprep.subr.mxu0 0.0
    %3053 = vmatpush2.msra.mxu0 0.0
    %3054 = vmatprep.subr.mxu0 0.0
    %3055 = vmatpush2.msra.mxu0 0.0
    %3056 = vmatprep.subr.mxu0 0.0
    %3057 = vmatpush2.msra.mxu0 0.0
    %3058 = vmatprep.subr.mxu0 0.0
    %3059 = vmatpush2.msra.mxu0 0.0
    %3060 = vmatprep.subr.mxu0 0.0
    %3061 = vmatpush2.msra.mxu0 0.0
    %3062 = vmatprep.subr.mxu0 0.0
    %3063 = vmatpush2.msra.mxu0 0.0
    %3064 = vmatprep.mubr.f32.mxu0 0.0
    %3065 = vmatmul.mubr.f32.gmra.mxu0 %v2998
    %v3066 = vpop.f32.mrf.mxu0
    %v3067 = vadd.f32 0.0, %v3066
    %v3068 = vpop.f32.mrf.mxu0
    %3069 = vdwg.mxu0
    %3070 = vrot.lane.b32.xlu0 %v2063, 64
    %v3071 = vpop.permute.xlu0 %3070
    %v3074 = vsel %vm243, %v2762, 0
    %3076 = vmatprep.subr.mxu0 0.0
    %3077 = vmatpush1.msra.mxu0 0.0
    %3078 = vmatprep.subr.mxu0 0.0
    %3079 = vmatpush1.msra.mxu0 0.0
    %3080 = vmatprep.subr.mxu0 0.0
    %3081 = vmatpush1.msra.mxu0 0.0
    %3082 = vmatprep.subr.mxu0 0.0
    %3083 = vmatpush1.msra.mxu0 0.0
    %3084 = vmatprep.subr.mxu0 0.0
    %3085 = vmatpush1.msra.mxu0 0.0
    %3086 = vmatprep.subr.mxu0 0.0
    %3087 = vmatpush1.msra.mxu0 0.0
    %3088 = vmatprep.subr.mxu0 0.0
    %3089 = vmatpush1.msra.mxu0 0.0
    %3090 = vmatprep.subr.mxu0 0.0
    %3091 = vmatpush1.msra.mxu0 0.0
    %3092 = vmatprep.subr.mxu0 0.0
    %3093 = vmatpush1.msra.mxu0 0.0
    %3094 = vmatprep.subr.mxu0 0.0
    %3095 = vmatpush1.msra.mxu0 0.0
    %3096 = vmatprep.subr.mxu0 0.0
    %3097 = vmatpush1.msra.mxu0 0.0
    %3098 = vmatprep.subr.mxu0 0.0
    %3099 = vmatpush1.msra.mxu0 0.0
    %3100 = vmatprep.subr.mxu0 0.0
    %3101 = vmatpush1.msra.mxu0 0.0
    %3102 = vmatprep.subr.mxu0 0.0
    %3103 = vmatpush1.msra.mxu0 0.0
    %3104 = vmatprep.subr.mxu0 0.0
    %3105 = vmatpush1.msra.mxu0 0.0
    %3106 = vmatprep.subr.mxu0 0.0
    %3107 = vmatpush1.msra.mxu0 %v3071
    %3108 = vmatprep.subr.mxu0 0.0
    %3109 = vmatpush2.msra.mxu0 0.0
    %3110 = vmatprep.subr.mxu0 0.0
    %3111 = vmatpush2.msra.mxu0 0.0
    %3112 = vmatprep.subr.mxu0 0.0
    %3113 = vmatpush2.msra.mxu0 0.0
    %3114 = vmatprep.subr.mxu0 0.0
    %3115 = vmatpush2.msra.mxu0 0.0
    %3116 = vmatprep.subr.mxu0 0.0
    %3117 = vmatpush2.msra.mxu0 0.0
    %3118 = vmatprep.subr.mxu0 0.0
    %3119 = vmatpush2.msra.mxu0 0.0
    %3120 = vmatprep.subr.mxu0 0.0
    %3121 = vmatpush2.msra.mxu0 0.0
    %3122 = vmatprep.subr.mxu0 0.0
    %3123 = vmatpush2.msra.mxu0 0.0
    %3124 = vmatprep.subr.mxu0 0.0
    %3125 = vmatpush2.msra.mxu0 0.0
    %3126 = vmatprep.subr.mxu0 0.0
    %3127 = vmatpush2.msra.mxu0 0.0
    %3128 = vmatprep.subr.mxu0 0.0
    %3129 = vmatpush2.msra.mxu0 0.0
    %3130 = vmatprep.subr.mxu0 0.0
    %3131 = vmatpush2.msra.mxu0 0.0
    %3132 = vmatprep.subr.mxu0 0.0
    %3133 = vmatpush2.msra.mxu0 0.0
    %3134 = vmatprep.subr.mxu0 0.0
    %3135 = vmatpush2.msra.mxu0 0.0
    %3136 = vmatprep.subr.mxu0 0.0
    %3137 = vmatpush2.msra.mxu0 0.0
    %3138 = vmatprep.subr.mxu0 0.0
    %3139 = vmatpush2.msra.mxu0 0.0
    %3140 = vmatprep.mubr.f32.mxu0 0.0
    %3141 = vmatmul.mubr.f32.gmra.mxu0 %v3074
    %v3142 = vpop.f32.mrf.mxu0
    %v3143 = vadd.f32 0.0, %v3142
    %v3144 = vpop.f32.mrf.mxu0
    %3145 = vdwg.mxu0
    %3146 = vrot.lane.b32.xlu0 %v2065, 64
    %v3147 = vpop.permute.xlu0 %3146
    %v3150 = vsel %vm243, %v2763, 0
    %3152 = vmatprep.subr.mxu0 0.0
    %3153 = vmatpush1.msra.mxu0 0.0
    %3154 = vmatprep.subr.mxu0 0.0
    %3155 = vmatpush1.msra.mxu0 0.0
    %3156 = vmatprep.subr.mxu0 0.0
    %3157 = vmatpush1.msra.mxu0 0.0
    %3158 = vmatprep.subr.mxu0 0.0
    %3159 = vmatpush1.msra.mxu0 0.0
    %3160 = vmatprep.subr.mxu0 0.0
    %3161 = vmatpush1.msra.mxu0 0.0
    %3162 = vmatprep.subr.mxu0 0.0
    %3163 = vmatpush1.msra.mxu0 0.0
    %3164 = vmatprep.subr.mxu0 0.0
    %3165 = vmatpush1.msra.mxu0 0.0
    %3166 = vmatprep.subr.mxu0 0.0
    %3167 = vmatpush1.msra.mxu0 0.0
    %3168 = vmatprep.subr.mxu0 0.0
    %3169 = vmatpush1.msra.mxu0 0.0
    %3170 = vmatprep.subr.mxu0 0.0
    %3171 = vmatpush1.msra.mxu0 0.0
    %3172 = vmatprep.subr.mxu0 0.0
    %3173 = vmatpush1.msra.mxu0 0.0
    %3174 = vmatprep.subr.mxu0 0.0
    %3175 = vmatpush1.msra.mxu0 0.0
    %3176 = vmatprep.subr.mxu0 0.0
    %3177 = vmatpush1.msra.mxu0 0.0
    %3178 = vmatprep.subr.mxu0 0.0
    %3179 = vmatpush1.msra.mxu0 0.0
    %3180 = vmatprep.subr.mxu0 0.0
    %3181 = vmatpush1.msra.mxu0 0.0
    %3182 = vmatprep.subr.mxu0 0.0
    %3183 = vmatpush1.msra.mxu0 %v3147
    %3184 = vmatprep.subr.mxu0 0.0
    %3185 = vmatpush2.msra.mxu0 0.0
    %3186 = vmatprep.subr.mxu0 0.0
    %3187 = vmatpush2.msra.mxu0 0.0
    %3188 = vmatprep.subr.mxu0 0.0
    %3189 = vmatpush2.msra.mxu0 0.0
    %3190 = vmatprep.subr.mxu0 0.0
    %3191 = vmatpush2.msra.mxu0 0.0
    %3192 = vmatprep.subr.mxu0 0.0
    %3193 = vmatpush2.msra.mxu0 0.0
    %3194 = vmatprep.subr.mxu0 0.0
    %3195 = vmatpush2.msra.mxu0 0.0
    %3196 = vmatprep.subr.mxu0 0.0
    %3197 = vmatpush2.msra.mxu0 0.0
    %3198 = vmatprep.subr.mxu0 0.0
    %3199 = vmatpush2.msra.mxu0 0.0
    %3200 = vmatprep.subr.mxu0 0.0
    %3201 = vmatpush2.msra.mxu0 0.0
    %3202 = vmatprep.subr.mxu0 0.0
    %3203 = vmatpush2.msra.mxu0 0.0
    %3204 = vmatprep.subr.mxu0 0.0
    %3205 = vmatpush2.msra.mxu0 0.0
    %3206 = vmatprep.subr.mxu0 0.0
    %3207 = vmatpush2.msra.mxu0 0.0
    %3208 = vmatprep.subr.mxu0 0.0
    %3209 = vmatpush2.msra.mxu0 0.0
    %3210 = vmatprep.subr.mxu0 0.0
    %3211 = vmatpush2.msra.mxu0 0.0
    %3212 = vmatprep.subr.mxu0 0.0
    %3213 = vmatpush2.msra.mxu0 0.0
    %3214 = vmatprep.subr.mxu0 0.0
    %3215 = vmatpush2.msra.mxu0 0.0
    %3216 = vmatprep.mubr.f32.mxu0 0.0
    %3217 = vmatmul.mubr.f32.gmra.mxu0 %v3150
    %v3218 = vpop.f32.mrf.mxu0
    %v3219 = vadd.f32 0.0, %v3218
    %v3220 = vpop.f32.mrf.mxu0
    %3221 = vdwg.mxu0
    %3222 = vrot.lane.b32.xlu0 %v2067, 64
    %v3223 = vpop.permute.xlu0 %3222
    %v3226 = vsel %vm243, %v2764, 0
    %3228 = vmatprep.subr.mxu0 0.0
    %3229 = vmatpush1.msra.mxu0 0.0
    %3230 = vmatprep.subr.mxu0 0.0
    %3231 = vmatpush1.msra.mxu0 0.0
    %3232 = vmatprep.subr.mxu0 0.0
    %3233 = vmatpush1.msra.mxu0 0.0
    %3234 = vmatprep.subr.mxu0 0.0
    %3235 = vmatpush1.msra.mxu0 0.0
    %3236 = vmatprep.subr.mxu0 0.0
    %3237 = vmatpush1.msra.mxu0 0.0
    %3238 = vmatprep.subr.mxu0 0.0
    %3239 = vmatpush1.msra.mxu0 0.0
    %3240 = vmatprep.subr.mxu0 0.0
    %3241 = vmatpush1.msra.mxu0 0.0
    %3242 = vmatprep.subr.mxu0 0.0
    %3243 = vmatpush1.msra.mxu0 0.0
    %3244 = vmatprep.subr.mxu0 0.0
    %3245 = vmatpush1.msra.mxu0 0.0
    %3246 = vmatprep.subr.mxu0 0.0
    %3247 = vmatpush1.msra.mxu0 0.0
    %3248 = vmatprep.subr.mxu0 0.0
    %3249 = vmatpush1.msra.mxu0 0.0
    %3250 = vmatprep.subr.mxu0 0.0
    %3251 = vmatpush1.msra.mxu0 0.0
    %3252 = vmatprep.subr.mxu0 0.0
    %3253 = vmatpush1.msra.mxu0 0.0
    %3254 = vmatprep.subr.mxu0 0.0
    %3255 = vmatpush1.msra.mxu0 0.0
    %3256 = vmatprep.subr.mxu0 0.0
    %3257 = vmatpush1.msra.mxu0 0.0
    %3258 = vmatprep.subr.mxu0 0.0
    %3259 = vmatpush1.msra.mxu0 %v3223
    %3260 = vmatprep.subr.mxu0 0.0
    %3261 = vmatpush2.msra.mxu0 0.0
    %3262 = vmatprep.subr.mxu0 0.0
    %3263 = vmatpush2.msra.mxu0 0.0
    %3264 = vmatprep.subr.mxu0 0.0
    %3265 = vmatpush2.msra.mxu0 0.0
    %3266 = vmatprep.subr.mxu0 0.0
    %3267 = vmatpush2.msra.mxu0 0.0
    %3268 = vmatprep.subr.mxu0 0.0
    %3269 = vmatpush2.msra.mxu0 0.0
    %3270 = vmatprep.subr.mxu0 0.0
    %3271 = vmatpush2.msra.mxu0 0.0
    %3272 = vmatprep.subr.mxu0 0.0
    %3273 = vmatpush2.msra.mxu0 0.0
    %3274 = vmatprep.subr.mxu0 0.0
    %3275 = vmatpush2.msra.mxu0 0.0
    %3276 = vmatprep.subr.mxu0 0.0
    %3277 = vmatpush2.msra.mxu0 0.0
    %3278 = vmatprep.subr.mxu0 0.0
    %3279 = vmatpush2.msra.mxu0 0.0
    %3280 = vmatprep.subr.mxu0 0.0
    %3281 = vmatpush2.msra.mxu0 0.0
    %3282 = vmatprep.subr.mxu0 0.0
    %3283 = vmatpush2.msra.mxu0 0.0
    %3284 = vmatprep.subr.mxu0 0.0
    %3285 = vmatpush2.msra.mxu0 0.0
    %3286 = vmatprep.subr.mxu0 0.0
    %3287 = vmatpush2.msra.mxu0 0.0
    %3288 = vmatprep.subr.mxu0 0.0
    %3289 = vmatpush2.msra.mxu0 0.0
    %3290 = vmatprep.subr.mxu0 0.0
    %3291 = vmatpush2.msra.mxu0 0.0
    %3292 = vmatprep.mubr.f32.mxu0 0.0
    %3293 = vmatmul.mubr.f32.gmra.mxu0 %v3226
    %v3294 = vpop.f32.mrf.mxu0
    %v3295 = vadd.f32 0.0, %v3294
    %v3296 = vpop.f32.mrf.mxu0
    %3297 = vdwg.mxu0
    %3298 = vrot.lane.b32.xlu0 %v2069, 64
    %v3299 = vpop.permute.xlu0 %3298
    %v3302 = vsel %vm243, %v2765, 0
    %3304 = vmatprep.subr.mxu0 0.0
    %3305 = vmatpush1.msra.mxu0 0.0
    %3306 = vmatprep.subr.mxu0 0.0
    %3307 = vmatpush1.msra.mxu0 0.0
    %3308 = vmatprep.subr.mxu0 0.0
    %3309 = vmatpush1.msra.mxu0 0.0
    %3310 = vmatprep.subr.mxu0 0.0
    %3311 = vmatpush1.msra.mxu0 0.0
    %3312 = vmatprep.subr.mxu0 0.0
    %3313 = vmatpush1.msra.mxu0 0.0
    %3314 = vmatprep.subr.mxu0 0.0
    %3315 = vmatpush1.msra.mxu0 0.0
    %3316 = vmatprep.subr.mxu0 0.0
    %3317 = vmatpush1.msra.mxu0 0.0
    %3318 = vmatprep.subr.mxu0 0.0
    %3319 = vmatpush1.msra.mxu0 0.0
    %3320 = vmatprep.subr.mxu0 0.0
    %3321 = vmatpush1.msra.mxu0 0.0
    %3322 = vmatprep.subr.mxu0 0.0
    %3323 = vmatpush1.msra.mxu0 0.0
    %3324 = vmatprep.subr.mxu0 0.0
    %3325 = vmatpush1.msra.mxu0 0.0
    %3326 = vmatprep.subr.mxu0 0.0
    %3327 = vmatpush1.msra.mxu0 0.0
    %3328 = vmatprep.subr.mxu0 0.0
    %3329 = vmatpush1.msra.mxu0 0.0
    %3330 = vmatprep.subr.mxu0 0.0
    %3331 = vmatpush1.msra.mxu0 0.0
    %3332 = vmatprep.subr.mxu0 0.0
    %3333 = vmatpush1.msra.mxu0 0.0
    %3334 = vmatprep.subr.mxu0 0.0
    %3335 = vmatpush1.msra.mxu0 %v3299
    %3336 = vmatprep.subr.mxu0 0.0
    %3337 = vmatpush2.msra.mxu0 0.0
    %3338 = vmatprep.subr.mxu0 0.0
    %3339 = vmatpush2.msra.mxu0 0.0
    %3340 = vmatprep.subr.mxu0 0.0
    %3341 = vmatpush2.msra.mxu0 0.0
    %3342 = vmatprep.subr.mxu0 0.0
    %3343 = vmatpush2.msra.mxu0 0.0
    %3344 = vmatprep.subr.mxu0 0.0
    %3345 = vmatpush2.msra.mxu0 0.0
    %3346 = vmatprep.subr.mxu0 0.0
    %3347 = vmatpush2.msra.mxu0 0.0
    %3348 = vmatprep.subr.mxu0 0.0
    %3349 = vmatpush2.msra.mxu0 0.0
    %3350 = vmatprep.subr.mxu0 0.0
    %3351 = vmatpush2.msra.mxu0 0.0
    %3352 = vmatprep.subr.mxu0 0.0
    %3353 = vmatpush2.msra.mxu0 0.0
    %3354 = vmatprep.subr.mxu0 0.0
    %3355 = vmatpush2.msra.mxu0 0.0
    %3356 = vmatprep.subr.mxu0 0.0
    %3357 = vmatpush2.msra.mxu0 0.0
    %3358 = vmatprep.subr.mxu0 0.0
    %3359 = vmatpush2.msra.mxu0 0.0
    %3360 = vmatprep.subr.mxu0 0.0
    %3361 = vmatpush2.msra.mxu0 0.0
    %3362 = vmatprep.subr.mxu0 0.0
    %3363 = vmatpush2.msra.mxu0 0.0
    %3364 = vmatprep.subr.mxu0 0.0
    %3365 = vmatpush2.msra.mxu0 0.0
    %3366 = vmatprep.subr.mxu0 0.0
    %3367 = vmatpush2.msra.mxu0 0.0
    %3368 = vmatprep.mubr.f32.mxu0 0.0
    %3369 = vmatmul.mubr.f32.gmra.mxu0 %v3302
    %v3370 = vpop.f32.mrf.mxu0
    %v3371 = vadd.f32 0.0, %v3370
    %v3372 = vpop.f32.mrf.mxu0
    %3373 = vdwg.mxu0
    %3376 = vrot.lane.b32.xlu0 %v2991, 8
    %v3377 = vpop.permute.xlu0 %3376
    %3378 = vrot.lane.b32.xlu0 %v3067, 8
    %v3379 = vpop.permute.xlu0 %3378
    %3384 = vrot.lane.b32.xlu0 %v3143, 16
    %v3385 = vpop.permute.xlu0 %3384
    %3386 = vrot.lane.b32.xlu0 %v3219, 16
    %v3387 = vpop.permute.xlu0 %3386
    %3392 = vrot.lane.b32.xlu0 %v3295, 24
    %v3393 = vpop.permute.xlu0 %3392
    %3394 = vrot.lane.b32.xlu0 %v3371, 24
    %v3395 = vpop.permute.xlu0 %3394
    %v3398 = vsel %vm243, %v2839, %v3377
    %v3399 = vsel %vm243, %v2915, %v3379
    %v3400 = vsel %vm1572, %v3398, %v3385
    %v3401 = vsel %vm1572, %v3399, %v3387
    %v3402 = vsel %vm1575, %v3400, %v3393
    %v3403 = vsel %vm1575, %v3401, %v3395
    %s3404 = scalar_lea.vmem %s4, 32
    %v3405 = vld [vmem:[%s3404] sm:$0xff]
    %v3406 = vld [vmem:[%s3404 + $0x8] sm:$0xff]
    %v3407 = vld [vmem:[%s3404 + $0x10] sm:$0xff]
    %v3408 = vld [vmem:[%s3404 + $0x18] sm:$0xff]
    %v3409 = vlaneseq
    %v3410 = vshrl.u32 %v3409, 7
    %v3411 = vsub.s32 2, %v3410
    %v3412 = vrot.slane %v1949, %v3411
    %v3414 = vsel %vm40, %v3402, 0
    %v3417 = vsel %vm40, %v3403, 0
    %3419 = vmatprep.subr.mxu0 0.0
    %3420 = vmatpush1.msra.mxu0 0.0
    %3421 = vmatprep.subr.mxu0 0.0
    %3422 = vmatpush1.msra.mxu0 0.0
    %3423 = vmatprep.subr.mxu0 0.0
    %3424 = vmatpush1.msra.mxu0 0.0
    %3425 = vmatprep.subr.mxu0 0.0
    %3426 = vmatpush1.msra.mxu0 0.0
    %3427 = vmatprep.subr.mxu0 0.0
    %3428 = vmatpush1.msra.mxu0 0.0
    %3429 = vmatprep.subr.mxu0 0.0
    %3430 = vmatpush1.msra.mxu0 0.0
    %3431 = vmatprep.subr.mxu0 0.0
    %3432 = vmatpush1.msra.mxu0 0.0
    %3433 = vmatprep.subr.mxu0 0.0
    %3434 = vmatpush1.msra.mxu0 0.0
    %3435 = vmatprep.subr.mxu0 0.0
    %3436 = vmatpush1.msra.mxu0 0.0
    %3437 = vmatprep.subr.mxu0 0.0
    %3438 = vmatpush1.msra.mxu0 0.0
    %3439 = vmatprep.subr.mxu0 0.0
    %3440 = vmatpush1.msra.mxu0 0.0
    %3441 = vmatprep.subr.mxu0 0.0
    %3442 = vmatpush1.msra.mxu0 0.0
    %3443 = vmatprep.subr.mxu0 0.0
    %3444 = vmatpush1.msra.mxu0 %v3408
    %3445 = vmatprep.subr.mxu0 0.0
    %3446 = vmatpush1.msra.mxu0 %v3407
    %3447 = vmatprep.subr.mxu0 0.0
    %3448 = vmatpush1.msra.mxu0 %v3406
    %3449 = vmatprep.subr.mxu0 0.0
    %3450 = vmatpush1.msra.mxu0 %v3405
    %3451 = vmatprep.subr.mxu0 0.0
    %3452 = vmatpush2.msra.mxu0 0.0
    %3453 = vmatprep.subr.mxu0 0.0
    %3454 = vmatpush2.msra.mxu0 0.0
    %3455 = vmatprep.subr.mxu0 0.0
    %3456 = vmatpush2.msra.mxu0 0.0
    %3457 = vmatprep.subr.mxu0 0.0
    %3458 = vmatpush2.msra.mxu0 0.0
    %3459 = vmatprep.subr.mxu0 0.0
    %3460 = vmatpush2.msra.mxu0 0.0
    %3461 = vmatprep.subr.mxu0 0.0
    %3462 = vmatpush2.msra.mxu0 0.0
    %3463 = vmatprep.subr.mxu0 0.0
    %3464 = vmatpush2.msra.mxu0 0.0
    %3465 = vmatprep.subr.mxu0 0.0
    %3466 = vmatpush2.msra.mxu0 0.0
    %3467 = vmatprep.subr.mxu0 0.0
    %3468 = vmatpush2.msra.mxu0 0.0
    %3469 = vmatprep.subr.mxu0 0.0
    %3470 = vmatpush2.msra.mxu0 0.0
    %3471 = vmatprep.subr.mxu0 0.0
    %3472 = vmatpush2.msra.mxu0 0.0
    %3473 = vmatprep.subr.mxu0 0.0
    %3474 = vmatpush2.msra.mxu0 0.0
    %3475 = vmatprep.subr.mxu0 0.0
    %3476 = vmatpush2.msra.mxu0 0.0
    %3477 = vmatprep.subr.mxu0 0.0
    %3478 = vmatpush2.msra.mxu0 0.0
    %3479 = vmatprep.subr.mxu0 0.0
    %3480 = vmatpush2.msra.mxu0 0.0
    %3481 = vmatprep.subr.mxu0 0.0
    %3482 = vmatpush2.msra.mxu0 0.0
    %3483 = vmatprep.mubr.f32.mxu0 0.0
    %3484 = vmatmul.mubr.f32.gmra.mxu0 %v3414
    %v3485 = vpop.f32.mrf.mxu0
    %v3486 = vadd.f32 %v3412, %v3485
    %v3487 = vpop.f32.mrf.mxu0
    %3488 = vmatprep.mubr.f32.mxu0 0.0
    %3489 = vmatmul.mubr.f32.gmra.mxu0 %v3417
    %v3490 = vpop.f32.mrf.mxu0
    %v3491 = vadd.f32 %v3412, %v3490
    %v3492 = vpop.f32.mrf.mxu0
    %3493 = vdwg.mxu0
    %v3494 = vadd.f32 %v1946, %v3486
    %v3495 = vadd.f32 %v1947, %v3491
    %v3496 = vsel %vm40, %v3494, 0.0
    %3497 = vadd.xlane.f32.xlu0 %v3496
    %v3498 = vpop.xlane.xlu0 %3497
    %v3499 = vsel %vm40, %v3495, 0.0
    %3500 = vadd.xlane.f32.xlu0 %v3499
    %v3501 = vpop.xlane.xlu0 %3500
    %v3502 = vmul.f32 %v3498, %v47
    %v3503 = vmul.f32 %v3501, %v47
    %v3504 = vsub.f32 %v3494, %v3502
    %v3505 = vsub.f32 %v3495, %v3503
    %v3506 = vmul.f32 %v3504, %v3504
    %v3507 = vmul.f32 %v3505, %v3505
    %v3508 = vsel %vm40, %v3506, 0.0
    %3509 = vadd.xlane.f32.xlu0 %v3508
    %v3510 = vpop.xlane.xlu0 %3509
    %v3511 = vsel %vm40, %v3507, 0.0
    %3512 = vadd.xlane.f32.xlu0 %v3511
    %v3513 = vpop.xlane.xlu0 %3512
    %v3514 = vmul.f32 %v3510, %v47
    %v3515 = vmul.f32 %v3513, %v47
    %v3516 = vadd.f32 %v3514, 1e-12
    %v3517 = vadd.f32 %v3515, 1e-12
    %v3518 = vrsqrt.pop %v3516
    %v3519 = vrsqrt.pop %v3517
    %v3520 = vmul.f32 %v3504, %v3518
    %v3521 = vmul.f32 %v3505, %v3519
    %v3522 = vlaneseq
    %v3523 = vshrl.u32 %v3522, 7
    %v3524 = vsub.s32 3, %v3523
    %v3525 = vrot.slane %v1949, %v3524
    %v3526 = vmul.f32 %v3520, %v3525
    %v3527 = vmul.f32 %v3521, %v3525
    %v3528 = vlaneseq
    %v3529 = vshrl.u32 %v3528, 7
    %v3530 = vsub.s32 4, %v3529
    %v3531 = vrot.slane %v1949, %v3530
    %v3532 = vadd.f32 %v3526, %v3531
    %v3533 = vadd.f32 %v3527, %v3531
    %s3534 = scalar_lea.vmem %s5, 32
    %v3535 = vld [vmem:[%s3534] sm:$0xff]
    %v3536 = vld [vmem:[%s3534 + $0x8] sm:$0xff]
    %v3537 = vld [vmem:[%s3534 + $0x10] sm:$0xff]
    %v3538 = vld [vmem:[%s3534 + $0x18] sm:$0xff]
    %v3539 = vlaneseq
    %v3540 = vshrl.u32 %v3539, 7
    %v3541 = vsub.s32 1, %v3540
    %v3542 = vrot.slane %v1949, %v3541
    %v3544 = vsel %vm40, %v3532, 0
    %v3547 = vsel %vm40, %v3533, 0
    %3549 = vmatprep.subr.mxu0 0.0
    %3550 = vmatpush1.msra.mxu0 0.0
    %3551 = vmatprep.subr.mxu0 0.0
    %3552 = vmatpush1.msra.mxu0 0.0
    %3553 = vmatprep.subr.mxu0 0.0
    %3554 = vmatpush1.msra.mxu0 0.0
    %3555 = vmatprep.subr.mxu0 0.0
    %3556 = vmatpush1.msra.mxu0 0.0
    %3557 = vmatprep.subr.mxu0 0.0
    %3558 = vmatpush1.msra.mxu0 0.0
    %3559 = vmatprep.subr.mxu0 0.0
    %3560 = vmatpush1.msra.mxu0 0.0
    %3561 = vmatprep.subr.mxu0 0.0
    %3562 = vmatpush1.msra.mxu0 0.0
    %3563 = vmatprep.subr.mxu0 0.0
    %3564 = vmatpush1.msra.mxu0 0.0
    %3565 = vmatprep.subr.mxu0 0.0
    %3566 = vmatpush1.msra.mxu0 0.0
    %3567 = vmatprep.subr.mxu0 0.0
    %3568 = vmatpush1.msra.mxu0 0.0
    %3569 = vmatprep.subr.mxu0 0.0
    %3570 = vmatpush1.msra.mxu0 0.0
    %3571 = vmatprep.subr.mxu0 0.0
    %3572 = vmatpush1.msra.mxu0 0.0
    %3573 = vmatprep.subr.mxu0 0.0
    %3574 = vmatpush1.msra.mxu0 %v3538
    %3575 = vmatprep.subr.mxu0 0.0
    %3576 = vmatpush1.msra.mxu0 %v3537
    %3577 = vmatprep.subr.mxu0 0.0
    %3578 = vmatpush1.msra.mxu0 %v3536
    %3579 = vmatprep.subr.mxu0 0.0
    %3580 = vmatpush1.msra.mxu0 %v3535
    %3581 = vmatprep.subr.mxu0 0.0
    %3582 = vmatpush2.msra.mxu0 0.0
    %3583 = vmatprep.subr.mxu0 0.0
    %3584 = vmatpush2.msra.mxu0 0.0
    %3585 = vmatprep.subr.mxu0 0.0
    %3586 = vmatpush2.msra.mxu0 0.0
    %3587 = vmatprep.subr.mxu0 0.0
    %3588 = vmatpush2.msra.mxu0 0.0
    %3589 = vmatprep.subr.mxu0 0.0
    %3590 = vmatpush2.msra.mxu0 0.0
    %3591 = vmatprep.subr.mxu0 0.0
    %3592 = vmatpush2.msra.mxu0 0.0
    %3593 = vmatprep.subr.mxu0 0.0
    %3594 = vmatpush2.msra.mxu0 0.0
    %3595 = vmatprep.subr.mxu0 0.0
    %3596 = vmatpush2.msra.mxu0 0.0
    %3597 = vmatprep.subr.mxu0 0.0
    %3598 = vmatpush2.msra.mxu0 0.0
    %3599 = vmatprep.subr.mxu0 0.0
    %3600 = vmatpush2.msra.mxu0 0.0
    %3601 = vmatprep.subr.mxu0 0.0
    %3602 = vmatpush2.msra.mxu0 0.0
    %3603 = vmatprep.subr.mxu0 0.0
    %3604 = vmatpush2.msra.mxu0 0.0
    %3605 = vmatprep.subr.mxu0 0.0
    %3606 = vmatpush2.msra.mxu0 0.0
    %3607 = vmatprep.subr.mxu0 0.0
    %3608 = vmatpush2.msra.mxu0 0.0
    %3609 = vmatprep.subr.mxu0 0.0
    %3610 = vmatpush2.msra.mxu0 0.0
    %3611 = vmatprep.subr.mxu0 0.0
    %3612 = vmatpush2.msra.mxu0 0.0
    %3613 = vmatprep.mubr.f32.mxu0 0.0
    %3614 = vmatmul.mubr.f32.gmra.mxu0 %v3544
    %v3615 = vpop.f32.mrf.mxu0
    %v3616 = vadd.f32 %v3542, %v3615
    %v3617 = vpop.f32.mrf.mxu0
    %3618 = vmatprep.mubr.f32.mxu0 0.0
    %3619 = vmatmul.mubr.f32.gmra.mxu0 %v3547
    %v3620 = vpop.f32.mrf.mxu0
    %v3621 = vadd.f32 %v3542, %v3620
    %v3622 = vpop.f32.mrf.mxu0
    %3623 = vdwg.mxu0
    %v3624 = vmul.f32 %v3616, 0.5
    %v3625 = vmul.f32 %v3621, 0.5
    %v3626 = vmul.f32 %v3616, 0.044715
    %v3627 = vmul.f32 %v3621, 0.044715
    %v3628 = vmul.f32 %v3626, %v3616
    %v3629 = vmul.f32 %v3627, %v3621
    %v3630 = vmul.f32 %v3628, %v3616
    %v3631 = vmul.f32 %v3629, %v3621
    %v3632 = vadd.f32 %v3616, %v3630
    %v3633 = vadd.f32 %v3621, %v3631
    %v3634 = vmul.f32 %v3632, 0.7978846
    %v3635 = vmul.f32 %v3633, 0.7978846
    %v3636 = vtanh.pop %v3634
    %v3637 = vtanh.pop %v3635
    %v3638 = vadd.f32 %v3636, 1.0
    %v3639 = vadd.f32 %v3637, 1.0
    %v3640 = vmul.f32 %v3624, %v3638
    %v3641 = vmul.f32 %v3625, %v3639
    %s3642 = scalar_lea.vmem %s6, 64
    %v3643 = vld [vmem:[%s3642] sm:$0xff]
    %v3644 = vld [vmem:[%s3642 + $0x8] sm:$0xff]
    %v3645 = vld [vmem:[%s3642 + $0x10] sm:$0xff]
    %v3646 = vld [vmem:[%s3642 + $0x18] sm:$0xff]
    %v3647 = vld [vmem:[%s3642 + $0x20] sm:$0xff]
    %v3648 = vld [vmem:[%s3642 + $0x28] sm:$0xff]
    %v3649 = vld [vmem:[%s3642 + $0x30] sm:$0xff]
    %v3650 = vld [vmem:[%s3642 + $0x38] sm:$0xff]
    %v3651 = vlaneseq
    %v3652 = vshrl.u32 %v3651, 7
    %v3653 = vsub.s32 5, %v3652
    %v3654 = vrot.slane %v1949, %v3653
    %v3656 = vsel %vm1826, %v3640, 0
    %v3659 = vsel %vm1826, %v3641, 0
    %3661 = vmatprep.subr.mxu0 0.0
    %3662 = vmatpush1.msra.mxu0 0.0
    %3663 = vmatprep.subr.mxu0 0.0
    %3664 = vmatpush1.msra.mxu0 0.0
    %3665 = vmatprep.subr.mxu0 0.0
    %3666 = vmatpush1.msra.mxu0 0.0
    %3667 = vmatprep.subr.mxu0 0.0
    %3668 = vmatpush1.msra.mxu0 0.0
    %3669 = vmatprep.subr.mxu0 0.0
    %3670 = vmatpush1.msra.mxu0 0.0
    %3671 = vmatprep.subr.mxu0 0.0
    %3672 = vmatpush1.msra.mxu0 0.0
    %3673 = vmatprep.subr.mxu0 0.0
    %3674 = vmatpush1.msra.mxu0 0.0
    %3675 = vmatprep.subr.mxu0 0.0
    %3676 = vmatpush1.msra.mxu0 0.0
    %3677 = vmatprep.subr.mxu0 0.0
    %3678 = vmatpush1.msra.mxu0 %v3650
    %3679 = vmatprep.subr.mxu0 0.0
    %3680 = vmatpush1.msra.mxu0 %v3649
    %3681 = vmatprep.subr.mxu0 0.0
    %3682 = vmatpush1.msra.mxu0 %v3648
    %3683 = vmatprep.subr.mxu0 0.0
    %3684 = vmatpush1.msra.mxu0 %v3647
    %3685 = vmatprep.subr.mxu0 0.0
    %3686 = vmatpush1.msra.mxu0 %v3646
    %3687 = vmatprep.subr.mxu0 0.0
    %3688 = vmatpush1.msra.mxu0 %v3645
    %3689 = vmatprep.subr.mxu0 0.0
    %3690 = vmatpush1.msra.mxu0 %v3644
    %3691 = vmatprep.subr.mxu0 0.0
    %3692 = vmatpush1.msra.mxu0 %v3643
    %3693 = vmatprep.subr.mxu0 0.0
    %3694 = vmatpush2.msra.mxu0 0.0
    %3695 = vmatprep.subr.mxu0 0.0
    %3696 = vmatpush2.msra.mxu0 0.0
    %3697 = vmatprep.subr.mxu0 0.0
    %3698 = vmatpush2.msra.mxu0 0.0
    %3699 = vmatprep.subr.mxu0 0.0
    %3700 = vmatpush2.msra.mxu0 0.0
    %3701 = vmatprep.subr.mxu0 0.0
    %3702 = vmatpush2.msra.mxu0 0.0
    %3703 = vmatprep.subr.mxu0 0.0
    %3704 = vmatpush2.msra.mxu0 0.0
    %3705 = vmatprep.subr.mxu0 0.0
    %3706 = vmatpush2.msra.mxu0 0.0
    %3707 = vmatprep.subr.mxu0 0.0
    %3708 = vmatpush2.msra.mxu0 0.0
    %3709 = vmatprep.subr.mxu0 0.0
    %3710 = vmatpush2.msra.mxu0 0.0
    %3711 = vmatprep.subr.mxu0 0.0
    %3712 = vmatpush2.msra.mxu0 0.0
    %3713 = vmatprep.subr.mxu0 0.0
    %3714 = vmatpush2.msra.mxu0 0.0
    %3715 = vmatprep.subr.mxu0 0.0
    %3716 = vmatpush2.msra.mxu0 0.0
    %3717 = vmatprep.subr.mxu0 0.0
    %3718 = vmatpush2.msra.mxu0 0.0
    %3719 = vmatprep.subr.mxu0 0.0
    %3720 = vmatpush2.msra.mxu0 0.0
    %3721 = vmatprep.subr.mxu0 0.0
    %3722 = vmatpush2.msra.mxu0 0.0
    %3723 = vmatprep.subr.mxu0 0.0
    %3724 = vmatpush2.msra.mxu0 0.0
    %3725 = vmatprep.mubr.f32.mxu0 0.0
    %3726 = vmatmul.mubr.f32.gmra.mxu0 %v3656
    %v3727 = vpop.f32.mrf.mxu0
    %v3728 = vadd.f32 %v3654, %v3727
    %v3729 = vpop.f32.mrf.mxu0
    %3730 = vmatprep.mubr.f32.mxu0 0.0
    %3731 = vmatmul.mubr.f32.gmra.mxu0 %v3659
    %v3732 = vpop.f32.mrf.mxu0
    %v3733 = vadd.f32 %v3654, %v3732
    %v3734 = vpop.f32.mrf.mxu0
    %3735 = vdwg.mxu0
    %v3736 = vadd.f32 %v3532, %v3728
    %v3737 = vadd.f32 %v3533, %v3733
    %v3738 = vsel %vm40, %v3736, 0.0
    %3739 = vadd.xlane.f32.xlu0 %v3738
    %v3740 = vpop.xlane.xlu0 %3739
    %v3741 = vsel %vm40, %v3737, 0.0
    %3742 = vadd.xlane.f32.xlu0 %v3741
    %v3743 = vpop.xlane.xlu0 %3742
    %v3744 = vmul.f32 %v3740, %v47
    %v3745 = vmul.f32 %v3743, %v47
    %v3746 = vsub.f32 %v3736, %v3744
    %v3747 = vsub.f32 %v3737, %v3745
    %v3748 = vmul.f32 %v3746, %v3746
    %v3749 = vmul.f32 %v3747, %v3747
    %v3750 = vsel %vm40, %v3748, 0.0
    %3751 = vadd.xlane.f32.xlu0 %v3750
    %v3752 = vpop.xlane.xlu0 %3751
    %v3753 = vsel %vm40, %v3749, 0.0
    %3754 = vadd.xlane.f32.xlu0 %v3753
    %v3755 = vpop.xlane.xlu0 %3754
    %v3756 = vmul.f32 %v3752, %v47
    %v3757 = vmul.f32 %v3755, %v47
    %v3758 = vadd.f32 %v3756, 1e-12
    %v3759 = vadd.f32 %v3757, 1e-12
    %v3760 = vrsqrt.pop %v3758
    %v3761 = vrsqrt.pop %v3759
    %v3762 = vmul.f32 %v3746, %v3760
    %v3763 = vmul.f32 %v3747, %v3761
    %v3764 = vlaneseq
    %v3765 = vshrl.u32 %v3764, 7
    %v3766 = vsub.s32 6, %v3765
    %v3767 = vrot.slane %v1949, %v3766
    %v3768 = vmul.f32 %v3762, %v3767
    %v3769 = vmul.f32 %v3763, %v3767
    %v3770 = vlaneseq
    %v3771 = vshrl.u32 %v3770, 7
    %v3772 = vsub.s32 7, %v3771
    %v3773 = vrot.slane %v1949, %v3772
    %v3774 = vadd.f32 %v3768, %v3773
    %v3775 = vadd.f32 %v3769, %v3773
    %v3777 = vrot.slane %v3775, 7
    %vm3779 = vcmask 1040384
    %v3780 = vsel %vm3779, %v3774, %v3777
    %v3781 = vld [vmem:[%s8] sm:$0xff]
    %v3782 = vld [vmem:[%s8 + $0x8] sm:$0xff]
    %v3783 = vld [vmem:[%s8 + $0x10] sm:$0xff]
    %v3784 = vld [vmem:[%s8 + $0x18] sm:$0xff]
    %v3785 = vld [vmem:[%s9] sm:$0x1]
    %v3787 = vlaneseq
    %v3788 = vshrl.u32 %v3787, 7
    %v3789 = vsub.s32 0, %v3788
    %v3790 = vrot.slane %v3785, %v3789
    %v3793 = vsel %vm40, %v3780, 0
    %3795 = vmatprep.subr.mxu0 0.0
    %3796 = vmatpush1.msra.mxu0 0.0
    %3797 = vmatprep.subr.mxu0 0.0
    %3798 = vmatpush1.msra.mxu0 0.0
    %3799 = vmatprep.subr.mxu0 0.0
    %3800 = vmatpush1.msra.mxu0 0.0
    %3801 = vmatprep.subr.mxu0 0.0
    %3802 = vmatpush1.msra.mxu0 0.0
    %3803 = vmatprep.subr.mxu0 0.0
    %3804 = vmatpush1.msra.mxu0 0.0
    %3805 = vmatprep.subr.mxu0 0.0
    %3806 = vmatpush1.msra.mxu0 0.0
    %3807 = vmatprep.subr.mxu0 0.0
    %3808 = vmatpush1.msra.mxu0 0.0
    %3809 = vmatprep.subr.mxu0 0.0
    %3810 = vmatpush1.msra.mxu0 0.0
    %3811 = vmatprep.subr.mxu0 0.0
    %3812 = vmatpush1.msra.mxu0 0.0
    %3813 = vmatprep.subr.mxu0 0.0
    %3814 = vmatpush1.msra.mxu0 0.0
    %3815 = vmatprep.subr.mxu0 0.0
    %3816 = vmatpush1.msra.mxu0 0.0
    %3817 = vmatprep.subr.mxu0 0.0
    %3818 = vmatpush1.msra.mxu0 0.0
    %3819 = vmatprep.subr.mxu0 0.0
    %3820 = vmatpush1.msra.mxu0 %v3784
    %3821 = vmatprep.subr.mxu0 0.0
    %3822 = vmatpush1.msra.mxu0 %v3783
    %3823 = vmatprep.subr.mxu0 0.0
    %3824 = vmatpush1.msra.mxu0 %v3782
    %3825 = vmatprep.subr.mxu0 0.0
    %3826 = vmatpush1.msra.mxu0 %v3781
    %3827 = vmatprep.subr.mxu0 0.0
    %3828 = vmatpush2.msra.mxu0 0.0
    %3829 = vmatprep.subr.mxu0 0.0
    %3830 = vmatpush2.msra.mxu0 0.0
    %3831 = vmatprep.subr.mxu0 0.0
    %3832 = vmatpush2.msra.mxu0 0.0
    %3833 = vmatprep.subr.mxu0 0.0
    %3834 = vmatpush2.msra.mxu0 0.0
    %3835 = vmatprep.subr.mxu0 0.0
    %3836 = vmatpush2.msra.mxu0 0.0
    %3837 = vmatprep.subr.mxu0 0.0
    %3838 = vmatpush2.msra.mxu0 0.0
    %3839 = vmatprep.subr.mxu0 0.0
    %3840 = vmatpush2.msra.mxu0 0.0
    %3841 = vmatprep.subr.mxu0 0.0
    %3842 = vmatpush2.msra.mxu0 0.0
    %3843 = vmatprep.subr.mxu0 0.0
    %3844 = vmatpush2.msra.mxu0 0.0
    %3845 = vmatprep.subr.mxu0 0.0
    %3846 = vmatpush2.msra.mxu0 0.0
    %3847 = vmatprep.subr.mxu0 0.0
    %3848 = vmatpush2.msra.mxu0 0.0
    %3849 = vmatprep.subr.mxu0 0.0
    %3850 = vmatpush2.msra.mxu0 0.0
    %3851 = vmatprep.subr.mxu0 0.0
    %3852 = vmatpush2.msra.mxu0 0.0
    %3853 = vmatprep.subr.mxu0 0.0
    %3854 = vmatpush2.msra.mxu0 0.0
    %3855 = vmatprep.subr.mxu0 0.0
    %3856 = vmatpush2.msra.mxu0 0.0
    %3857 = vmatprep.subr.mxu0 0.0
    %3858 = vmatpush2.msra.mxu0 0.0
    %3859 = vmatprep.mubr.f32.mxu0 0.0
    %3860 = vmatmul.mubr.f32.gmra.mxu0 %v3793
    %v3861 = vpop.f32.mrf.mxu0
    %v3862 = vadd.f32 %v3790, %v3861
    %v3863 = vpop.f32.mrf.mxu0
    %3864 = vdwg.mxu0
    %v3865 = vtanh.pop %v3862
    %vm3866 = vcmask 254976
    %3867 = vst.msk [vmem:[#allocation2] sm:$0x3] %vm3866, %v3865
    // Predicated region
    $region42: #{movie_bert_forward.1} parent=1 // pred_check
      _
    $region43: #{movie_bert_forward.1} parent=1 // pred_check_branch
      %3869 = sbr.rel (0) target = $region45
    $region44: #{movie_bert_forward.1} parent=1 // pred_region
      %s3871 = ssub.s32 32, 32
      %3872 = vsyncadd [#allocation3], %s3871
      %s3874 = sshll.u32 [#allocation2], 4
      %s3875 = int_to_ptr.vmem [resolvable:$true] %s3874
      %3877 = dma.vmem_to_hbm [thread:$0]  %s3875, 32, %s10, [#allocation3]
    $region45: #{movie_bert_forward.1} parent=1 // pred_fallthru
      _
    // Predicated region
    $region46: #{movie_bert_forward.1} parent=1 // pred_check
      _
    $region47: #{movie_bert_forward.1} parent=1 // pred_check_branch
      %3879 = sbr.rel (0) target = $region49
    $region48: #{movie_bert_forward.1} parent=1 // pred_region
      %3880 = dma.done [#allocation3], 32
    $region49: #{movie_bert_forward.1} parent=1 // pred_fallthru
      _
    %3881 = vsyncpa [#allocation3], 1

</llo_original>
